<compile_context>
chip_gen: v7x
topology: tpu7x:2x2x1
jax: 0.10.0
libtpu: 0.0.40
codegen_flags: <defaults>
</compile_context>

<pallas_src>
import jax
import jax.numpy as jnp
from jax.experimental import pallas as pl
from jax.experimental.pallas import tpu as pltpu


# ----------------------------- Pallas kernels ------------------------------

def _conv_block_kernel(p_ref, w1_ref, b1_ref, w2_ref, b2_ref, o_ref):
    # p_ref : (1, 576, 81) bf16   rows = (pool_di, pool_dj, 12x12 pooled pixel)
    #                             cols = (conv2 tap dd=di*3+dj, conv1 tap e=ei*3+ej)
    # w1_ref: (81, 288)  bf16     block-diagonal conv1 weight (one copy per conv2 tap)
    # b1_ref: (1, 288)   f32      conv1 bias tiled over the 9 taps
    # w2_ref: (288, 64)  bf16     conv2 weight, rows ordered (tap, channel)
    # b2_ref: (1, 64)    f32
    # o_ref : (1, 72, 128) bf16   row i = [pooled pixel i | pooled pixel i+72]
    h = jnp.dot(p_ref[0], w1_ref[...], preferred_element_type=jnp.float32)
    h = jnp.maximum(h + b1_ref[...], 0.0).astype(jnp.bfloat16)        # conv1 + ReLU
    z = jnp.dot(h, w2_ref[...], preferred_element_type=jnp.float32)   # conv2 (576, 64)
    # 2x2 max-pool: the four 144-row groups are the four pool offsets.
    # max-pool(relu(x + b)) == relu(max-pool(x) + b)  (shared bias, monotone ReLU)
    zm = jnp.maximum(jnp.maximum(z[0:144], z[144:288]),
                     jnp.maximum(z[288:432], z[432:576]))
    y = jnp.maximum(zm + b2_ref[...], 0.0)                            # bias + ReLU
    # Pack two pooled pixels per 128-lane row -> one unmasked lane-dense store.
    o_ref[0] = jnp.concatenate([y[0:72], y[72:144]], axis=-1).astype(o_ref.dtype)


def conv_block(P, w1, b1, w2, b2):
    """Fused conv1+ReLU+conv2+ReLU+2x2 max-pool.  P:(B,576,81) -> (B,72,128)."""
    B, M, K1 = P.shape
    N1 = w1.shape[1]            # 288
    N2 = w2.shape[1]            # 64
    return pl.pallas_call(
        _conv_block_kernel,
        out_shape=jax.ShapeDtypeStruct((B, 72, 2 * N2), jnp.bfloat16),
        grid=(B,),
        in_specs=[
            pl.BlockSpec((1, M, K1), lambda b_: (b_, 0, 0)),
            pl.BlockSpec((K1, N1), lambda b_: (0, 0)),   # weights resident
            pl.BlockSpec((1, N1), lambda b_: (0, 0)),
            pl.BlockSpec((288, N2), lambda b_: (0, 0)),
            pl.BlockSpec((1, N2), lambda b_: (0, 0)),
        ],
        out_specs=pl.BlockSpec((1, 72, 2 * N2), lambda b_: (b_, 0, 0)),
        compiler_params=pltpu.CompilerParams(dimension_semantics=("parallel",)),
    )(P, w1, b1, w2, b2)


def _fc_head_kernel(x_ref, w1_ref, b1_ref, w2_ref, b2_ref,
                    act_ref, out_ref, acc_ref):
    k = pl.program_id(0)

    @pl.when(k == 0)
    def _():
        acc_ref[...] = jnp.zeros_like(acc_ref)

    acc_ref[...] += jnp.dot(x_ref[...], w1_ref[...],
                            preferred_element_type=jnp.float32)

    @pl.when(k == pl.num_programs(0) - 1)
    def _():
        act = jnp.maximum(acc_ref[...] + b1_ref[...], 0.0)            # fc1 + ReLU
        act_ref[...] = act.astype(act_ref.dtype)
        logits = jnp.dot(act, w2_ref[...],
                         preferred_element_type=jnp.float32) + b2_ref[...]
        m = jnp.max(logits, axis=-1, keepdims=True)
        s = logits - m
        lse = jnp.log(jnp.sum(jnp.exp(s), axis=-1, keepdims=True))
        out_ref[...] = (s - lse).astype(out_ref.dtype)                # log_softmax


def fc_head(x, w1, b1, w2, b2, *, tk=4608):
    """Fused fc1+ReLU -> act and fc2+log_softmax -> out.  K contraction tiled
    (nk=2 keeps the next weight-tile DMA overlapped with the current matmul)."""
    B, K = x.shape
    N1 = w1.shape[1]
    N2 = w2.shape[1]
    assert K % tk == 0
    nk = K // tk
    act, out = pl.pallas_call(
        _fc_head_kernel,
        out_shape=(jax.ShapeDtypeStruct((B, N1), jnp.float32),
                   jax.ShapeDtypeStruct((B, N2), jnp.float32)),
        grid=(nk,),
        in_specs=[
            pl.BlockSpec((B, tk), lambda k: (0, k)),
            pl.BlockSpec((tk, N1), lambda k: (k, 0)),
            pl.BlockSpec((1, N1), lambda k: (0, 0)),
            pl.BlockSpec((N1, N2), lambda k: (0, 0)),
            pl.BlockSpec((1, N2), lambda k: (0, 0)),
        ],
        out_specs=(pl.BlockSpec((B, N1), lambda k: (0, 0)),
                   pl.BlockSpec((B, N2), lambda k: (0, 0))),
        scratch_shapes=[pltpu.VMEM((B, N1), jnp.float32)],
        compiler_params=pltpu.CompilerParams(dimension_semantics=("arbitrary",)),
    )(x, w1, b1, w2, b2)
    return act, out


# ------------------------------- JAX glue ----------------------------------

def build_patches(x_img):
    """x_img:(B,28,28) -> (B,576,81) 'double im2col' feeding the fused conv kernel.
    Rows ordered (pool_di, pool_dj, pooled-pixel hp*12+wp); columns ordered
    (conv2 tap dd=di*3+dj, conv1 tap e=ei*3+ej)."""
    B = x_img.shape[0]
    cols = []
    for di in range(3):
        for dj in range(3):
            for ei in range(3):
                for ej in range(3):
                    cols.append(x_img[:, di + ei:di + ei + 24, dj + ej:dj + ej + 24])
    P = jnp.stack(cols, axis=-1)                       # (B, 24, 24, 81)
    P = P.reshape(B, 12, 2, 12, 2, 81)
    P = jnp.transpose(P, (0, 2, 4, 1, 3, 5))           # (B, pdi, pdj, hp, wp, 81)
    return P.reshape(B, 576, 81)


def init_params(key):
    """Deterministic init mimicking PyTorch's default uniform(-1/sqrt(fan_in), +)."""
    def uni(k, shape, fan_in):
        bound = 1.0 / jnp.sqrt(float(fan_in))
        return jax.random.uniform(k, shape, jnp.float32, -bound, bound)

    ks = jax.random.split(key, 8)
    return {
        "conv1_w": uni(ks[0], (32, 1, 3, 3), 1 * 3 * 3),
        "conv1_b": uni(ks[1], (32,), 1 * 3 * 3),
        "conv2_w": uni(ks[2], (64, 32, 3, 3), 32 * 3 * 3),
        "conv2_b": uni(ks[3], (64,), 32 * 3 * 3),
        "fc1_w": uni(ks[4], (128, 9216), 9216),
        "fc1_b": uni(ks[5], (128,), 9216),
        "fc2_w": uni(ks[6], (10, 128), 128),
        "fc2_b": uni(ks[7], (10,), 128),
    }


def prepare_params(params):
    """One-time (outside jit) layout/dtype prep for the kernels."""
    f32, bf16 = jnp.float32, jnp.bfloat16
    # conv1: (32,1,3,3) -> (9,32), then block-diagonal (81,288): one copy per
    # conv2 tap, so conv1 for all 9 taps is a single MXU dot in the fused kernel.
    w1 = params["conv1_w"].reshape(32, 9).T                           # (9, 32)
    w1_big = jnp.kron(jnp.eye(9, dtype=f32), w1).astype(bf16)         # (81, 288)
    b1 = jnp.tile(params["conv1_b"], 9).reshape(1, 288).astype(f32)   # tiled per tap
    # conv2: (64,32,3,3) -> (288,64) with rows ordered (tap dd, channel c).
    w2 = jnp.transpose(params["conv2_w"], (2, 3, 1, 0)).reshape(288, 64).astype(bf16)
    b2 = params["conv2_b"].reshape(1, 64).astype(f32)
    # fc1: permute rows into the kernel's (pixel-pair, channel) flatten order:
    # feats[i*128 + c]      = pooled pixel i      channel c   (c <  64)
    # feats[i*128 + 64 + c] = pooled pixel i+72   channel c
    wf1 = params["fc1_w"].reshape(128, 64, 12, 12)                    # (out, c, h, w)
    wf1 = jnp.transpose(wf1, (2, 3, 1, 0)).reshape(144, 64, 128)      # (pixel, c, out)
    wf1 = jnp.concatenate([wf1[:72], wf1[72:]], axis=1)               # (72, 128, 128)
    wf1 = wf1.reshape(9216, 128).astype(bf16)
    bf1 = params["fc1_b"].reshape(1, 128).astype(f32)
    wf2 = params["fc2_w"].T.astype(f32)                               # (128, 10)
    bf2 = params["fc2_b"].reshape(1, 10).astype(f32)
    return {"conv1_w": w1_big, "conv1_b": b1, "conv2_w": w2, "conv2_b": b2,
            "fc1_w": wf1, "fc1_b": bf1, "fc2_w": wf2, "fc2_b": bf2}


def net_forward(x_nchw, prep):
    """Replicates Net.forward (inference). Returns (log_probs, fc1_act)."""
    B = x_nchw.shape[0]
    x = x_nchw[:, 0].astype(jnp.bfloat16)                             # (B, 28, 28)

    # conv1 + ReLU + conv2 + ReLU + 2x2 max-pool, fused in one Pallas kernel.
    P = build_patches(x)                                              # (B, 576, 81)
    y3 = conv_block(P, prep["conv1_w"], prep["conv1_b"],
                    prep["conv2_w"], prep["conv2_b"])                 # (B, 72, 128)

    # dropout1 / dropout2: identity at inference.
    feats = y3.reshape(B, 72 * 128)                                   # (B, 9216)
    act, out = fc_head(feats, prep["fc1_w"], prep["fc1_b"],
                       prep["fc2_w"], prep["fc2_b"])                  # (B,128), (B,10)
    return out, act


def reference_forward(x_nchw, params):
    """Pure-JAX f32 reference of Net.forward (inference)."""
    x = x_nchw.astype(jnp.float32)
    dn = ("NCHW", "OIHW", "NCHW")
    y = jax.lax.conv_general_dilated(x, params["conv1_w"], (1, 1), "VALID",
                                     dimension_numbers=dn)
    y = jax.nn.relu(y + params["conv1_b"][None, :, None, None])
    y = jax.lax.conv_general_dilated(y, params["conv2_w"], (1, 1), "VALID",
                                     dimension_numbers=dn)
    y = jax.nn.relu(y + params["conv2_b"][None, :, None, None])
    y = jax.lax.reduce_window(y, -jnp.inf, jax.lax.max,
                              (1, 1, 2, 2), (1, 1, 2, 2), "VALID")
    y = y.reshape(y.shape[0], -1)
    act = jax.nn.relu(y @ params["fc1_w"].T + params["fc1_b"])
    out = jax.nn.log_softmax(act @ params["fc2_w"].T + params["fc2_b"], axis=-1)
    return out, act


if __name__ == "__main__":
    key = jax.random.PRNGKey(0)
    k_in, k_par = jax.random.split(key)
    # fc1 = Linear(9216, 128) implies 28x28 single-channel input.
    x = jax.random.normal(k_in, (2, 1, 28, 28), dtype=jnp.float32)
    params = init_params(k_par)
    prep = prepare_params(params)

    out, act = jax.jit(net_forward)(x, prep)
    out = jax.block_until_ready(out)
    act = jax.block_until_ready(act)

    assert out.shape == (2, 10) and act.shape == (2, 128)
    # log_softmax rows must (approximately) sum to 1 in prob space.
    assert bool(jnp.all(jnp.abs(jnp.sum(jnp.exp(out), axis=1) - 1.0) < 1e-4))

    # Numerical check against the pure-JAX f32 reference (bf16-tolerant).
    ref_out, ref_act = jax.jit(reference_forward)(x, params)
    assert bool(jnp.max(jnp.abs(out - ref_out)) < 5e-2)
    assert bool(jnp.max(jnp.abs(act - ref_act)) < 5e-2)
    print("KERNEL_OK")
</pallas_src>

<mosaic_0001>
module attributes {stable_mosaic.version = 11 : i64} {
  func.func @_conv_block_kernel(%arg0: i32, %arg1: memref<1x576x81xbf16, #tpu.memory_space<vmem>>, %arg2: memref<81x288xbf16, #tpu.memory_space<vmem>>, %arg3: memref<1x288xf32, #tpu.memory_space<vmem>>, %arg4: memref<288x64xbf16, #tpu.memory_space<vmem>>, %arg5: memref<1x64xf32, #tpu.memory_space<vmem>>, %arg6: memref<1x72x128xbf16, #tpu.memory_space<vmem>>) attributes {dimension_semantics = [#tpu.dimension_semantics<parallel>], iteration_bounds = array<i64: 2>, scalar_prefetch = 0 : i64, scratch_operands = 0 : i64, tpu.core_type = #tpu.core_type<tc>, window_params = [{transform_indices = @transform_0, window_bounds = array<i64: 1, 576, 81>}, {pipeline_mode = #tpu.pipeline_mode<synchronous>, transform_indices = @transform_1, window_bounds = array<i64: 81, 288>}, {pipeline_mode = #tpu.pipeline_mode<synchronous>, transform_indices = @transform_2, window_bounds = array<i64: 1, 288>}, {pipeline_mode = #tpu.pipeline_mode<synchronous>, transform_indices = @transform_3, window_bounds = array<i64: 288, 64>}, {pipeline_mode = #tpu.pipeline_mode<synchronous>, transform_indices = @transform_4, window_bounds = array<i64: 1, 64>}, {transform_indices = @transform_5, window_bounds = array<i64: 1, 72, 128>}]} {
    %c0 = arith.constant 0 : index
    %c0_0 = arith.constant 0 : index
    %c0_1 = arith.constant 0 : index
    %0 = vector.load %arg1[%c0, %c0_0, %c0_1] : memref<1x576x81xbf16, #tpu.memory_space<vmem>>, vector<1x576x81xbf16>
    %1 = vector.shape_cast %0 : vector<1x576x81xbf16> to vector<576x81xbf16>
    %c0_2 = arith.constant 0 : index
    %c0_3 = arith.constant 0 : index
    %2 = vector.load %arg2[%c0_2, %c0_3] : memref<81x288xbf16, #tpu.memory_space<vmem>>, vector<81x288xbf16>
    %cst = arith.constant dense<0.000000e+00> : vector<576x288xf32>
    %3 = tpu.matmul %1, %2, %cst {dimension_numbers = #tpu.dot_dimension_numbers<[1], [0], [0], [1], [0, 0, 1, 1], [], []>} : vector<576x81xbf16>, vector<81x288xbf16>, vector<576x288xf32> -> vector<576x288xf32>
    %c0_4 = arith.constant 0 : index
    %c0_5 = arith.constant 0 : index
    %4 = vector.load %arg3[%c0_4, %c0_5] : memref<1x288xf32, #tpu.memory_space<vmem>>, vector<1x288xf32>
    %5 = vector.broadcast %4 : vector<1x288xf32> to vector<576x288xf32>
    %6 = arith.addf %3, %5 : vector<576x288xf32>
    %cst_6 = arith.constant 0.000000e+00 : f32
    %7 = vector.broadcast %cst_6 : f32 to vector<576x288xf32>
    %8 = arith.maximumf %6, %7 : vector<576x288xf32>
    %9 = arith.truncf %8 : vector<576x288xf32> to vector<576x288xbf16>
    %c0_7 = arith.constant 0 : index
    %c0_8 = arith.constant 0 : index
    %10 = vector.load %arg4[%c0_7, %c0_8] : memref<288x64xbf16, #tpu.memory_space<vmem>>, vector<288x64xbf16>
    %cst_9 = arith.constant dense<0.000000e+00> : vector<576x64xf32>
    %11 = tpu.matmul %9, %10, %cst_9 {dimension_numbers = #tpu.dot_dimension_numbers<[1], [0], [0], [1], [0, 0, 1, 1], [], []>} : vector<576x288xbf16>, vector<288x64xbf16>, vector<576x64xf32> -> vector<576x64xf32>
    %12 = vector.extract_strided_slice %11 {offsets = [0, 0], sizes = [144, 64], strides = [1, 1]} : vector<576x64xf32> to vector<144x64xf32>
    %13 = vector.extract_strided_slice %11 {offsets = [144, 0], sizes = [144, 64], strides = [1, 1]} : vector<576x64xf32> to vector<144x64xf32>
    %14 = arith.maximumf %12, %13 : vector<144x64xf32>
    %15 = vector.extract_strided_slice %11 {offsets = [288, 0], sizes = [144, 64], strides = [1, 1]} : vector<576x64xf32> to vector<144x64xf32>
    %16 = vector.extract_strided_slice %11 {offsets = [432, 0], sizes = [144, 64], strides = [1, 1]} : vector<576x64xf32> to vector<144x64xf32>
    %17 = arith.maximumf %15, %16 : vector<144x64xf32>
    %18 = arith.maximumf %14, %17 : vector<144x64xf32>
    %c0_10 = arith.constant 0 : index
    %c0_11 = arith.constant 0 : index
    %19 = vector.load %arg5[%c0_10, %c0_11] : memref<1x64xf32, #tpu.memory_space<vmem>>, vector<1x64xf32>
    %20 = vector.broadcast %19 : vector<1x64xf32> to vector<144x64xf32>
    %21 = arith.addf %18, %20 : vector<144x64xf32>
    %cst_12 = arith.constant 0.000000e+00 : f32
    %22 = vector.broadcast %cst_12 : f32 to vector<144x64xf32>
    %23 = arith.maximumf %21, %22 : vector<144x64xf32>
    %24 = vector.extract_strided_slice %23 {offsets = [0, 0], sizes = [72, 64], strides = [1, 1]} : vector<144x64xf32> to vector<72x64xf32>
    %25 = vector.extract_strided_slice %23 {offsets = [72, 0], sizes = [72, 64], strides = [1, 1]} : vector<144x64xf32> to vector<72x64xf32>
    %26 = tpu.concatenate %24, %25 in 1 : vector<72x64xf32>, vector<72x64xf32> -> vector<72x128xf32>
    %27 = arith.truncf %26 : vector<72x128xf32> to vector<72x128xbf16>
    %c0_13 = arith.constant 0 : index
    %c0_14 = arith.constant 0 : index
    %c0_15 = arith.constant 0 : index
    %28 = vector.load %arg6[%c0_13, %c0_14, %c0_15] : memref<1x72x128xbf16, #tpu.memory_space<vmem>>, vector<1x72x128xbf16>
    %29 = vector.shape_cast %28 : vector<1x72x128xbf16> to vector<72x128xbf16>
    %30 = vector.shape_cast %27 : vector<72x128xbf16> to vector<1x72x128xbf16>
    tpu.vector_store %arg6[%c0_13, %c0_14, %c0_15], %30 {strides = array<i32>} : memref<1x72x128xbf16, #tpu.memory_space<vmem>>, vector<1x72x128xbf16>,
    return
  }
  func.func @transform_0(%arg0: i32) -> (i32, i32, i32) {
    %c0_i32 = arith.constant 0 : i32
    %c0_i32_0 = arith.constant 0 : i32
    %c0_i32_1 = arith.constant 0 : i32
    return %arg0, %c0_i32, %c0_i32_0 : i32, i32, i32
  }
  func.func @transform_1(%arg0: i32) -> (i32, i32) {
    %c0_i32 = arith.constant 0 : i32
    %c0_i32_0 = arith.constant 0 : i32
    %c0_i32_1 = arith.constant 0 : i32
    return %c0_i32, %c0_i32_0 : i32, i32
  }
  func.func @transform_2(%arg0: i32) -> (i32, i32) {
    %c0_i32 = arith.constant 0 : i32
    %c0_i32_0 = arith.constant 0 : i32
    %c0_i32_1 = arith.constant 0 : i32
    return %c0_i32, %c0_i32_0 : i32, i32
  }
  func.func @transform_3(%arg0: i32) -> (i32, i32) {
    %c0_i32 = arith.constant 0 : i32
    %c0_i32_0 = arith.constant 0 : i32
    %c0_i32_1 = arith.constant 0 : i32
    return %c0_i32, %c0_i32_0 : i32, i32
  }
  func.func @transform_4(%arg0: i32) -> (i32, i32) {
    %c0_i32 = arith.constant 0 : i32
    %c0_i32_0 = arith.constant 0 : i32
    %c0_i32_1 = arith.constant 0 : i32
    return %c0_i32, %c0_i32_0 : i32, i32
  }
  func.func @transform_5(%arg0: i32) -> (i32, i32, i32) {
    %c0_i32 = arith.constant 0 : i32
    %c0_i32_0 = arith.constant 0 : i32
    %c0_i32_1 = arith.constant 0 : i32
    return %arg0, %c0_i32, %c0_i32_0 : i32, i32, i32
  }
}

module attributes {stable_mosaic.version = 11 : i64} {
  func.func @_fc_head_kernel(%arg0: i32, %arg1: memref<2x4608xbf16, #tpu.memory_space<vmem>>, %arg2: memref<4608x128xbf16, #tpu.memory_space<vmem>>, %arg3: memref<1x128xf32, #tpu.memory_space<vmem>>, %arg4: memref<128x10xf32, #tpu.memory_space<vmem>>, %arg5: memref<1x10xf32, #tpu.memory_space<vmem>>, %arg6: memref<2x128xf32, #tpu.memory_space<vmem>>, %arg7: memref<2x10xf32, #tpu.memory_space<vmem>>, %arg8: memref<2x128xf32, #tpu.memory_space<vmem>>) attributes {dimension_semantics = [#tpu.dimension_semantics<arbitrary>], iteration_bounds = array<i64: 2>, scalar_prefetch = 0 : i64, scratch_operands = 1 : i64, tpu.core_type = #tpu.core_type<tc>, window_params = [{transform_indices = @transform_0, window_bounds = array<i64: 2, 4608>}, {transform_indices = @transform_1, window_bounds = array<i64: 4608, 128>}, {pipeline_mode = #tpu.pipeline_mode<synchronous>, transform_indices = @transform_2, window_bounds = array<i64: 1, 128>}, {pipeline_mode = #tpu.pipeline_mode<synchronous>, transform_indices = @transform_3, window_bounds = array<i64: 128, 10>}, {pipeline_mode = #tpu.pipeline_mode<synchronous>, transform_indices = @transform_4, window_bounds = array<i64: 1, 10>}, {pipeline_mode = #tpu.pipeline_mode<synchronous>, transform_indices = @transform_5, window_bounds = array<i64: 2, 128>}, {pipeline_mode = #tpu.pipeline_mode<synchronous>, transform_indices = @transform_6, window_bounds = array<i64: 2, 10>}]} {
    %c0_i32 = arith.constant 0 : i32
    %0 = arith.cmpi eq, %arg0, %c0_i32 : i32
    %1 = arith.extui %0 : i1 to i32
    %c0_i32_0 = arith.constant 0 : i32
    %2 = arith.cmpi ne, %1, %c0_i32_0 : i32
    scf.if %2 {
      %cst_9 = arith.constant 0.000000e+00 : f32
      %12 = vector.broadcast %cst_9 : f32 to vector<2x128xf32>
      %c0_10 = arith.constant 0 : index
      %c0_11 = arith.constant 0 : index
      %13 = vector.load %arg8[%c0_10, %c0_11] : memref<2x128xf32, #tpu.memory_space<vmem>>, vector<2x128xf32>
      tpu.vector_store %arg8[%c0_10, %c0_11], %12 {strides = array<i32>} : memref<2x128xf32, #tpu.memory_space<vmem>>, vector<2x128xf32>,
    } else {
    }
    %c0 = arith.constant 0 : index
    %c0_1 = arith.constant 0 : index
    %3 = vector.load %arg8[%c0, %c0_1] : memref<2x128xf32, #tpu.memory_space<vmem>>, vector<2x128xf32>
    %c0_2 = arith.constant 0 : index
    %c0_3 = arith.constant 0 : index
    %4 = vector.load %arg1[%c0_2, %c0_3] : memref<2x4608xbf16, #tpu.memory_space<vmem>>, vector<2x4608xbf16>
    %c0_4 = arith.constant 0 : index
    %c0_5 = arith.constant 0 : index
    %5 = vector.load %arg2[%c0_4, %c0_5] : memref<4608x128xbf16, #tpu.memory_space<vmem>>, vector<4608x128xbf16>
    %cst = arith.constant dense<0.000000e+00> : vector<2x128xf32>
    %6 = tpu.matmul %4, %5, %cst {dimension_numbers = #tpu.dot_dimension_numbers<[1], [0], [0], [1], [0, 0, 1, 1], [], []>} : vector<2x4608xbf16>, vector<4608x128xbf16>, vector<2x128xf32> -> vector<2x128xf32>
    %7 = arith.addf %3, %6 : vector<2x128xf32>
    %c0_6 = arith.constant 0 : index
    %c0_7 = arith.constant 0 : index
    %8 = vector.load %arg8[%c0_6, %c0_7] : memref<2x128xf32, #tpu.memory_space<vmem>>, vector<2x128xf32>
    tpu.vector_store %arg8[%c0_6, %c0_7], %7 {strides = array<i32>} : memref<2x128xf32, #tpu.memory_space<vmem>>, vector<2x128xf32>,
    %c1_i32 = arith.constant 1 : i32
    %9 = arith.cmpi eq, %arg0, %c1_i32 : i32
    %10 = arith.extui %9 : i1 to i32
    %c0_i32_8 = arith.constant 0 : i32
    %11 = arith.cmpi ne, %10, %c0_i32_8 : i32
    scf.if %11 {
      %c0_9 = arith.constant 0 : index
      %c0_10 = arith.constant 0 : index
      %12 = vector.load %arg8[%c0_9, %c0_10] : memref<2x128xf32, #tpu.memory_space<vmem>>, vector<2x128xf32>
      %c0_11 = arith.constant 0 : index
      %c0_12 = arith.constant 0 : index
      %13 = vector.load %arg3[%c0_11, %c0_12] : memref<1x128xf32, #tpu.memory_space<vmem>>, vector<1x128xf32>
      %14 = vector.broadcast %13 : vector<1x128xf32> to vector<2x128xf32>
      %15 = arith.addf %12, %14 : vector<2x128xf32>
      %cst_13 = arith.constant 0.000000e+00 : f32
      %16 = vector.broadcast %cst_13 : f32 to vector<2x128xf32>
      %17 = arith.maximumf %15, %16 : vector<2x128xf32>
      %c0_14 = arith.constant 0 : index
      %c0_15 = arith.constant 0 : index
      %18 = vector.load %arg6[%c0_14, %c0_15] : memref<2x128xf32, #tpu.memory_space<vmem>>, vector<2x128xf32>
      tpu.vector_store %arg6[%c0_14, %c0_15], %17 {strides = array<i32>} : memref<2x128xf32, #tpu.memory_space<vmem>>, vector<2x128xf32>,
      %c0_16 = arith.constant 0 : index
      %c0_17 = arith.constant 0 : index
      %19 = vector.load %arg4[%c0_16, %c0_17] : memref<128x10xf32, #tpu.memory_space<vmem>>, vector<128x10xf32>
      %cst_18 = arith.constant dense<0.000000e+00> : vector<2x10xf32>
      %20 = tpu.matmul %17, %19, %cst_18 {dimension_numbers = #tpu.dot_dimension_numbers<[1], [0], [0], [1], [0, 0, 1, 1], [], []>} : vector<2x128xf32>, vector<128x10xf32>, vector<2x10xf32> -> vector<2x10xf32>
      %c0_19 = arith.constant 0 : index
      %c0_20 = arith.constant 0 : index
      %21 = vector.load %arg5[%c0_19, %c0_20] : memref<1x10xf32, #tpu.memory_space<vmem>>, vector<1x10xf32>
      %22 = vector.broadcast %21 : vector<1x10xf32> to vector<2x10xf32>
      %23 = arith.addf %20, %22 : vector<2x10xf32>
      %cst_21 = arith.constant dense<0xFF800000> : vector<2xf32>
      %24 = vector.multi_reduction <maximumf>, %23, %cst_21 [1] : vector<2x10xf32> to vector<2xf32>
      %25 = vector.shape_cast %24 : vector<2xf32> to vector<2x1xf32>
      %26 = vector.broadcast %25 : vector<2x1xf32> to vector<2x10xf32>
      %27 = arith.subf %23, %26 : vector<2x10xf32>
      %28 = math.exp %27 : vector<2x10xf32>
      %cst_22 = arith.constant dense<0.000000e+00> : vector<2xf32>
      %29 = vector.multi_reduction <add>, %28, %cst_22 [1] : vector<2x10xf32> to vector<2xf32>
      %30 = vector.shape_cast %29 : vector<2xf32> to vector<2x1xf32>
      %31 = math.log %30 : vector<2x1xf32>
      %32 = vector.broadcast %31 : vector<2x1xf32> to vector<2x10xf32>
      %33 = arith.subf %27, %32 : vector<2x10xf32>
      %c0_23 = arith.constant 0 : index
      %c0_24 = arith.constant 0 : index
      %34 = vector.load %arg7[%c0_23, %c0_24] : memref<2x10xf32, #tpu.memory_space<vmem>>, vector<2x10xf32>
      tpu.vector_store %arg7[%c0_23, %c0_24], %33 {strides = array<i32>} : memref<2x10xf32, #tpu.memory_space<vmem>>, vector<2x10xf32>,
    } else {
    }
    return
  }
  func.func @transform_0(%arg0: i32) -> (i32, i32) {
    %c0_i32 = arith.constant 0 : i32
    %c0_i32_0 = arith.constant 0 : i32
    return %c0_i32, %arg0 : i32, i32
  }
  func.func @transform_1(%arg0: i32) -> (i32, i32) {
    %c0_i32 = arith.constant 0 : i32
    %c0_i32_0 = arith.constant 0 : i32
    return %arg0, %c0_i32 : i32, i32
  }
  func.func @transform_2(%arg0: i32) -> (i32, i32) {
    %c0_i32 = arith.constant 0 : i32
    %c0_i32_0 = arith.constant 0 : i32
    %c0_i32_1 = arith.constant 0 : i32
    return %c0_i32, %c0_i32_0 : i32, i32
  }
  func.func @transform_3(%arg0: i32) -> (i32, i32) {
    %c0_i32 = arith.constant 0 : i32
    %c0_i32_0 = arith.constant 0 : i32
    %c0_i32_1 = arith.constant 0 : i32
    return %c0_i32, %c0_i32_0 : i32, i32
  }
  func.func @transform_4(%arg0: i32) -> (i32, i32) {
    %c0_i32 = arith.constant 0 : i32
    %c0_i32_0 = arith.constant 0 : i32
    %c0_i32_1 = arith.constant 0 : i32
    return %c0_i32, %c0_i32_0 : i32, i32
  }
  func.func @transform_5(%arg0: i32) -> (i32, i32) {
    %c0_i32 = arith.constant 0 : i32
    %c0_i32_0 = arith.constant 0 : i32
    %c0_i32_1 = arith.constant 0 : i32
    return %c0_i32, %c0_i32_0 : i32, i32
  }
  func.func @transform_6(%arg0: i32) -> (i32, i32) {
    %c0_i32 = arith.constant 0 : i32
    %c0_i32_0 = arith.constant 0 : i32
    %c0_i32_1 = arith.constant 0 : i32
    return %c0_i32, %c0_i32_0 : i32, i32
  }
}

</mosaic_0001>

<llo_original>
// kernel: net_forward.2
$region0: #{net_forward.2}
  #allocation0 [shape = 'u32[]', space=smem, size = 0x4, offset = 0x4, fixed_abs, tag = 'smem constant byte address 0x4 - core index']
  #allocation1 [shape = 'u32[144,128]{1,0:T(1,128)}', space=vmem, size = 0x12000, scoped, tag = 'internal scratch']
  %s0 = inlined_call_operand.vmem [shape: bf16[2,576,81], index: 0, kind: input, shape index: {}]
  %s1 = inlined_call_operand.vmem [shape: bf16[81,288], index: 1, kind: input, shape index: {}]
  %s2 = inlined_call_operand.vmem [shape: f32[1,288], index: 2, kind: input, shape index: {}]
  %s3 = inlined_call_operand.vmem [shape: bf16[288,64], index: 3, kind: input, shape index: {}]
  %s4 = inlined_call_operand.vmem [shape: f32[1,64], index: 4, kind: input, shape index: {}]
  %s5 = inlined_call_operand.vmem [shape: bf16[2,72,128], index: 5, kind: output, shape index: {}]
  %s6 = sld [smem:[#allocation0]]
  $region53: #{net_forward.2} parent=0
    _
  %s8 = ssub.s32 1, %s6
  %s9 = scalar_select 0, %s8, %s6
  loop: start=0, step=1, limit=4
  $region2: #{net_forward.2} parent=0 // loop_pre_header
    _
  $region3: #{net_forward.2} parent=0 // loop_header
    %s11 = sphi 0, %s15
    %p12 = scmp.ge.s32.totalorder %s11, 4
    %s21 = sphi 0, %s23
    %s24 = sphi 0, %s21
    %s25 = sphi 0, %s24
    %s41 = sphi 0, %s25
    %s45 = sphi 0, %s45
    %s47 = sphi 0, %s45
    %s48 = sphi 0, %s47
    %s62 = sphi 0, %s48
    %s66 = sphi 0, %s66
    %s68 = sphi 0, %s66
    %s69 = sphi 0, %s68
    %s83 = sphi 0, %s69
    %s87 = sphi 0, %s87
    %s89 = sphi 0, %s87
    %s90 = sphi 0, %s89
    %s104 = sphi 0, %s90
    %s108 = sphi 0, %s108
    %s110 = sphi 0, %s108
    %s111 = sphi 0, %s110
    %s125 = sphi 0, %s111
    %s131 = sphi 0, %s133
    %s134 = sphi 0, %s131
    %s135 = sphi 0, %s134
    %s151 = sphi 0, %s135
  $region4: #{net_forward.2} parent=0 // loop_header_branch
    %14 = sbr.rel (%p12) target = $region8
  $region5: #{net_forward.2} parent=0 // loop_body
    %s16 = ssub.s32 %s11, 1
    %s17 = ssub.s32 %s11, 2
    %s18 = sadd.s32 %s11, 1
    %s19 = ssub.s32 %s11, %s18
    %p20 = scmp.eq.s32.totalorder %s19, 0
    %s22 = sadd.s32 %s21, 1
    %s23 = scalar_select %p20, %s21, %s22
    %p26 = pneg %p20
    %p27 = scmp.eq.s32.totalorder %s11, 1
    %p28 = por %p26, %p27
    %p29 = scmp.ne.s32.totalorder %s21, %s24
    %p30 = scmp.eq.s32.totalorder %s11, 0
    %p31 = por %p29, %p30
    %p32 = scmp.ne.s32.totalorder %s21, %s24
    %p33 = scmp.eq.s32.totalorder %s16, 1
    %p34 = por %p32, %p33
    %p35 = scmp.ne.s32.totalorder %s24, %s25
    %p36 = scmp.eq.s32.totalorder %s16, 0
    %p37 = por %p35, %p36
    %p38 = scmp.ne.s32.totalorder %s24, %s25
    %p39 = scmp.eq.s32.totalorder %s17, 1
    %p40 = por %p38, %p39
    %p42 = scmp.ne.s32.totalorder %s25, %s41
    %p43 = scmp.eq.s32.totalorder %s17, 0
    %p44 = por %p42, %p43
    %s46 = sadd.s32 %s45, 1
    %p49 = scmp.eq.s32.totalorder %s11, 1
    %p50 = scmp.ne.s32.totalorder %s45, %s47
    %p51 = scmp.eq.s32.totalorder %s11, 0
    %p52 = por %p50, %p51
    %p53 = scmp.ne.s32.totalorder %s45, %s47
    %p54 = scmp.eq.s32.totalorder %s16, 1
    %p55 = por %p53, %p54
    %p56 = scmp.ne.s32.totalorder %s47, %s48
    %p57 = scmp.eq.s32.totalorder %s16, 0
    %p58 = por %p56, %p57
    %p59 = scmp.ne.s32.totalorder %s47, %s48
    %p60 = scmp.eq.s32.totalorder %s17, 1
    %p61 = por %p59, %p60
    %p63 = scmp.ne.s32.totalorder %s48, %s62
    %p64 = scmp.eq.s32.totalorder %s17, 0
    %p65 = por %p63, %p64
    %s67 = sadd.s32 %s66, 1
    %p70 = scmp.eq.s32.totalorder %s11, 1
    %p71 = scmp.ne.s32.totalorder %s66, %s68
    %p72 = scmp.eq.s32.totalorder %s11, 0
    %p73 = por %p71, %p72
    %p74 = scmp.ne.s32.totalorder %s66, %s68
    %p75 = scmp.eq.s32.totalorder %s16, 1
    %p76 = por %p74, %p75
    %p77 = scmp.ne.s32.totalorder %s68, %s69
    %p78 = scmp.eq.s32.totalorder %s16, 0
    %p79 = por %p77, %p78
    %p80 = scmp.ne.s32.totalorder %s68, %s69
    %p81 = scmp.eq.s32.totalorder %s17, 1
    %p82 = por %p80, %p81
    %p84 = scmp.ne.s32.totalorder %s69, %s83
    %p85 = scmp.eq.s32.totalorder %s17, 0
    %p86 = por %p84, %p85
    %s88 = sadd.s32 %s87, 1
    %p91 = scmp.eq.s32.totalorder %s11, 1
    %p92 = scmp.ne.s32.totalorder %s87, %s89
    %p93 = scmp.eq.s32.totalorder %s11, 0
    %p94 = por %p92, %p93
    %p95 = scmp.ne.s32.totalorder %s87, %s89
    %p96 = scmp.eq.s32.totalorder %s16, 1
    %p97 = por %p95, %p96
    %p98 = scmp.ne.s32.totalorder %s89, %s90
    %p99 = scmp.eq.s32.totalorder %s16, 0
    %p100 = por %p98, %p99
    %p101 = scmp.ne.s32.totalorder %s89, %s90
    %p102 = scmp.eq.s32.totalorder %s17, 1
    %p103 = por %p101, %p102
    %p105 = scmp.ne.s32.totalorder %s90, %s104
    %p106 = scmp.eq.s32.totalorder %s17, 0
    %p107 = por %p105, %p106
    %s109 = sadd.s32 %s108, 1
    %p112 = scmp.eq.s32.totalorder %s11, 1
    %p113 = scmp.ne.s32.totalorder %s108, %s110
    %p114 = scmp.eq.s32.totalorder %s11, 0
    %p115 = por %p113, %p114
    %p116 = scmp.ne.s32.totalorder %s108, %s110
    %p117 = scmp.eq.s32.totalorder %s16, 1
    %p118 = por %p116, %p117
    %p119 = scmp.ne.s32.totalorder %s110, %s111
    %p120 = scmp.eq.s32.totalorder %s16, 0
    %p121 = por %p119, %p120
    %p122 = scmp.ne.s32.totalorder %s110, %s111
    %p123 = scmp.eq.s32.totalorder %s17, 1
    %p124 = por %p122, %p123
    %p126 = scmp.ne.s32.totalorder %s111, %s125
    %p127 = scmp.eq.s32.totalorder %s17, 0
    %p128 = por %p126, %p127
    %s129 = ssub.s32 %s11, %s18
    %p130 = scmp.eq.s32.totalorder %s129, 0
    %s132 = sadd.s32 %s131, 1
    %s133 = scalar_select %p130, %s131, %s132
    %p136 = pneg %p130
    %p137 = scmp.eq.s32.totalorder %s11, 1
    %p138 = por %p136, %p137
    %p139 = scmp.ne.s32.totalorder %s131, %s134
    %p140 = scmp.eq.s32.totalorder %s11, 0
    %p141 = por %p139, %p140
    %p142 = scmp.ne.s32.totalorder %s131, %s134
    %p143 = scmp.eq.s32.totalorder %s16, 1
    %p144 = por %p142, %p143
    %p145 = scmp.ne.s32.totalorder %s134, %s135
    %p146 = scmp.eq.s32.totalorder %s16, 0
    %p147 = por %p145, %p146
    %p148 = scmp.ne.s32.totalorder %s134, %s135
    %p149 = scmp.eq.s32.totalorder %s17, 1
    %p150 = por %p148, %p149
    %p152 = scmp.ne.s32.totalorder %s135, %s151
    %p153 = scmp.eq.s32.totalorder %s17, 0
    %p154 = por %p152, %p153
    %p155 = scmp.le.s32.totalorder 1, %s11
    %p156 = scmp.lt.s32.totalorder %s11, 3
    %p157 = pnand %p155, %p156
    %p158 = pneg %p157
    // Predicated region
    $region9: #{net_forward.2} parent=5 // pred_check
      _
    $region10: #{net_forward.2} parent=5 // pred_check_branch
      %160 = sbr.rel (%p157) target = $region12
    $region11: #{net_forward.2} parent=5 // pred_region
      %s161 = ssub.s32 %s11, 1
      // Predicated region
      $region13: #{net_forward.2} parent=11 // pred_check
        %p162 = pneg %p58
      $region14: #{net_forward.2} parent=11 // pred_check_branch
        %164 = sbr.rel (%p162) target = $region16
      $region15: #{net_forward.2} parent=11 // pred_region
        _
      $region16: #{net_forward.2} parent=11 // pred_fallthru
        _
      // Predicated region
      $region17: #{net_forward.2} parent=11 // pred_check
        %p165 = pneg %p79
      $region18: #{net_forward.2} parent=11 // pred_check_branch
        %167 = sbr.rel (%p165) target = $region20
      $region19: #{net_forward.2} parent=11 // pred_region
        _
      $region20: #{net_forward.2} parent=11 // pred_fallthru
        _
      // Predicated region
      $region21: #{net_forward.2} parent=11 // pred_check
        %p168 = pneg %p100
      $region22: #{net_forward.2} parent=11 // pred_check_branch
        %170 = sbr.rel (%p168) target = $region24
      $region23: #{net_forward.2} parent=11 // pred_region
        _
      $region24: #{net_forward.2} parent=11 // pred_fallthru
        _
      // Predicated region
      $region25: #{net_forward.2} parent=11 // pred_check
        %p171 = pneg %p121
      $region26: #{net_forward.2} parent=11 // pred_check_branch
        %173 = sbr.rel (%p171) target = $region28
      $region27: #{net_forward.2} parent=11 // pred_region
        _
      $region28: #{net_forward.2} parent=11 // pred_fallthru
        _
    $region12: #{net_forward.2} parent=5 // pred_fallthru
      _
    %p174 = scmp.lt.s32.totalorder %s11, 2
    // Predicated region
    $region29: #{net_forward.2} parent=5 // pred_check
      %p175 = pneg %p174
    $region30: #{net_forward.2} parent=5 // pred_check_branch
      %177 = sbr.rel (%p175) target = $region32
    $region31: #{net_forward.2} parent=5 // pred_region
      // Predicated region
      $region33: #{net_forward.2} parent=31 // pred_check
        %p178 = pneg %p31
      $region34: #{net_forward.2} parent=31 // pred_check_branch
        %180 = sbr.rel (%p178) target = $region36
      $region35: #{net_forward.2} parent=31 // pred_region
        %p181 = scmp.lt.s32.totalorder %s11, 1
        %s182 = scalar_select %p181, %s11, 1
        %s183 = smul.addr %s182, 72
        %s184 = smul.addr %s183, 4
        %s185 = scalar_lea.vmem %s0, %s184
      $region36: #{net_forward.2} parent=31 // pred_fallthru
        _
    $region32: #{net_forward.2} parent=5 // pred_fallthru
      _
    %p186 = scmp.le.s32.totalorder 1, %s11
    %p187 = scmp.lt.s32.totalorder %s11, 3
    %p188 = pnand %p186, %p187
    %p189 = pneg %p188
    // Predicated region
    $region37: #{net_forward.2} parent=5 // pred_check
      _
    $region38: #{net_forward.2} parent=5 // pred_check_branch
      %191 = sbr.rel (%p188) target = $region40
    $region39: #{net_forward.2} parent=5 // pred_region
      %s192 = ssub.s32 %s11, 1
      %p193 = scmp.lt.s32.totalorder %s16, 1
      %s194 = scalar_select %p193, %s16, 1
      %s195 = smul.addr %s194, 72
      %s196 = smul.addr %s195, 4
      %s197 = scalar_lea.vmem %s0, %s196
      %p198 = pneg %p37
      %p199 = pneg %p34
      %p200 = pneg %p58
      %p201 = pneg %p55
      %p202 = pneg %p79
      %p203 = pneg %p76
      %p204 = pneg %p100
      %p205 = pneg %p97
      %p206 = pneg %p121
      %p207 = pneg %p118
      %p208 = pneg %p147
      %p209 = pneg %p144
      %p210 = scmp.lt.s32.totalorder %s16, 1
      %s211 = scalar_select %p210, %s16, 1
      %s212 = smul.addr %s211, 9
      %s213 = smul.addr %s212, 4
      %s214 = scalar_lea.vmem %s5, %s213
      %p215 = scmp.lt.s32.totalorder %s16, 1
      %s216 = scalar_select %p215, %s16, 1
      %s217 = smul.addr %s216, 72
      %s218 = smul.addr %s217, 4
      %s219 = scalar_lea.vmem %s0, %s218
      %p220 = scmp.lt.s32.totalorder %s16, 1
      %s221 = scalar_select %p220, %s16, 1
      %s222 = smul.addr %s221, 9
      %s223 = smul.addr %s222, 4
      %s224 = scalar_lea.vmem %s5, %s223
      %v226 = vld [vmem:[%s219] sm:$0xf]
      %v227 = vld [vmem:[%s219 + $0x4] sm:$0xf]
      %v228 = vld [vmem:[%s219 + $0x8] sm:$0xf]
      %v229 = vld [vmem:[%s219 + $0xc] sm:$0xf]
      %v230 = vld [vmem:[%s219 + $0x10] sm:$0xf]
      %v231 = vld [vmem:[%s219 + $0x14] sm:$0xf]
      %v232 = vld [vmem:[%s219 + $0x18] sm:$0xf]
      %v233 = vld [vmem:[%s219 + $0x1c] sm:$0xf]
      %v234 = vld [vmem:[%s219 + $0x20] sm:$0xf]
      %v235 = vld [vmem:[%s219 + $0x24] sm:$0xf]
      %v236 = vld [vmem:[%s219 + $0x28] sm:$0xf]
      %v237 = vld [vmem:[%s219 + $0x2c] sm:$0xf]
      %v238 = vld [vmem:[%s219 + $0x30] sm:$0xf]
      %v239 = vld [vmem:[%s219 + $0x34] sm:$0xf]
      %v240 = vld [vmem:[%s219 + $0x38] sm:$0xf]
      %v241 = vld [vmem:[%s219 + $0x3c] sm:$0xf]
      %v242 = vld [vmem:[%s219 + $0x40] sm:$0xf]
      %v243 = vld [vmem:[%s219 + $0x44] sm:$0xf]
      %v244 = vld [vmem:[%s219 + $0x48] sm:$0xf]
      %v245 = vld [vmem:[%s219 + $0x4c] sm:$0xf]
      %v246 = vld [vmem:[%s219 + $0x50] sm:$0xf]
      %v247 = vld [vmem:[%s219 + $0x54] sm:$0xf]
      %v248 = vld [vmem:[%s219 + $0x58] sm:$0xf]
      %v249 = vld [vmem:[%s219 + $0x5c] sm:$0xf]
      %v250 = vld [vmem:[%s219 + $0x60] sm:$0xf]
      %v251 = vld [vmem:[%s219 + $0x64] sm:$0xf]
      %v252 = vld [vmem:[%s219 + $0x68] sm:$0xf]
      %v253 = vld [vmem:[%s219 + $0x6c] sm:$0xf]
      %v254 = vld [vmem:[%s219 + $0x70] sm:$0xf]
      %v255 = vld [vmem:[%s219 + $0x74] sm:$0xf]
      %v256 = vld [vmem:[%s219 + $0x78] sm:$0xf]
      %v257 = vld [vmem:[%s219 + $0x7c] sm:$0xf]
      %v258 = vld [vmem:[%s219 + $0x80] sm:$0xf]
      %v259 = vld [vmem:[%s219 + $0x84] sm:$0xf]
      %v260 = vld [vmem:[%s219 + $0x88] sm:$0xf]
      %v261 = vld [vmem:[%s219 + $0x8c] sm:$0xf]
      %v262 = vld [vmem:[%s219 + $0x90] sm:$0xf]
      %v263 = vld [vmem:[%s219 + $0x94] sm:$0xf]
      %v264 = vld [vmem:[%s219 + $0x98] sm:$0xf]
      %v265 = vld [vmem:[%s219 + $0x9c] sm:$0xf]
      %v266 = vld [vmem:[%s219 + $0xa0] sm:$0xf]
      %v267 = vld [vmem:[%s219 + $0xa4] sm:$0xf]
      %v268 = vld [vmem:[%s219 + $0xa8] sm:$0xf]
      %v269 = vld [vmem:[%s219 + $0xac] sm:$0xf]
      %v270 = vld [vmem:[%s219 + $0xb0] sm:$0xf]
      %v271 = vld [vmem:[%s219 + $0xb4] sm:$0xf]
      %v272 = vld [vmem:[%s219 + $0xb8] sm:$0xf]
      %v273 = vld [vmem:[%s219 + $0xbc] sm:$0xf]
      %v274 = vld [vmem:[%s219 + $0xc0] sm:$0xf]
      %v275 = vld [vmem:[%s219 + $0xc4] sm:$0xf]
      %v276 = vld [vmem:[%s219 + $0xc8] sm:$0xf]
      %v277 = vld [vmem:[%s219 + $0xcc] sm:$0xf]
      %v278 = vld [vmem:[%s219 + $0xd0] sm:$0xf]
      %v279 = vld [vmem:[%s219 + $0xd4] sm:$0xf]
      %v280 = vld [vmem:[%s219 + $0xd8] sm:$0xf]
      %v281 = vld [vmem:[%s219 + $0xdc] sm:$0xf]
      %v282 = vld [vmem:[%s219 + $0xe0] sm:$0xf]
      %v283 = vld [vmem:[%s219 + $0xe4] sm:$0xf]
      %v284 = vld [vmem:[%s219 + $0xe8] sm:$0xf]
      %v285 = vld [vmem:[%s219 + $0xec] sm:$0xf]
      %v286 = vld [vmem:[%s219 + $0xf0] sm:$0xf]
      %v287 = vld [vmem:[%s219 + $0xf4] sm:$0xf]
      %v288 = vld [vmem:[%s219 + $0xf8] sm:$0xf]
      %v289 = vld [vmem:[%s219 + $0xfc] sm:$0xf]
      %v290 = vld [vmem:[%s219 + $0x100] sm:$0xf]
      %v291 = vld [vmem:[%s219 + $0x104] sm:$0xf]
      %v292 = vld [vmem:[%s219 + $0x108] sm:$0xf]
      %v293 = vld [vmem:[%s219 + $0x10c] sm:$0xf]
      %v294 = vld [vmem:[%s219 + $0x110] sm:$0xf]
      %v295 = vld [vmem:[%s219 + $0x114] sm:$0xf]
      %v296 = vld [vmem:[%s219 + $0x118] sm:$0xf]
      %v297 = vld [vmem:[%s219 + $0x11c] sm:$0xf]
      %v298 = vld [vmem:[%s1] sm:$0xff]
      %v299 = vld [vmem:[%s1 + $0x8] sm:$0xf]
      %v300 = vld [vmem:[%s1 + $0xc] sm:$0xff]
      %v301 = vld [vmem:[%s1 + $0x14] sm:$0xf]
      %v302 = vld [vmem:[%s1 + $0x18] sm:$0xff]
      %v303 = vld [vmem:[%s1 + $0x20] sm:$0xf]
      %v304 = vld [vmem:[%s1 + $0x24] sm:$0xff]
      %v305 = vld [vmem:[%s1 + $0x2c] sm:$0xf]
      %v306 = vld [vmem:[%s1 + $0x30] sm:$0xff]
      %v307 = vld [vmem:[%s1 + $0x38] sm:$0xf]
      %v308 = vld [vmem:[%s1 + $0x3c] sm:$0xff]
      %v309 = vld [vmem:[%s1 + $0x44] sm:$0xf]
      %v310 = vld [vmem:[%s1 + $0x48] sm:$0xff]
      %v311 = vld [vmem:[%s1 + $0x50] sm:$0xf]
      %v312 = vld [vmem:[%s1 + $0x54] sm:$0xff]
      %v313 = vld [vmem:[%s1 + $0x5c] sm:$0xf]
      %v314 = vld [vmem:[%s1 + $0x60] sm:$0xff]
      %v315 = vld [vmem:[%s1 + $0x68] sm:$0xf]
      %v316 = vld [vmem:[%s1 + $0x6c] sm:$0xff]
      %v317 = vld [vmem:[%s1 + $0x74] sm:$0xf]
      %v318 = vld [vmem:[%s1 + $0x78] sm:$0x11]
      %v319 = vld [vmem:[%s1 + $0x80] sm:$0x1]
      %v320 = vld [vmem:[%s2] sm:$0x7]
      %v322 = vlaneseq
      %v323 = vshrl.u32 %v322, 7
      %v324 = vsub.s32 0, %v323
      %v325 = vrot.slane %v320, %v324
      %v326 = vlaneseq
      %v327 = vshrl.u32 %v326, 7
      %v328 = vsub.s32 1, %v327
      %v329 = vrot.slane %v320, %v328
      %v330 = vlaneseq
      %v331 = vshrl.u32 %v330, 7
      %v332 = vsub.s32 2, %v331
      %v333 = vrot.slane %v320, %v332
      %v409 = vunpack.c.l.b16 %v226
      %v410 = vunpack.c.l.b16 %v227
      %v411 = vunpack.c.l.b16 %v228
      %v412 = vunpack.c.l.b16 %v229
      %v413 = vunpack.c.l.b16 %v230
      %v414 = vunpack.c.l.b16 %v231
      %v415 = vunpack.c.l.b16 %v232
      %v416 = vunpack.c.l.b16 %v233
      %v417 = vunpack.c.l.b16 %v234
      %v418 = vunpack.c.l.b16 %v235
      %v419 = vunpack.c.l.b16 %v236
      %v420 = vunpack.c.l.b16 %v237
      %v421 = vunpack.c.l.b16 %v238
      %v422 = vunpack.c.l.b16 %v239
      %v423 = vunpack.c.l.b16 %v240
      %v424 = vunpack.c.l.b16 %v241
      %v425 = vunpack.c.l.b16 %v242
      %v426 = vunpack.c.l.b16 %v243
      %v427 = vunpack.c.l.b16 %v244
      %v428 = vunpack.c.l.b16 %v245
      %v429 = vunpack.c.l.b16 %v246
      %v430 = vunpack.c.l.b16 %v247
      %v431 = vunpack.c.l.b16 %v248
      %v432 = vunpack.c.l.b16 %v249
      %v433 = vunpack.c.l.b16 %v250
      %v434 = vunpack.c.l.b16 %v251
      %v435 = vunpack.c.l.b16 %v252
      %v436 = vunpack.c.l.b16 %v253
      %v437 = vunpack.c.l.b16 %v254
      %v438 = vunpack.c.l.b16 %v255
      %v439 = vunpack.c.l.b16 %v256
      %v440 = vunpack.c.l.b16 %v257
      %v441 = vunpack.c.l.b16 %v258
      %v442 = vunpack.c.l.b16 %v259
      %v443 = vunpack.c.l.b16 %v260
      %v444 = vunpack.c.l.b16 %v261
      %v445 = vunpack.c.l.b16 %v262
      %v446 = vunpack.c.l.b16 %v263
      %v447 = vunpack.c.l.b16 %v264
      %v448 = vunpack.c.l.b16 %v265
      %v449 = vunpack.c.l.b16 %v266
      %v450 = vunpack.c.l.b16 %v267
      %v451 = vunpack.c.l.b16 %v268
      %v452 = vunpack.c.l.b16 %v269
      %v453 = vunpack.c.l.b16 %v270
      %v454 = vunpack.c.l.b16 %v271
      %v455 = vunpack.c.l.b16 %v272
      %v456 = vunpack.c.l.b16 %v273
      %v457 = vunpack.c.l.b16 %v274
      %v458 = vunpack.c.l.b16 %v275
      %v459 = vunpack.c.l.b16 %v276
      %v460 = vunpack.c.l.b16 %v277
      %v461 = vunpack.c.l.b16 %v278
      %v462 = vunpack.c.l.b16 %v279
      %v463 = vunpack.c.l.b16 %v280
      %v464 = vunpack.c.l.b16 %v281
      %v465 = vunpack.c.l.b16 %v282
      %v466 = vunpack.c.l.b16 %v283
      %v467 = vunpack.c.l.b16 %v284
      %v468 = vunpack.c.l.b16 %v285
      %v469 = vunpack.c.l.b16 %v286
      %v470 = vunpack.c.l.b16 %v287
      %v471 = vunpack.c.l.b16 %v288
      %v472 = vunpack.c.l.b16 %v289
      %v473 = vunpack.c.l.b16 %v290
      %v474 = vunpack.c.l.b16 %v291
      %v475 = vunpack.c.l.b16 %v292
      %v476 = vunpack.c.l.b16 %v293
      %v477 = vunpack.c.l.b16 %v294
      %v478 = vunpack.c.l.b16 %v295
      %v479 = vunpack.c.l.b16 %v296
      %v480 = vunpack.c.l.b16 %v297
      %v481 = vpack.c.b16 %v410, %v409
      %v482 = vpack.c.b16 %v412, %v411
      %v483 = vpack.c.b16 %v414, %v413
      %v484 = vpack.c.b16 %v416, %v415
      %v485 = vpack.c.b16 %v418, %v417
      %v486 = vpack.c.b16 %v420, %v419
      %v487 = vpack.c.b16 %v422, %v421
      %v488 = vpack.c.b16 %v424, %v423
      %v489 = vpack.c.b16 %v426, %v425
      %v490 = vpack.c.b16 %v428, %v427
      %v491 = vpack.c.b16 %v430, %v429
      %v492 = vpack.c.b16 %v432, %v431
      %v493 = vpack.c.b16 %v434, %v433
      %v494 = vpack.c.b16 %v436, %v435
      %v495 = vpack.c.b16 %v438, %v437
      %v496 = vpack.c.b16 %v440, %v439
      %v497 = vpack.c.b16 %v442, %v441
      %v498 = vpack.c.b16 %v444, %v443
      %v499 = vpack.c.b16 %v446, %v445
      %v500 = vpack.c.b16 %v448, %v447
      %v501 = vpack.c.b16 %v450, %v449
      %v502 = vpack.c.b16 %v452, %v451
      %v503 = vpack.c.b16 %v454, %v453
      %v504 = vpack.c.b16 %v456, %v455
      %v505 = vpack.c.b16 %v458, %v457
      %v506 = vpack.c.b16 %v460, %v459
      %v507 = vpack.c.b16 %v462, %v461
      %v508 = vpack.c.b16 %v464, %v463
      %v509 = vpack.c.b16 %v466, %v465
      %v510 = vpack.c.b16 %v468, %v467
      %v511 = vpack.c.b16 %v470, %v469
      %v512 = vpack.c.b16 %v472, %v471
      %v513 = vpack.c.b16 %v474, %v473
      %v514 = vpack.c.b16 %v476, %v475
      %v515 = vpack.c.b16 %v478, %v477
      %v516 = vpack.c.b16 %v480, %v479
      %v539 = vunpack.c.l.b16 %v298
      %v540 = vunpack.c.h.b16 %v298
      %v541 = vunpack.c.l.b16 %v299
      %v542 = vunpack.c.l.b16 %v300
      %v543 = vunpack.c.h.b16 %v300
      %v544 = vunpack.c.l.b16 %v301
      %v545 = vunpack.c.l.b16 %v302
      %v546 = vunpack.c.h.b16 %v302
      %v547 = vunpack.c.l.b16 %v303
      %v548 = vunpack.c.l.b16 %v304
      %v549 = vunpack.c.h.b16 %v304
      %v550 = vunpack.c.l.b16 %v305
      %v551 = vunpack.c.l.b16 %v306
      %v552 = vunpack.c.h.b16 %v306
      %v553 = vunpack.c.l.b16 %v307
      %v554 = vunpack.c.l.b16 %v308
      %v555 = vunpack.c.h.b16 %v308
      %v556 = vunpack.c.l.b16 %v309
      %v557 = vunpack.c.l.b16 %v310
      %v558 = vunpack.c.h.b16 %v310
      %v559 = vunpack.c.l.b16 %v311
      %v560 = vunpack.c.l.b16 %v312
      %v561 = vunpack.c.h.b16 %v312
      %v562 = vunpack.c.l.b16 %v313
      %v563 = vunpack.c.l.b16 %v314
      %v564 = vunpack.c.h.b16 %v314
      %v565 = vunpack.c.l.b16 %v315
      %v566 = vunpack.c.l.b16 %v316
      %v567 = vunpack.c.h.b16 %v316
      %v568 = vunpack.c.l.b16 %v317
      %v569 = vunpack.c.l.b16 %v318
      %v570 = vunpack.c.h.b16 %v318
      %v571 = vunpack.c.l.b16 %v319
      %v572 = vpack.c.b16 %v542, %v539
      %v573 = vpack.c.b16 %v543, %v540
      %v574 = vpack.c.b16 %v544, %v541
      %v575 = vpack.c.b16 %v548, %v545
      %v576 = vpack.c.b16 %v549, %v546
      %v577 = vpack.c.b16 %v550, %v547
      %v578 = vpack.c.b16 %v554, %v551
      %v579 = vpack.c.b16 %v555, %v552
      %v580 = vpack.c.b16 %v556, %v553
      %v581 = vpack.c.b16 %v560, %v557
      %v582 = vpack.c.b16 %v561, %v558
      %v583 = vpack.c.b16 %v562, %v559
      %v584 = vpack.c.b16 %v566, %v563
      %v585 = vpack.c.b16 %v567, %v564
      %v586 = vpack.c.b16 %v568, %v565
      %v587 = vpack.c.b16 %v569, %v569
      %v588 = vpack.c.b16 %v570, %v570
      %v589 = vpack.c.b16 %v571, %v571
      %vm605 = vcmask 662528
      %v607 = vsel %vm605, %v481, 0
      %v610 = vsel %vm605, %v482, 0
      %v613 = vsel %vm605, %v483, 0
      %v616 = vsel %vm605, %v484, 0
      %v619 = vsel %vm605, %v485, 0
      %v622 = vsel %vm605, %v486, 0
      %v625 = vsel %vm605, %v487, 0
      %v628 = vsel %vm605, %v488, 0
      %v631 = vsel %vm605, %v489, 0
      %v634 = vsel %vm605, %v490, 0
      %v637 = vsel %vm605, %v491, 0
      %v640 = vsel %vm605, %v492, 0
      %v643 = vsel %vm605, %v493, 0
      %v646 = vsel %vm605, %v494, 0
      %v649 = vsel %vm605, %v495, 0
      %v652 = vsel %vm605, %v496, 0
      %v655 = vsel %vm605, %v497, 0
      %v658 = vsel %vm605, %v498, 0
      %v661 = vsel %vm605, %v499, 0
      %v664 = vsel %vm605, %v500, 0
      %v667 = vsel %vm605, %v501, 0
      %v670 = vsel %vm605, %v502, 0
      %v673 = vsel %vm605, %v503, 0
      %v676 = vsel %vm605, %v504, 0
      %v679 = vsel %vm605, %v505, 0
      %v682 = vsel %vm605, %v506, 0
      %v685 = vsel %vm605, %v507, 0
      %v688 = vsel %vm605, %v508, 0
      %v691 = vsel %vm605, %v509, 0
      %v694 = vsel %vm605, %v510, 0
      %v697 = vsel %vm605, %v511, 0
      %v700 = vsel %vm605, %v512, 0
      %v703 = vsel %vm605, %v513, 0
      %v706 = vsel %vm605, %v514, 0
      %v709 = vsel %vm605, %v515, 0
      %v712 = vsel %vm605, %v516, 0
      %vm714 = vcmask 1040384
      %v715 = vsel 0, 4294967295, 65535
      %v716 = vsel %vm714, %v715, 0
      %v718 = vand.u32 %v587, %v716
      %v721 = vand.u32 %v588, %v716
      %v724 = vand.u32 %v589, %v716
      %726 = vmatprep.subr.bf16.mxu0 %v573
      %727 = vmatpush1.bf16.msra.mxu0 %v572
      %728 = vmatprep.subr.bf16.mxu0 %v576
      %729 = vmatpush1.bf16.msra.mxu0 %v575
      %730 = vmatprep.subr.bf16.mxu0 %v579
      %731 = vmatpush1.bf16.msra.mxu0 %v578
      %732 = vmatprep.subr.bf16.mxu0 %v582
      %733 = vmatpush1.bf16.msra.mxu0 %v581
      %734 = vmatprep.subr.bf16.mxu0 %v585
      %735 = vmatpush1.bf16.msra.mxu0 %v584
      %736 = vmatprep.subr.bf16.mxu0 %v721
      %737 = vmatpush1.bf16.msra.mxu0 %v718
      %738 = vmatprep.subr.bf16.mxu0 0
      %739 = vmatpush1.bf16.msra.mxu0 0
      %740 = vmatprep.subr.bf16.mxu0 0
      %741 = vmatpush1.bf16.msra.mxu0 0
      %742 = vmatprep.subr.bf16.mxu0 0
      %743 = vmatpush1.bf16.msra.mxu0 0
      %744 = vmatprep.subr.bf16.mxu0 0
      %745 = vmatpush1.bf16.msra.mxu0 0
      %746 = vmatprep.subr.bf16.mxu0 0
      %747 = vmatpush1.bf16.msra.mxu0 0
      %748 = vmatprep.subr.bf16.mxu0 0
      %749 = vmatpush1.bf16.msra.mxu0 0
      %750 = vmatprep.subr.bf16.mxu0 0
      %751 = vmatpush1.bf16.msra.mxu0 0
      %752 = vmatprep.subr.bf16.mxu0 0
      %753 = vmatpush1.bf16.msra.mxu0 0
      %754 = vmatprep.subr.bf16.mxu0 0
      %755 = vmatpush1.bf16.msra.mxu0 0
      %756 = vmatprep.subr.bf16.mxu0 0
      %757 = vmatpush1.bf16.msra.mxu0 0
      %758 = vmatprep.mubr.bf16.mxu0 0
      %759 = vmatmul.mubr.bf16.gmra.mrb[0].mxu0 %v607
      %v760 = vpop.f32.mrb[0].mxu0
      %v761 = vadd.f32 %v325, %v760
      %v762 = vpop.f32.mrb[0].mxu0
      %v763 = vadd.f32 %v329, %v762
      %v764 = vpop.f32.mrb[0].mxu0
      %v765 = vadd.f32 %v325, %v764
      %v766 = vpop.f32.mrb[0].mxu0
      %v767 = vadd.f32 %v329, %v766
      %768 = vmatprep.mubr.bf16.mxu0 0
      %769 = vmatmul.mubr.bf16.gmra.mrb[0].mxu0 %v610
      %v770 = vpop.f32.mrb[0].mxu0
      %v771 = vadd.f32 %v325, %v770
      %v772 = vpop.f32.mrb[0].mxu0
      %v773 = vadd.f32 %v329, %v772
      %v774 = vpop.f32.mrb[0].mxu0
      %v775 = vadd.f32 %v325, %v774
      %v776 = vpop.f32.mrb[0].mxu0
      %v777 = vadd.f32 %v329, %v776
      %778 = vmatprep.mubr.bf16.mxu0 0
      %779 = vmatmul.mubr.bf16.gmra.mrb[0].mxu0 %v613
      %v780 = vpop.f32.mrb[0].mxu0
      %v781 = vadd.f32 %v325, %v780
      %v782 = vpop.f32.mrb[0].mxu0
      %v783 = vadd.f32 %v329, %v782
      %v784 = vpop.f32.mrb[0].mxu0
      %v785 = vadd.f32 %v325, %v784
      %v786 = vpop.f32.mrb[0].mxu0
      %v787 = vadd.f32 %v329, %v786
      %788 = vmatprep.mubr.bf16.mxu0 0
      %789 = vmatmul.mubr.bf16.gmra.mrb[0].mxu0 %v616
      %v790 = vpop.f32.mrb[0].mxu0
      %v791 = vadd.f32 %v325, %v790
      %v792 = vpop.f32.mrb[0].mxu0
      %v793 = vadd.f32 %v329, %v792
      %v794 = vpop.f32.mrb[0].mxu0
      %v795 = vadd.f32 %v325, %v794
      %v796 = vpop.f32.mrb[0].mxu0
      %v797 = vadd.f32 %v329, %v796
      %798 = vmatprep.mubr.bf16.mxu0 0
      %799 = vmatmul.mubr.bf16.gmra.mrb[0].mxu0 %v619
      %v800 = vpop.f32.mrb[0].mxu0
      %v801 = vadd.f32 %v325, %v800
      %v802 = vpop.f32.mrb[0].mxu0
      %v803 = vadd.f32 %v329, %v802
      %v804 = vpop.f32.mrb[0].mxu0
      %v805 = vadd.f32 %v325, %v804
      %v806 = vpop.f32.mrb[0].mxu0
      %v807 = vadd.f32 %v329, %v806
      %808 = vmatprep.mubr.bf16.mxu0 0
      %809 = vmatmul.mubr.bf16.gmra.mrb[0].mxu0 %v622
      %v810 = vpop.f32.mrb[0].mxu0
      %v811 = vadd.f32 %v325, %v810
      %v812 = vpop.f32.mrb[0].mxu0
      %v813 = vadd.f32 %v329, %v812
      %v814 = vpop.f32.mrb[0].mxu0
      %v815 = vadd.f32 %v325, %v814
      %v816 = vpop.f32.mrb[0].mxu0
      %v817 = vadd.f32 %v329, %v816
      %818 = vmatprep.mubr.bf16.mxu0 0
      %819 = vmatmul.mubr.bf16.gmra.mrb[0].mxu0 %v625
      %v820 = vpop.f32.mrb[0].mxu0
      %v821 = vadd.f32 %v325, %v820
      %v822 = vpop.f32.mrb[0].mxu0
      %v823 = vadd.f32 %v329, %v822
      %v824 = vpop.f32.mrb[0].mxu0
      %v825 = vadd.f32 %v325, %v824
      %v826 = vpop.f32.mrb[0].mxu0
      %v827 = vadd.f32 %v329, %v826
      %828 = vmatprep.mubr.bf16.mxu0 0
      %829 = vmatmul.mubr.bf16.gmra.mrb[0].mxu0 %v628
      %v830 = vpop.f32.mrb[0].mxu0
      %v831 = vadd.f32 %v325, %v830
      %v832 = vpop.f32.mrb[0].mxu0
      %v833 = vadd.f32 %v329, %v832
      %v834 = vpop.f32.mrb[0].mxu0
      %v835 = vadd.f32 %v325, %v834
      %v836 = vpop.f32.mrb[0].mxu0
      %v837 = vadd.f32 %v329, %v836
      %838 = vmatprep.mubr.bf16.mxu0 0
      %839 = vmatmul.mubr.bf16.gmra.mrb[0].mxu0 %v631
      %v840 = vpop.f32.mrb[0].mxu0
      %v841 = vadd.f32 %v325, %v840
      %v842 = vpop.f32.mrb[0].mxu0
      %v843 = vadd.f32 %v329, %v842
      %v844 = vpop.f32.mrb[0].mxu0
      %v845 = vadd.f32 %v325, %v844
      %v846 = vpop.f32.mrb[0].mxu0
      %v847 = vadd.f32 %v329, %v846
      %848 = vmatprep.mubr.bf16.mxu0 0
      %849 = vmatmul.mubr.bf16.gmra.mrb[0].mxu0 %v634
      %v850 = vpop.f32.mrb[0].mxu0
      %v851 = vadd.f32 %v325, %v850
      %v852 = vpop.f32.mrb[0].mxu0
      %v853 = vadd.f32 %v329, %v852
      %v854 = vpop.f32.mrb[0].mxu0
      %v855 = vadd.f32 %v325, %v854
      %v856 = vpop.f32.mrb[0].mxu0
      %v857 = vadd.f32 %v329, %v856
      %858 = vmatprep.mubr.bf16.mxu0 0
      %859 = vmatmul.mubr.bf16.gmra.mrb[0].mxu0 %v637
      %v860 = vpop.f32.mrb[0].mxu0
      %v861 = vadd.f32 %v325, %v860
      %v862 = vpop.f32.mrb[0].mxu0
      %v863 = vadd.f32 %v329, %v862
      %v864 = vpop.f32.mrb[0].mxu0
      %v865 = vadd.f32 %v325, %v864
      %v866 = vpop.f32.mrb[0].mxu0
      %v867 = vadd.f32 %v329, %v866
      %868 = vmatprep.mubr.bf16.mxu0 0
      %869 = vmatmul.mubr.bf16.gmra.mrb[0].mxu0 %v640
      %v870 = vpop.f32.mrb[0].mxu0
      %v871 = vadd.f32 %v325, %v870
      %v872 = vpop.f32.mrb[0].mxu0
      %v873 = vadd.f32 %v329, %v872
      %v874 = vpop.f32.mrb[0].mxu0
      %v875 = vadd.f32 %v325, %v874
      %v876 = vpop.f32.mrb[0].mxu0
      %v877 = vadd.f32 %v329, %v876
      %878 = vmatprep.mubr.bf16.mxu0 0
      %879 = vmatmul.mubr.bf16.gmra.mrb[0].mxu0 %v643
      %v880 = vpop.f32.mrb[0].mxu0
      %v881 = vadd.f32 %v325, %v880
      %v882 = vpop.f32.mrb[0].mxu0
      %v883 = vadd.f32 %v329, %v882
      %v884 = vpop.f32.mrb[0].mxu0
      %v885 = vadd.f32 %v325, %v884
      %v886 = vpop.f32.mrb[0].mxu0
      %v887 = vadd.f32 %v329, %v886
      %888 = vmatprep.mubr.bf16.mxu0 0
      %889 = vmatmul.mubr.bf16.gmra.mrb[0].mxu0 %v646
      %v890 = vpop.f32.mrb[0].mxu0
      %v891 = vadd.f32 %v325, %v890
      %v892 = vpop.f32.mrb[0].mxu0
      %v893 = vadd.f32 %v329, %v892
      %v894 = vpop.f32.mrb[0].mxu0
      %v895 = vadd.f32 %v325, %v894
      %v896 = vpop.f32.mrb[0].mxu0
      %v897 = vadd.f32 %v329, %v896
      %898 = vmatprep.mubr.bf16.mxu0 0
      %899 = vmatmul.mubr.bf16.gmra.mrb[0].mxu0 %v649
      %v900 = vpop.f32.mrb[0].mxu0
      %v901 = vadd.f32 %v325, %v900
      %v902 = vpop.f32.mrb[0].mxu0
      %v903 = vadd.f32 %v329, %v902
      %v904 = vpop.f32.mrb[0].mxu0
      %v905 = vadd.f32 %v325, %v904
      %v906 = vpop.f32.mrb[0].mxu0
      %v907 = vadd.f32 %v329, %v906
      %908 = vmatprep.mubr.bf16.mxu0 0
      %909 = vmatmul.mubr.bf16.gmra.mrb[0].mxu0 %v652
      %v910 = vpop.f32.mrb[0].mxu0
      %v911 = vadd.f32 %v325, %v910
      %v912 = vpop.f32.mrb[0].mxu0
      %v913 = vadd.f32 %v329, %v912
      %v914 = vpop.f32.mrb[0].mxu0
      %v915 = vadd.f32 %v325, %v914
      %v916 = vpop.f32.mrb[0].mxu0
      %v917 = vadd.f32 %v329, %v916
      %918 = vmatprep.mubr.bf16.mxu0 0
      %919 = vmatmul.mubr.bf16.gmra.mrb[0].mxu0 %v655
      %v920 = vpop.f32.mrb[0].mxu0
      %v921 = vadd.f32 %v325, %v920
      %v922 = vpop.f32.mrb[0].mxu0
      %v923 = vadd.f32 %v329, %v922
      %v924 = vpop.f32.mrb[0].mxu0
      %v925 = vadd.f32 %v325, %v924
      %v926 = vpop.f32.mrb[0].mxu0
      %v927 = vadd.f32 %v329, %v926
      %928 = vmatprep.mubr.bf16.mxu0 0
      %929 = vmatmul.mubr.bf16.gmra.mrb[0].mxu0 %v658
      %v930 = vpop.f32.mrb[0].mxu0
      %v931 = vadd.f32 %v325, %v930
      %v932 = vpop.f32.mrb[0].mxu0
      %v933 = vadd.f32 %v329, %v932
      %v934 = vpop.f32.mrb[0].mxu0
      %v935 = vadd.f32 %v325, %v934
      %v936 = vpop.f32.mrb[0].mxu0
      %v937 = vadd.f32 %v329, %v936
      %938 = vmatprep.mubr.bf16.mxu0 0
      %939 = vmatmul.mubr.bf16.gmra.mrb[0].mxu0 %v661
      %v940 = vpop.f32.mrb[0].mxu0
      %v941 = vadd.f32 %v325, %v940
      %v942 = vpop.f32.mrb[0].mxu0
      %v943 = vadd.f32 %v329, %v942
      %v944 = vpop.f32.mrb[0].mxu0
      %v945 = vadd.f32 %v325, %v944
      %v946 = vpop.f32.mrb[0].mxu0
      %v947 = vadd.f32 %v329, %v946
      %948 = vmatprep.mubr.bf16.mxu0 0
      %949 = vmatmul.mubr.bf16.gmra.mrb[0].mxu0 %v664
      %v950 = vpop.f32.mrb[0].mxu0
      %v951 = vadd.f32 %v325, %v950
      %v952 = vpop.f32.mrb[0].mxu0
      %v953 = vadd.f32 %v329, %v952
      %v954 = vpop.f32.mrb[0].mxu0
      %v955 = vadd.f32 %v325, %v954
      %v956 = vpop.f32.mrb[0].mxu0
      %v957 = vadd.f32 %v329, %v956
      %958 = vmatprep.mubr.bf16.mxu0 0
      %959 = vmatmul.mubr.bf16.gmra.mrb[0].mxu0 %v667
      %v960 = vpop.f32.mrb[0].mxu0
      %v961 = vadd.f32 %v325, %v960
      %v962 = vpop.f32.mrb[0].mxu0
      %v963 = vadd.f32 %v329, %v962
      %v964 = vpop.f32.mrb[0].mxu0
      %v965 = vadd.f32 %v325, %v964
      %v966 = vpop.f32.mrb[0].mxu0
      %v967 = vadd.f32 %v329, %v966
      %968 = vmatprep.mubr.bf16.mxu0 0
      %969 = vmatmul.mubr.bf16.gmra.mrb[0].mxu0 %v670
      %v970 = vpop.f32.mrb[0].mxu0
      %v971 = vadd.f32 %v325, %v970
      %v972 = vpop.f32.mrb[0].mxu0
      %v973 = vadd.f32 %v329, %v972
      %v974 = vpop.f32.mrb[0].mxu0
      %v975 = vadd.f32 %v325, %v974
      %v976 = vpop.f32.mrb[0].mxu0
      %v977 = vadd.f32 %v329, %v976
      %978 = vmatprep.mubr.bf16.mxu0 0
      %979 = vmatmul.mubr.bf16.gmra.mrb[0].mxu0 %v673
      %v980 = vpop.f32.mrb[0].mxu0
      %v981 = vadd.f32 %v325, %v980
      %v982 = vpop.f32.mrb[0].mxu0
      %v983 = vadd.f32 %v329, %v982
      %v984 = vpop.f32.mrb[0].mxu0
      %v985 = vadd.f32 %v325, %v984
      %v986 = vpop.f32.mrb[0].mxu0
      %v987 = vadd.f32 %v329, %v986
      %988 = vmatprep.mubr.bf16.mxu0 0
      %989 = vmatmul.mubr.bf16.gmra.mrb[0].mxu0 %v676
      %v990 = vpop.f32.mrb[0].mxu0
      %v991 = vadd.f32 %v325, %v990
      %v992 = vpop.f32.mrb[0].mxu0
      %v993 = vadd.f32 %v329, %v992
      %v994 = vpop.f32.mrb[0].mxu0
      %v995 = vadd.f32 %v325, %v994
      %v996 = vpop.f32.mrb[0].mxu0
      %v997 = vadd.f32 %v329, %v996
      %998 = vmatprep.mubr.bf16.mxu0 0
      %999 = vmatmul.mubr.bf16.gmra.mrb[0].mxu0 %v679
      %v1000 = vpop.f32.mrb[0].mxu0
      %v1001 = vadd.f32 %v325, %v1000
      %v1002 = vpop.f32.mrb[0].mxu0
      %v1003 = vadd.f32 %v329, %v1002
      %v1004 = vpop.f32.mrb[0].mxu0
      %v1005 = vadd.f32 %v325, %v1004
      %v1006 = vpop.f32.mrb[0].mxu0
      %v1007 = vadd.f32 %v329, %v1006
      %1008 = vmatprep.mubr.bf16.mxu0 0
      %1009 = vmatmul.mubr.bf16.gmra.mrb[0].mxu0 %v682
      %v1010 = vpop.f32.mrb[0].mxu0
      %v1011 = vadd.f32 %v325, %v1010
      %v1012 = vpop.f32.mrb[0].mxu0
      %v1013 = vadd.f32 %v329, %v1012
      %v1014 = vpop.f32.mrb[0].mxu0
      %v1015 = vadd.f32 %v325, %v1014
      %v1016 = vpop.f32.mrb[0].mxu0
      %v1017 = vadd.f32 %v329, %v1016
      %1018 = vmatprep.mubr.bf16.mxu0 0
      %1019 = vmatmul.mubr.bf16.gmra.mrb[0].mxu0 %v685
      %v1020 = vpop.f32.mrb[0].mxu0
      %v1021 = vadd.f32 %v325, %v1020
      %v1022 = vpop.f32.mrb[0].mxu0
      %v1023 = vadd.f32 %v329, %v1022
      %v1024 = vpop.f32.mrb[0].mxu0
      %v1025 = vadd.f32 %v325, %v1024
      %v1026 = vpop.f32.mrb[0].mxu0
      %v1027 = vadd.f32 %v329, %v1026
      %1028 = vmatprep.mubr.bf16.mxu0 0
      %1029 = vmatmul.mubr.bf16.gmra.mrb[0].mxu0 %v688
      %v1030 = vpop.f32.mrb[0].mxu0
      %v1031 = vadd.f32 %v325, %v1030
      %v1032 = vpop.f32.mrb[0].mxu0
      %v1033 = vadd.f32 %v329, %v1032
      %v1034 = vpop.f32.mrb[0].mxu0
      %v1035 = vadd.f32 %v325, %v1034
      %v1036 = vpop.f32.mrb[0].mxu0
      %v1037 = vadd.f32 %v329, %v1036
      %1038 = vmatprep.mubr.bf16.mxu0 0
      %1039 = vmatmul.mubr.bf16.gmra.mrb[0].mxu0 %v691
      %v1040 = vpop.f32.mrb[0].mxu0
      %v1041 = vadd.f32 %v325, %v1040
      %v1042 = vpop.f32.mrb[0].mxu0
      %v1043 = vadd.f32 %v329, %v1042
      %v1044 = vpop.f32.mrb[0].mxu0
      %v1045 = vadd.f32 %v325, %v1044
      %v1046 = vpop.f32.mrb[0].mxu0
      %v1047 = vadd.f32 %v329, %v1046
      %1048 = vmatprep.mubr.bf16.mxu0 0
      %1049 = vmatmul.mubr.bf16.gmra.mrb[0].mxu0 %v694
      %v1050 = vpop.f32.mrb[0].mxu0
      %v1051 = vadd.f32 %v325, %v1050
      %v1052 = vpop.f32.mrb[0].mxu0
      %v1053 = vadd.f32 %v329, %v1052
      %v1054 = vpop.f32.mrb[0].mxu0
      %v1055 = vadd.f32 %v325, %v1054
      %v1056 = vpop.f32.mrb[0].mxu0
      %v1057 = vadd.f32 %v329, %v1056
      %1058 = vmatprep.mubr.bf16.mxu0 0
      %1059 = vmatmul.mubr.bf16.gmra.mrb[0].mxu0 %v697
      %v1060 = vpop.f32.mrb[0].mxu0
      %v1061 = vadd.f32 %v325, %v1060
      %v1062 = vpop.f32.mrb[0].mxu0
      %v1063 = vadd.f32 %v329, %v1062
      %v1064 = vpop.f32.mrb[0].mxu0
      %v1065 = vadd.f32 %v325, %v1064
      %v1066 = vpop.f32.mrb[0].mxu0
      %v1067 = vadd.f32 %v329, %v1066
      %1068 = vmatprep.mubr.bf16.mxu0 0
      %1069 = vmatmul.mubr.bf16.gmra.mrb[0].mxu0 %v700
      %v1070 = vpop.f32.mrb[0].mxu0
      %v1071 = vadd.f32 %v325, %v1070
      %v1072 = vpop.f32.mrb[0].mxu0
      %v1073 = vadd.f32 %v329, %v1072
      %v1074 = vpop.f32.mrb[0].mxu0
      %v1075 = vadd.f32 %v325, %v1074
      %v1076 = vpop.f32.mrb[0].mxu0
      %v1077 = vadd.f32 %v329, %v1076
      %1078 = vmatprep.mubr.bf16.mxu0 0
      %1079 = vmatmul.mubr.bf16.gmra.mrb[0].mxu0 %v703
      %v1080 = vpop.f32.mrb[0].mxu0
      %v1081 = vadd.f32 %v325, %v1080
      %v1082 = vpop.f32.mrb[0].mxu0
      %v1083 = vadd.f32 %v329, %v1082
      %v1084 = vpop.f32.mrb[0].mxu0
      %v1085 = vadd.f32 %v325, %v1084
      %v1086 = vpop.f32.mrb[0].mxu0
      %v1087 = vadd.f32 %v329, %v1086
      %1088 = vmatprep.mubr.bf16.mxu0 0
      %1089 = vmatmul.mubr.bf16.gmra.mrb[0].mxu0 %v706
      %v1090 = vpop.f32.mrb[0].mxu0
      %v1091 = vadd.f32 %v325, %v1090
      %v1092 = vpop.f32.mrb[0].mxu0
      %v1093 = vadd.f32 %v329, %v1092
      %v1094 = vpop.f32.mrb[0].mxu0
      %v1095 = vadd.f32 %v325, %v1094
      %v1096 = vpop.f32.mrb[0].mxu0
      %v1097 = vadd.f32 %v329, %v1096
      %1098 = vmatprep.mubr.bf16.mxu0 0
      %1099 = vmatmul.mubr.bf16.gmra.mrb[0].mxu0 %v709
      %v1100 = vpop.f32.mrb[0].mxu0
      %v1101 = vadd.f32 %v325, %v1100
      %v1102 = vpop.f32.mrb[0].mxu0
      %v1103 = vadd.f32 %v329, %v1102
      %v1104 = vpop.f32.mrb[0].mxu0
      %v1105 = vadd.f32 %v325, %v1104
      %v1106 = vpop.f32.mrb[0].mxu0
      %v1107 = vadd.f32 %v329, %v1106
      %1108 = vmatprep.mubr.bf16.mxu0 0
      %1109 = vmatmul.mubr.bf16.gmra.mrb[0].mxu0 %v712
      %v1110 = vpop.f32.mrb[0].mxu0
      %v1111 = vadd.f32 %v325, %v1110
      %v1112 = vpop.f32.mrb[0].mxu0
      %v1113 = vadd.f32 %v329, %v1112
      %v1114 = vpop.f32.mrb[0].mxu0
      %v1115 = vadd.f32 %v325, %v1114
      %v1116 = vpop.f32.mrb[0].mxu0
      %v1117 = vadd.f32 %v329, %v1116
      %1118 = vdwg.mxu0
      %1119 = vmatprep.subr.bf16.mxu0 0
      %1120 = vmatpush1.bf16.msra.mxu0 %v574
      %1121 = vmatprep.subr.bf16.mxu0 0
      %1122 = vmatpush1.bf16.msra.mxu0 %v577
      %1123 = vmatprep.subr.bf16.mxu0 0
      %1124 = vmatpush1.bf16.msra.mxu0 %v580
      %1125 = vmatprep.subr.bf16.mxu0 0
      %1126 = vmatpush1.bf16.msra.mxu0 %v583
      %1127 = vmatprep.subr.bf16.mxu0 0
      %1128 = vmatpush1.bf16.msra.mxu0 %v586
      %1129 = vmatprep.subr.bf16.mxu0 0
      %1130 = vmatpush1.bf16.msra.mxu0 %v724
      %1131 = vmatprep.subr.bf16.mxu0 0
      %1132 = vmatpush1.bf16.msra.mxu0 0
      %1133 = vmatprep.subr.bf16.mxu0 0
      %1134 = vmatpush1.bf16.msra.mxu0 0
      %1135 = vmatprep.subr.bf16.mxu0 0
      %1136 = vmatpush1.bf16.msra.mxu0 0
      %1137 = vmatprep.subr.bf16.mxu0 0
      %1138 = vmatpush1.bf16.msra.mxu0 0
      %1139 = vmatprep.subr.bf16.mxu0 0
      %1140 = vmatpush1.bf16.msra.mxu0 0
      %1141 = vmatprep.subr.bf16.mxu0 0
      %1142 = vmatpush1.bf16.msra.mxu0 0
      %1143 = vmatprep.subr.bf16.mxu0 0
      %1144 = vmatpush1.bf16.msra.mxu0 0
      %1145 = vmatprep.subr.bf16.mxu0 0
      %1146 = vmatpush1.bf16.msra.mxu0 0
      %1147 = vmatprep.subr.bf16.mxu0 0
      %1148 = vmatpush1.bf16.msra.mxu0 0
      %1149 = vmatprep.subr.bf16.mxu0 0
      %1150 = vmatpush1.bf16.msra.mxu0 0
      %1151 = vmatprep.mubr.bf16.mxu0 0
      %1152 = vmatmul.mubr.bf16.gmra.mrb[0].mxu0 %v607
      %v1153 = vpop.f32.mrb[0].mxu0
      %v1154 = vadd.f32 %v333, %v1153
      %v1155 = vpop.f32.mrb[0].mxu0
      %v1156 = vpop.f32.mrb[0].mxu0
      %v1157 = vadd.f32 %v333, %v1156
      %v1158 = vpop.f32.mrb[0].mxu0
      %1159 = vmatprep.mubr.bf16.mxu0 0
      %1160 = vmatmul.mubr.bf16.gmra.mrb[0].mxu0 %v610
      %v1161 = vpop.f32.mrb[0].mxu0
      %v1162 = vadd.f32 %v333, %v1161
      %v1163 = vpop.f32.mrb[0].mxu0
      %v1164 = vpop.f32.mrb[0].mxu0
      %v1165 = vadd.f32 %v333, %v1164
      %v1166 = vpop.f32.mrb[0].mxu0
      %1167 = vmatprep.mubr.bf16.mxu0 0
      %1168 = vmatmul.mubr.bf16.gmra.mrb[0].mxu0 %v613
      %v1169 = vpop.f32.mrb[0].mxu0
      %v1170 = vadd.f32 %v333, %v1169
      %v1171 = vpop.f32.mrb[0].mxu0
      %v1172 = vpop.f32.mrb[0].mxu0
      %v1173 = vadd.f32 %v333, %v1172
      %v1174 = vpop.f32.mrb[0].mxu0
      %1175 = vmatprep.mubr.bf16.mxu0 0
      %1176 = vmatmul.mubr.bf16.gmra.mrb[0].mxu0 %v616
      %v1177 = vpop.f32.mrb[0].mxu0
      %v1178 = vadd.f32 %v333, %v1177
      %v1179 = vpop.f32.mrb[0].mxu0
      %v1180 = vpop.f32.mrb[0].mxu0
      %v1181 = vadd.f32 %v333, %v1180
      %v1182 = vpop.f32.mrb[0].mxu0
      %1183 = vmatprep.mubr.bf16.mxu0 0
      %1184 = vmatmul.mubr.bf16.gmra.mrb[0].mxu0 %v619
      %v1185 = vpop.f32.mrb[0].mxu0
      %v1186 = vadd.f32 %v333, %v1185
      %v1187 = vpop.f32.mrb[0].mxu0
      %v1188 = vpop.f32.mrb[0].mxu0
      %v1189 = vadd.f32 %v333, %v1188
      %v1190 = vpop.f32.mrb[0].mxu0
      %1191 = vmatprep.mubr.bf16.mxu0 0
      %1192 = vmatmul.mubr.bf16.gmra.mrb[0].mxu0 %v622
      %v1193 = vpop.f32.mrb[0].mxu0
      %v1194 = vadd.f32 %v333, %v1193
      %v1195 = vpop.f32.mrb[0].mxu0
      %v1196 = vpop.f32.mrb[0].mxu0
      %v1197 = vadd.f32 %v333, %v1196
      %v1198 = vpop.f32.mrb[0].mxu0
      %1199 = vmatprep.mubr.bf16.mxu0 0
      %1200 = vmatmul.mubr.bf16.gmra.mrb[0].mxu0 %v625
      %v1201 = vpop.f32.mrb[0].mxu0
      %v1202 = vadd.f32 %v333, %v1201
      %v1203 = vpop.f32.mrb[0].mxu0
      %v1204 = vpop.f32.mrb[0].mxu0
      %v1205 = vadd.f32 %v333, %v1204
      %v1206 = vpop.f32.mrb[0].mxu0
      %1207 = vmatprep.mubr.bf16.mxu0 0
      %1208 = vmatmul.mubr.bf16.gmra.mrb[0].mxu0 %v628
      %v1209 = vpop.f32.mrb[0].mxu0
      %v1210 = vadd.f32 %v333, %v1209
      %v1211 = vpop.f32.mrb[0].mxu0
      %v1212 = vpop.f32.mrb[0].mxu0
      %v1213 = vadd.f32 %v333, %v1212
      %v1214 = vpop.f32.mrb[0].mxu0
      %1215 = vmatprep.mubr.bf16.mxu0 0
      %1216 = vmatmul.mubr.bf16.gmra.mrb[0].mxu0 %v631
      %v1217 = vpop.f32.mrb[0].mxu0
      %v1218 = vadd.f32 %v333, %v1217
      %v1219 = vpop.f32.mrb[0].mxu0
      %v1220 = vpop.f32.mrb[0].mxu0
      %v1221 = vadd.f32 %v333, %v1220
      %v1222 = vpop.f32.mrb[0].mxu0
      %1223 = vmatprep.mubr.bf16.mxu0 0
      %1224 = vmatmul.mubr.bf16.gmra.mrb[0].mxu0 %v634
      %v1225 = vpop.f32.mrb[0].mxu0
      %v1226 = vadd.f32 %v333, %v1225
      %v1227 = vpop.f32.mrb[0].mxu0
      %v1228 = vpop.f32.mrb[0].mxu0
      %v1229 = vadd.f32 %v333, %v1228
      %v1230 = vpop.f32.mrb[0].mxu0
      %1231 = vmatprep.mubr.bf16.mxu0 0
      %1232 = vmatmul.mubr.bf16.gmra.mrb[0].mxu0 %v637
      %v1233 = vpop.f32.mrb[0].mxu0
      %v1234 = vadd.f32 %v333, %v1233
      %v1235 = vpop.f32.mrb[0].mxu0
      %v1236 = vpop.f32.mrb[0].mxu0
      %v1237 = vadd.f32 %v333, %v1236
      %v1238 = vpop.f32.mrb[0].mxu0
      %1239 = vmatprep.mubr.bf16.mxu0 0
      %1240 = vmatmul.mubr.bf16.gmra.mrb[0].mxu0 %v640
      %v1241 = vpop.f32.mrb[0].mxu0
      %v1242 = vadd.f32 %v333, %v1241
      %v1243 = vpop.f32.mrb[0].mxu0
      %v1244 = vpop.f32.mrb[0].mxu0
      %v1245 = vadd.f32 %v333, %v1244
      %v1246 = vpop.f32.mrb[0].mxu0
      %1247 = vmatprep.mubr.bf16.mxu0 0
      %1248 = vmatmul.mubr.bf16.gmra.mrb[0].mxu0 %v643
      %v1249 = vpop.f32.mrb[0].mxu0
      %v1250 = vadd.f32 %v333, %v1249
      %v1251 = vpop.f32.mrb[0].mxu0
      %v1252 = vpop.f32.mrb[0].mxu0
      %v1253 = vadd.f32 %v333, %v1252
      %v1254 = vpop.f32.mrb[0].mxu0
      %1255 = vmatprep.mubr.bf16.mxu0 0
      %1256 = vmatmul.mubr.bf16.gmra.mrb[0].mxu0 %v646
      %v1257 = vpop.f32.mrb[0].mxu0
      %v1258 = vadd.f32 %v333, %v1257
      %v1259 = vpop.f32.mrb[0].mxu0
      %v1260 = vpop.f32.mrb[0].mxu0
      %v1261 = vadd.f32 %v333, %v1260
      %v1262 = vpop.f32.mrb[0].mxu0
      %1263 = vmatprep.mubr.bf16.mxu0 0
      %1264 = vmatmul.mubr.bf16.gmra.mrb[0].mxu0 %v649
      %v1265 = vpop.f32.mrb[0].mxu0
      %v1266 = vadd.f32 %v333, %v1265
      %v1267 = vpop.f32.mrb[0].mxu0
      %v1268 = vpop.f32.mrb[0].mxu0
      %v1269 = vadd.f32 %v333, %v1268
      %v1270 = vpop.f32.mrb[0].mxu0
      %1271 = vmatprep.mubr.bf16.mxu0 0
      %1272 = vmatmul.mubr.bf16.gmra.mrb[0].mxu0 %v652
      %v1273 = vpop.f32.mrb[0].mxu0
      %v1274 = vadd.f32 %v333, %v1273
      %v1275 = vpop.f32.mrb[0].mxu0
      %v1276 = vpop.f32.mrb[0].mxu0
      %v1277 = vadd.f32 %v333, %v1276
      %v1278 = vpop.f32.mrb[0].mxu0
      %1279 = vmatprep.mubr.bf16.mxu0 0
      %1280 = vmatmul.mubr.bf16.gmra.mrb[0].mxu0 %v655
      %v1281 = vpop.f32.mrb[0].mxu0
      %v1282 = vadd.f32 %v333, %v1281
      %v1283 = vpop.f32.mrb[0].mxu0
      %v1284 = vpop.f32.mrb[0].mxu0
      %v1285 = vadd.f32 %v333, %v1284
      %v1286 = vpop.f32.mrb[0].mxu0
      %1287 = vmatprep.mubr.bf16.mxu0 0
      %1288 = vmatmul.mubr.bf16.gmra.mrb[0].mxu0 %v658
      %v1289 = vpop.f32.mrb[0].mxu0
      %v1290 = vadd.f32 %v333, %v1289
      %v1291 = vpop.f32.mrb[0].mxu0
      %v1292 = vpop.f32.mrb[0].mxu0
      %v1293 = vadd.f32 %v333, %v1292
      %v1294 = vpop.f32.mrb[0].mxu0
      %1295 = vmatprep.mubr.bf16.mxu0 0
      %1296 = vmatmul.mubr.bf16.gmra.mrb[0].mxu0 %v661
      %v1297 = vpop.f32.mrb[0].mxu0
      %v1298 = vadd.f32 %v333, %v1297
      %v1299 = vpop.f32.mrb[0].mxu0
      %v1300 = vpop.f32.mrb[0].mxu0
      %v1301 = vadd.f32 %v333, %v1300
      %v1302 = vpop.f32.mrb[0].mxu0
      %1303 = vmatprep.mubr.bf16.mxu0 0
      %1304 = vmatmul.mubr.bf16.gmra.mrb[0].mxu0 %v664
      %v1305 = vpop.f32.mrb[0].mxu0
      %v1306 = vadd.f32 %v333, %v1305
      %v1307 = vpop.f32.mrb[0].mxu0
      %v1308 = vpop.f32.mrb[0].mxu0
      %v1309 = vadd.f32 %v333, %v1308
      %v1310 = vpop.f32.mrb[0].mxu0
      %1311 = vmatprep.mubr.bf16.mxu0 0
      %1312 = vmatmul.mubr.bf16.gmra.mrb[0].mxu0 %v667
      %v1313 = vpop.f32.mrb[0].mxu0
      %v1314 = vadd.f32 %v333, %v1313
      %v1315 = vpop.f32.mrb[0].mxu0
      %v1316 = vpop.f32.mrb[0].mxu0
      %v1317 = vadd.f32 %v333, %v1316
      %v1318 = vpop.f32.mrb[0].mxu0
      %1319 = vmatprep.mubr.bf16.mxu0 0
      %1320 = vmatmul.mubr.bf16.gmra.mrb[0].mxu0 %v670
      %v1321 = vpop.f32.mrb[0].mxu0
      %v1322 = vadd.f32 %v333, %v1321
      %v1323 = vpop.f32.mrb[0].mxu0
      %v1324 = vpop.f32.mrb[0].mxu0
      %v1325 = vadd.f32 %v333, %v1324
      %v1326 = vpop.f32.mrb[0].mxu0
      %1327 = vmatprep.mubr.bf16.mxu0 0
      %1328 = vmatmul.mubr.bf16.gmra.mrb[0].mxu0 %v673
      %v1329 = vpop.f32.mrb[0].mxu0
      %v1330 = vadd.f32 %v333, %v1329
      %v1331 = vpop.f32.mrb[0].mxu0
      %v1332 = vpop.f32.mrb[0].mxu0
      %v1333 = vadd.f32 %v333, %v1332
      %v1334 = vpop.f32.mrb[0].mxu0
      %1335 = vmatprep.mubr.bf16.mxu0 0
      %1336 = vmatmul.mubr.bf16.gmra.mrb[0].mxu0 %v676
      %v1337 = vpop.f32.mrb[0].mxu0
      %v1338 = vadd.f32 %v333, %v1337
      %v1339 = vpop.f32.mrb[0].mxu0
      %v1340 = vpop.f32.mrb[0].mxu0
      %v1341 = vadd.f32 %v333, %v1340
      %v1342 = vpop.f32.mrb[0].mxu0
      %1343 = vmatprep.mubr.bf16.mxu0 0
      %1344 = vmatmul.mubr.bf16.gmra.mrb[0].mxu0 %v679
      %v1345 = vpop.f32.mrb[0].mxu0
      %v1346 = vadd.f32 %v333, %v1345
      %v1347 = vpop.f32.mrb[0].mxu0
      %v1348 = vpop.f32.mrb[0].mxu0
      %v1349 = vadd.f32 %v333, %v1348
      %v1350 = vpop.f32.mrb[0].mxu0
      %1351 = vmatprep.mubr.bf16.mxu0 0
      %1352 = vmatmul.mubr.bf16.gmra.mrb[0].mxu0 %v682
      %v1353 = vpop.f32.mrb[0].mxu0
      %v1354 = vadd.f32 %v333, %v1353
      %v1355 = vpop.f32.mrb[0].mxu0
      %v1356 = vpop.f32.mrb[0].mxu0
      %v1357 = vadd.f32 %v333, %v1356
      %v1358 = vpop.f32.mrb[0].mxu0
      %1359 = vmatprep.mubr.bf16.mxu0 0
      %1360 = vmatmul.mubr.bf16.gmra.mrb[0].mxu0 %v685
      %v1361 = vpop.f32.mrb[0].mxu0
      %v1362 = vadd.f32 %v333, %v1361
      %v1363 = vpop.f32.mrb[0].mxu0
      %v1364 = vpop.f32.mrb[0].mxu0
      %v1365 = vadd.f32 %v333, %v1364
      %v1366 = vpop.f32.mrb[0].mxu0
      %1367 = vmatprep.mubr.bf16.mxu0 0
      %1368 = vmatmul.mubr.bf16.gmra.mrb[0].mxu0 %v688
      %v1369 = vpop.f32.mrb[0].mxu0
      %v1370 = vadd.f32 %v333, %v1369
      %v1371 = vpop.f32.mrb[0].mxu0
      %v1372 = vpop.f32.mrb[0].mxu0
      %v1373 = vadd.f32 %v333, %v1372
      %v1374 = vpop.f32.mrb[0].mxu0
      %1375 = vmatprep.mubr.bf16.mxu0 0
      %1376 = vmatmul.mubr.bf16.gmra.mrb[0].mxu0 %v691
      %v1377 = vpop.f32.mrb[0].mxu0
      %v1378 = vadd.f32 %v333, %v1377
      %v1379 = vpop.f32.mrb[0].mxu0
      %v1380 = vpop.f32.mrb[0].mxu0
      %v1381 = vadd.f32 %v333, %v1380
      %v1382 = vpop.f32.mrb[0].mxu0
      %1383 = vmatprep.mubr.bf16.mxu0 0
      %1384 = vmatmul.mubr.bf16.gmra.mrb[0].mxu0 %v694
      %v1385 = vpop.f32.mrb[0].mxu0
      %v1386 = vadd.f32 %v333, %v1385
      %v1387 = vpop.f32.mrb[0].mxu0
      %v1388 = vpop.f32.mrb[0].mxu0
      %v1389 = vadd.f32 %v333, %v1388
      %v1390 = vpop.f32.mrb[0].mxu0
      %1391 = vmatprep.mubr.bf16.mxu0 0
      %1392 = vmatmul.mubr.bf16.gmra.mrb[0].mxu0 %v697
      %v1393 = vpop.f32.mrb[0].mxu0
      %v1394 = vadd.f32 %v333, %v1393
      %v1395 = vpop.f32.mrb[0].mxu0
      %v1396 = vpop.f32.mrb[0].mxu0
      %v1397 = vadd.f32 %v333, %v1396
      %v1398 = vpop.f32.mrb[0].mxu0
      %1399 = vmatprep.mubr.bf16.mxu0 0
      %1400 = vmatmul.mubr.bf16.gmra.mrb[0].mxu0 %v700
      %v1401 = vpop.f32.mrb[0].mxu0
      %v1402 = vadd.f32 %v333, %v1401
      %v1403 = vpop.f32.mrb[0].mxu0
      %v1404 = vpop.f32.mrb[0].mxu0
      %v1405 = vadd.f32 %v333, %v1404
      %v1406 = vpop.f32.mrb[0].mxu0
      %1407 = vmatprep.mubr.bf16.mxu0 0
      %1408 = vmatmul.mubr.bf16.gmra.mrb[0].mxu0 %v703
      %v1409 = vpop.f32.mrb[0].mxu0
      %v1410 = vadd.f32 %v333, %v1409
      %v1411 = vpop.f32.mrb[0].mxu0
      %v1412 = vpop.f32.mrb[0].mxu0
      %v1413 = vadd.f32 %v333, %v1412
      %v1414 = vpop.f32.mrb[0].mxu0
      %1415 = vmatprep.mubr.bf16.mxu0 0
      %1416 = vmatmul.mubr.bf16.gmra.mrb[0].mxu0 %v706
      %v1417 = vpop.f32.mrb[0].mxu0
      %v1418 = vadd.f32 %v333, %v1417
      %v1419 = vpop.f32.mrb[0].mxu0
      %v1420 = vpop.f32.mrb[0].mxu0
      %v1421 = vadd.f32 %v333, %v1420
      %v1422 = vpop.f32.mrb[0].mxu0
      %1423 = vmatprep.mubr.bf16.mxu0 0
      %1424 = vmatmul.mubr.bf16.gmra.mrb[0].mxu0 %v709
      %v1425 = vpop.f32.mrb[0].mxu0
      %v1426 = vadd.f32 %v333, %v1425
      %v1427 = vpop.f32.mrb[0].mxu0
      %v1428 = vpop.f32.mrb[0].mxu0
      %v1429 = vadd.f32 %v333, %v1428
      %v1430 = vpop.f32.mrb[0].mxu0
      %1431 = vmatprep.mubr.bf16.mxu0 0
      %1432 = vmatmul.mubr.bf16.gmra.mrb[0].mxu0 %v712
      %v1433 = vpop.f32.mrb[0].mxu0
      %v1434 = vadd.f32 %v333, %v1433
      %v1435 = vpop.f32.mrb[0].mxu0
      %v1436 = vpop.f32.mrb[0].mxu0
      %v1437 = vadd.f32 %v333, %v1436
      %v1438 = vpop.f32.mrb[0].mxu0
      %1439 = vdwg.mxu0
      %v1440 = vmax.f32 %v761, 0.0
      %v1441 = vmax.f32 %v763, 0.0
      %v1442 = vmax.f32 %v1154, 0.0
      %v1443 = vmax.f32 %v765, 0.0
      %v1444 = vmax.f32 %v767, 0.0
      %v1445 = vmax.f32 %v1157, 0.0
      %v1446 = vmax.f32 %v771, 0.0
      %v1447 = vmax.f32 %v773, 0.0
      %v1448 = vmax.f32 %v1162, 0.0
      %v1449 = vmax.f32 %v775, 0.0
      %v1450 = vmax.f32 %v777, 0.0
      %v1451 = vmax.f32 %v1165, 0.0
      %v1452 = vmax.f32 %v781, 0.0
      %v1453 = vmax.f32 %v783, 0.0
      %v1454 = vmax.f32 %v1170, 0.0
      %v1455 = vmax.f32 %v785, 0.0
      %v1456 = vmax.f32 %v787, 0.0
      %v1457 = vmax.f32 %v1173, 0.0
      %v1458 = vmax.f32 %v791, 0.0
      %v1459 = vmax.f32 %v793, 0.0
      %v1460 = vmax.f32 %v1178, 0.0
      %v1461 = vmax.f32 %v795, 0.0
      %v1462 = vmax.f32 %v797, 0.0
      %v1463 = vmax.f32 %v1181, 0.0
      %v1464 = vmax.f32 %v801, 0.0
      %v1465 = vmax.f32 %v803, 0.0
      %v1466 = vmax.f32 %v1186, 0.0
      %v1467 = vmax.f32 %v805, 0.0
      %v1468 = vmax.f32 %v807, 0.0
      %v1469 = vmax.f32 %v1189, 0.0
      %v1470 = vmax.f32 %v811, 0.0
      %v1471 = vmax.f32 %v813, 0.0
      %v1472 = vmax.f32 %v1194, 0.0
      %v1473 = vmax.f32 %v815, 0.0
      %v1474 = vmax.f32 %v817, 0.0
      %v1475 = vmax.f32 %v1197, 0.0
      %v1476 = vmax.f32 %v821, 0.0
      %v1477 = vmax.f32 %v823, 0.0
      %v1478 = vmax.f32 %v1202, 0.0
      %v1479 = vmax.f32 %v825, 0.0
      %v1480 = vmax.f32 %v827, 0.0
      %v1481 = vmax.f32 %v1205, 0.0
      %v1482 = vmax.f32 %v831, 0.0
      %v1483 = vmax.f32 %v833, 0.0
      %v1484 = vmax.f32 %v1210, 0.0
      %v1485 = vmax.f32 %v835, 0.0
      %v1486 = vmax.f32 %v837, 0.0
      %v1487 = vmax.f32 %v1213, 0.0
      %v1488 = vmax.f32 %v841, 0.0
      %v1489 = vmax.f32 %v843, 0.0
      %v1490 = vmax.f32 %v1218, 0.0
      %v1491 = vmax.f32 %v845, 0.0
      %v1492 = vmax.f32 %v847, 0.0
      %v1493 = vmax.f32 %v1221, 0.0
      %v1494 = vmax.f32 %v851, 0.0
      %v1495 = vmax.f32 %v853, 0.0
      %v1496 = vmax.f32 %v1226, 0.0
      %v1497 = vmax.f32 %v855, 0.0
      %v1498 = vmax.f32 %v857, 0.0
      %v1499 = vmax.f32 %v1229, 0.0
      %v1500 = vmax.f32 %v861, 0.0
      %v1501 = vmax.f32 %v863, 0.0
      %v1502 = vmax.f32 %v1234, 0.0
      %v1503 = vmax.f32 %v865, 0.0
      %v1504 = vmax.f32 %v867, 0.0
      %v1505 = vmax.f32 %v1237, 0.0
      %v1506 = vmax.f32 %v871, 0.0
      %v1507 = vmax.f32 %v873, 0.0
      %v1508 = vmax.f32 %v1242, 0.0
      %v1509 = vmax.f32 %v875, 0.0
      %v1510 = vmax.f32 %v877, 0.0
      %v1511 = vmax.f32 %v1245, 0.0
      %v1512 = vmax.f32 %v881, 0.0
      %v1513 = vmax.f32 %v883, 0.0
      %v1514 = vmax.f32 %v1250, 0.0
      %v1515 = vmax.f32 %v885, 0.0
      %v1516 = vmax.f32 %v887, 0.0
      %v1517 = vmax.f32 %v1253, 0.0
      %v1518 = vmax.f32 %v891, 0.0
      %v1519 = vmax.f32 %v893, 0.0
      %v1520 = vmax.f32 %v1258, 0.0
      %v1521 = vmax.f32 %v895, 0.0
      %v1522 = vmax.f32 %v897, 0.0
      %v1523 = vmax.f32 %v1261, 0.0
      %v1524 = vmax.f32 %v901, 0.0
      %v1525 = vmax.f32 %v903, 0.0
      %v1526 = vmax.f32 %v1266, 0.0
      %v1527 = vmax.f32 %v905, 0.0
      %v1528 = vmax.f32 %v907, 0.0
      %v1529 = vmax.f32 %v1269, 0.0
      %v1530 = vmax.f32 %v911, 0.0
      %v1531 = vmax.f32 %v913, 0.0
      %v1532 = vmax.f32 %v1274, 0.0
      %v1533 = vmax.f32 %v915, 0.0
      %v1534 = vmax.f32 %v917, 0.0
      %v1535 = vmax.f32 %v1277, 0.0
      %v1536 = vmax.f32 %v921, 0.0
      %v1537 = vmax.f32 %v923, 0.0
      %v1538 = vmax.f32 %v1282, 0.0
      %v1539 = vmax.f32 %v925, 0.0
      %v1540 = vmax.f32 %v927, 0.0
      %v1541 = vmax.f32 %v1285, 0.0
      %v1542 = vmax.f32 %v931, 0.0
      %v1543 = vmax.f32 %v933, 0.0
      %v1544 = vmax.f32 %v1290, 0.0
      %v1545 = vmax.f32 %v935, 0.0
      %v1546 = vmax.f32 %v937, 0.0
      %v1547 = vmax.f32 %v1293, 0.0
      %v1548 = vmax.f32 %v941, 0.0
      %v1549 = vmax.f32 %v943, 0.0
      %v1550 = vmax.f32 %v1298, 0.0
      %v1551 = vmax.f32 %v945, 0.0
      %v1552 = vmax.f32 %v947, 0.0
      %v1553 = vmax.f32 %v1301, 0.0
      %v1554 = vmax.f32 %v951, 0.0
      %v1555 = vmax.f32 %v953, 0.0
      %v1556 = vmax.f32 %v1306, 0.0
      %v1557 = vmax.f32 %v955, 0.0
      %v1558 = vmax.f32 %v957, 0.0
      %v1559 = vmax.f32 %v1309, 0.0
      %v1560 = vmax.f32 %v961, 0.0
      %v1561 = vmax.f32 %v963, 0.0
      %v1562 = vmax.f32 %v1314, 0.0
      %v1563 = vmax.f32 %v965, 0.0
      %v1564 = vmax.f32 %v967, 0.0
      %v1565 = vmax.f32 %v1317, 0.0
      %v1566 = vmax.f32 %v971, 0.0
      %v1567 = vmax.f32 %v973, 0.0
      %v1568 = vmax.f32 %v1322, 0.0
      %v1569 = vmax.f32 %v975, 0.0
      %v1570 = vmax.f32 %v977, 0.0
      %v1571 = vmax.f32 %v1325, 0.0
      %v1572 = vmax.f32 %v981, 0.0
      %v1573 = vmax.f32 %v983, 0.0
      %v1574 = vmax.f32 %v1330, 0.0
      %v1575 = vmax.f32 %v985, 0.0
      %v1576 = vmax.f32 %v987, 0.0
      %v1577 = vmax.f32 %v1333, 0.0
      %v1578 = vmax.f32 %v991, 0.0
      %v1579 = vmax.f32 %v993, 0.0
      %v1580 = vmax.f32 %v1338, 0.0
      %v1581 = vmax.f32 %v995, 0.0
      %v1582 = vmax.f32 %v997, 0.0
      %v1583 = vmax.f32 %v1341, 0.0
      %v1584 = vmax.f32 %v1001, 0.0
      %v1585 = vmax.f32 %v1003, 0.0
      %v1586 = vmax.f32 %v1346, 0.0
      %v1587 = vmax.f32 %v1005, 0.0
      %v1588 = vmax.f32 %v1007, 0.0
      %v1589 = vmax.f32 %v1349, 0.0
      %v1590 = vmax.f32 %v1011, 0.0
      %v1591 = vmax.f32 %v1013, 0.0
      %v1592 = vmax.f32 %v1354, 0.0
      %v1593 = vmax.f32 %v1015, 0.0
      %v1594 = vmax.f32 %v1017, 0.0
      %v1595 = vmax.f32 %v1357, 0.0
      %v1596 = vmax.f32 %v1021, 0.0
      %v1597 = vmax.f32 %v1023, 0.0
      %v1598 = vmax.f32 %v1362, 0.0
      %v1599 = vmax.f32 %v1025, 0.0
      %v1600 = vmax.f32 %v1027, 0.0
      %v1601 = vmax.f32 %v1365, 0.0
      %v1602 = vmax.f32 %v1031, 0.0
      %v1603 = vmax.f32 %v1033, 0.0
      %v1604 = vmax.f32 %v1370, 0.0
      %v1605 = vmax.f32 %v1035, 0.0
      %v1606 = vmax.f32 %v1037, 0.0
      %v1607 = vmax.f32 %v1373, 0.0
      %v1608 = vmax.f32 %v1041, 0.0
      %v1609 = vmax.f32 %v1043, 0.0
      %v1610 = vmax.f32 %v1378, 0.0
      %v1611 = vmax.f32 %v1045, 0.0
      %v1612 = vmax.f32 %v1047, 0.0
      %v1613 = vmax.f32 %v1381, 0.0
      %v1614 = vmax.f32 %v1051, 0.0
      %v1615 = vmax.f32 %v1053, 0.0
      %v1616 = vmax.f32 %v1386, 0.0
      %v1617 = vmax.f32 %v1055, 0.0
      %v1618 = vmax.f32 %v1057, 0.0
      %v1619 = vmax.f32 %v1389, 0.0
      %v1620 = vmax.f32 %v1061, 0.0
      %v1621 = vmax.f32 %v1063, 0.0
      %v1622 = vmax.f32 %v1394, 0.0
      %v1623 = vmax.f32 %v1065, 0.0
      %v1624 = vmax.f32 %v1067, 0.0
      %v1625 = vmax.f32 %v1397, 0.0
      %v1626 = vmax.f32 %v1071, 0.0
      %v1627 = vmax.f32 %v1073, 0.0
      %v1628 = vmax.f32 %v1402, 0.0
      %v1629 = vmax.f32 %v1075, 0.0
      %v1630 = vmax.f32 %v1077, 0.0
      %v1631 = vmax.f32 %v1405, 0.0
      %v1632 = vmax.f32 %v1081, 0.0
      %v1633 = vmax.f32 %v1083, 0.0
      %v1634 = vmax.f32 %v1410, 0.0
      %v1635 = vmax.f32 %v1085, 0.0
      %v1636 = vmax.f32 %v1087, 0.0
      %v1637 = vmax.f32 %v1413, 0.0
      %v1638 = vmax.f32 %v1091, 0.0
      %v1639 = vmax.f32 %v1093, 0.0
      %v1640 = vmax.f32 %v1418, 0.0
      %v1641 = vmax.f32 %v1095, 0.0
      %v1642 = vmax.f32 %v1097, 0.0
      %v1643 = vmax.f32 %v1421, 0.0
      %v1644 = vmax.f32 %v1101, 0.0
      %v1645 = vmax.f32 %v1103, 0.0
      %v1646 = vmax.f32 %v1426, 0.0
      %v1647 = vmax.f32 %v1105, 0.0
      %v1648 = vmax.f32 %v1107, 0.0
      %v1649 = vmax.f32 %v1429, 0.0
      %v1650 = vmax.f32 %v1111, 0.0
      %v1651 = vmax.f32 %v1113, 0.0
      %v1652 = vmax.f32 %v1434, 0.0
      %v1653 = vmax.f32 %v1115, 0.0
      %v1654 = vmax.f32 %v1117, 0.0
      %v1655 = vmax.f32 %v1437, 0.0
      %v1656 = vpack.c.bf16 %v1443, %v1440
      %v1657 = vpack.c.bf16 %v1444, %v1441
      %v1658 = vpack.c.bf16 %v1445, %v1442
      %v1659 = vpack.c.bf16 %v1449, %v1446
      %v1660 = vpack.c.bf16 %v1450, %v1447
      %v1661 = vpack.c.bf16 %v1451, %v1448
      %v1662 = vpack.c.bf16 %v1455, %v1452
      %v1663 = vpack.c.bf16 %v1456, %v1453
      %v1664 = vpack.c.bf16 %v1457, %v1454
      %v1665 = vpack.c.bf16 %v1461, %v1458
      %v1666 = vpack.c.bf16 %v1462, %v1459
      %v1667 = vpack.c.bf16 %v1463, %v1460
      %v1668 = vpack.c.bf16 %v1467, %v1464
      %v1669 = vpack.c.bf16 %v1468, %v1465
      %v1670 = vpack.c.bf16 %v1469, %v1466
      %v1671 = vpack.c.bf16 %v1473, %v1470
      %v1672 = vpack.c.bf16 %v1474, %v1471
      %v1673 = vpack.c.bf16 %v1475, %v1472
      %v1674 = vpack.c.bf16 %v1479, %v1476
      %v1675 = vpack.c.bf16 %v1480, %v1477
      %v1676 = vpack.c.bf16 %v1481, %v1478
      %v1677 = vpack.c.bf16 %v1485, %v1482
      %v1678 = vpack.c.bf16 %v1486, %v1483
      %v1679 = vpack.c.bf16 %v1487, %v1484
      %v1680 = vpack.c.bf16 %v1491, %v1488
      %v1681 = vpack.c.bf16 %v1492, %v1489
      %v1682 = vpack.c.bf16 %v1493, %v1490
      %v1683 = vpack.c.bf16 %v1497, %v1494
      %v1684 = vpack.c.bf16 %v1498, %v1495
      %v1685 = vpack.c.bf16 %v1499, %v1496
      %v1686 = vpack.c.bf16 %v1503, %v1500
      %v1687 = vpack.c.bf16 %v1504, %v1501
      %v1688 = vpack.c.bf16 %v1505, %v1502
      %v1689 = vpack.c.bf16 %v1509, %v1506
      %v1690 = vpack.c.bf16 %v1510, %v1507
      %v1691 = vpack.c.bf16 %v1511, %v1508
      %v1692 = vpack.c.bf16 %v1515, %v1512
      %v1693 = vpack.c.bf16 %v1516, %v1513
      %v1694 = vpack.c.bf16 %v1517, %v1514
      %v1695 = vpack.c.bf16 %v1521, %v1518
      %v1696 = vpack.c.bf16 %v1522, %v1519
      %v1697 = vpack.c.bf16 %v1523, %v1520
      %v1698 = vpack.c.bf16 %v1527, %v1524
      %v1699 = vpack.c.bf16 %v1528, %v1525
      %v1700 = vpack.c.bf16 %v1529, %v1526
      %v1701 = vpack.c.bf16 %v1533, %v1530
      %v1702 = vpack.c.bf16 %v1534, %v1531
      %v1703 = vpack.c.bf16 %v1535, %v1532
      %v1704 = vpack.c.bf16 %v1539, %v1536
      %v1705 = vpack.c.bf16 %v1540, %v1537
      %v1706 = vpack.c.bf16 %v1541, %v1538
      %v1707 = vpack.c.bf16 %v1545, %v1542
      %v1708 = vpack.c.bf16 %v1546, %v1543
      %v1709 = vpack.c.bf16 %v1547, %v1544
      %v1710 = vpack.c.bf16 %v1551, %v1548
      %v1711 = vpack.c.bf16 %v1552, %v1549
      %v1712 = vpack.c.bf16 %v1553, %v1550
      %v1713 = vpack.c.bf16 %v1557, %v1554
      %v1714 = vpack.c.bf16 %v1558, %v1555
      %v1715 = vpack.c.bf16 %v1559, %v1556
      %v1716 = vpack.c.bf16 %v1563, %v1560
      %v1717 = vpack.c.bf16 %v1564, %v1561
      %v1718 = vpack.c.bf16 %v1565, %v1562
      %v1719 = vpack.c.bf16 %v1569, %v1566
      %v1720 = vpack.c.bf16 %v1570, %v1567
      %v1721 = vpack.c.bf16 %v1571, %v1568
      %v1722 = vpack.c.bf16 %v1575, %v1572
      %v1723 = vpack.c.bf16 %v1576, %v1573
      %v1724 = vpack.c.bf16 %v1577, %v1574
      %v1725 = vpack.c.bf16 %v1581, %v1578
      %v1726 = vpack.c.bf16 %v1582, %v1579
      %v1727 = vpack.c.bf16 %v1583, %v1580
      %v1728 = vpack.c.bf16 %v1587, %v1584
      %v1729 = vpack.c.bf16 %v1588, %v1585
      %v1730 = vpack.c.bf16 %v1589, %v1586
      %v1731 = vpack.c.bf16 %v1593, %v1590
      %v1732 = vpack.c.bf16 %v1594, %v1591
      %v1733 = vpack.c.bf16 %v1595, %v1592
      %v1734 = vpack.c.bf16 %v1599, %v1596
      %v1735 = vpack.c.bf16 %v1600, %v1597
      %v1736 = vpack.c.bf16 %v1601, %v1598
      %v1737 = vpack.c.bf16 %v1605, %v1602
      %v1738 = vpack.c.bf16 %v1606, %v1603
      %v1739 = vpack.c.bf16 %v1607, %v1604
      %v1740 = vpack.c.bf16 %v1611, %v1608
      %v1741 = vpack.c.bf16 %v1612, %v1609
      %v1742 = vpack.c.bf16 %v1613, %v1610
      %v1743 = vpack.c.bf16 %v1617, %v1614
      %v1744 = vpack.c.bf16 %v1618, %v1615
      %v1745 = vpack.c.bf16 %v1619, %v1616
      %v1746 = vpack.c.bf16 %v1623, %v1620
      %v1747 = vpack.c.bf16 %v1624, %v1621
      %v1748 = vpack.c.bf16 %v1625, %v1622
      %v1749 = vpack.c.bf16 %v1629, %v1626
      %v1750 = vpack.c.bf16 %v1630, %v1627
      %v1751 = vpack.c.bf16 %v1631, %v1628
      %v1752 = vpack.c.bf16 %v1635, %v1632
      %v1753 = vpack.c.bf16 %v1636, %v1633
      %v1754 = vpack.c.bf16 %v1637, %v1634
      %v1755 = vpack.c.bf16 %v1641, %v1638
      %v1756 = vpack.c.bf16 %v1642, %v1639
      %v1757 = vpack.c.bf16 %v1643, %v1640
      %v1758 = vpack.c.bf16 %v1647, %v1644
      %v1759 = vpack.c.bf16 %v1648, %v1645
      %v1760 = vpack.c.bf16 %v1649, %v1646
      %v1761 = vpack.c.bf16 %v1653, %v1650
      %v1762 = vpack.c.bf16 %v1654, %v1651
      %v1763 = vpack.c.bf16 %v1655, %v1652
      %v1764 = vld [vmem:[%s3] sm:$0xf]
      %v1765 = vld [vmem:[%s3 + $0x4] sm:$0xf]
      %v1766 = vld [vmem:[%s3 + $0x8] sm:$0xf]
      %v1767 = vld [vmem:[%s3 + $0xc] sm:$0xf]
      %v1768 = vld [vmem:[%s3 + $0x10] sm:$0xf]
      %v1769 = vld [vmem:[%s3 + $0x14] sm:$0xf]
      %v1770 = vld [vmem:[%s3 + $0x18] sm:$0xf]
      %v1771 = vld [vmem:[%s3 + $0x1c] sm:$0xf]
      %v1772 = vld [vmem:[%s3 + $0x20] sm:$0xf]
      %v1773 = vld [vmem:[%s3 + $0x24] sm:$0xf]
      %v1774 = vld [vmem:[%s3 + $0x28] sm:$0xf]
      %v1775 = vld [vmem:[%s3 + $0x2c] sm:$0xf]
      %v1776 = vld [vmem:[%s3 + $0x30] sm:$0xf]
      %v1777 = vld [vmem:[%s3 + $0x34] sm:$0xf]
      %v1778 = vld [vmem:[%s3 + $0x38] sm:$0xf]
      %v1779 = vld [vmem:[%s3 + $0x3c] sm:$0xf]
      %v1780 = vld [vmem:[%s3 + $0x40] sm:$0xf]
      %v1781 = vld [vmem:[%s3 + $0x44] sm:$0xf]
      %v1782 = vld [vmem:[%s3 + $0x48] sm:$0xf]
      %v1783 = vld [vmem:[%s3 + $0x4c] sm:$0xf]
      %v1784 = vld [vmem:[%s3 + $0x50] sm:$0xf]
      %v1785 = vld [vmem:[%s3 + $0x54] sm:$0xf]
      %v1786 = vld [vmem:[%s3 + $0x58] sm:$0xf]
      %v1787 = vld [vmem:[%s3 + $0x5c] sm:$0xf]
      %v1788 = vld [vmem:[%s3 + $0x60] sm:$0xf]
      %v1789 = vld [vmem:[%s3 + $0x64] sm:$0xf]
      %v1790 = vld [vmem:[%s3 + $0x68] sm:$0xf]
      %v1791 = vld [vmem:[%s3 + $0x6c] sm:$0xf]
      %v1792 = vld [vmem:[%s3 + $0x70] sm:$0xf]
      %v1793 = vld [vmem:[%s3 + $0x74] sm:$0xf]
      %v1794 = vld [vmem:[%s3 + $0x78] sm:$0xf]
      %v1795 = vld [vmem:[%s3 + $0x7c] sm:$0xf]
      %v1796 = vld [vmem:[%s3 + $0x80] sm:$0xf]
      %v1797 = vld [vmem:[%s3 + $0x84] sm:$0xf]
      %v1798 = vld [vmem:[%s3 + $0x88] sm:$0xf]
      %v1799 = vld [vmem:[%s3 + $0x8c] sm:$0xf]
      %v1836 = vunpack.c.l.b16 %v1764
      %v1837 = vunpack.c.l.b16 %v1765
      %v1838 = vunpack.c.l.b16 %v1766
      %v1839 = vunpack.c.l.b16 %v1767
      %v1840 = vunpack.c.l.b16 %v1768
      %v1841 = vunpack.c.l.b16 %v1769
      %v1842 = vunpack.c.l.b16 %v1770
      %v1843 = vunpack.c.l.b16 %v1771
      %v1844 = vunpack.c.l.b16 %v1772
      %v1845 = vunpack.c.l.b16 %v1773
      %v1846 = vunpack.c.l.b16 %v1774
      %v1847 = vunpack.c.l.b16 %v1775
      %v1848 = vunpack.c.l.b16 %v1776
      %v1849 = vunpack.c.l.b16 %v1777
      %v1850 = vunpack.c.l.b16 %v1778
      %v1851 = vunpack.c.l.b16 %v1779
      %v1852 = vunpack.c.l.b16 %v1780
      %v1853 = vunpack.c.l.b16 %v1781
      %v1854 = vunpack.c.l.b16 %v1782
      %v1855 = vunpack.c.l.b16 %v1783
      %v1856 = vunpack.c.l.b16 %v1784
      %v1857 = vunpack.c.l.b16 %v1785
      %v1858 = vunpack.c.l.b16 %v1786
      %v1859 = vunpack.c.l.b16 %v1787
      %v1860 = vunpack.c.l.b16 %v1788
      %v1861 = vunpack.c.l.b16 %v1789
      %v1862 = vunpack.c.l.b16 %v1790
      %v1863 = vunpack.c.l.b16 %v1791
      %v1864 = vunpack.c.l.b16 %v1792
      %v1865 = vunpack.c.l.b16 %v1793
      %v1866 = vunpack.c.l.b16 %v1794
      %v1867 = vunpack.c.l.b16 %v1795
      %v1868 = vunpack.c.l.b16 %v1796
      %v1869 = vunpack.c.l.b16 %v1797
      %v1870 = vunpack.c.l.b16 %v1798
      %v1871 = vunpack.c.l.b16 %v1799
      %v1872 = vpack.c.b16 %v1837, %v1836
      %v1873 = vpack.c.b16 %v1839, %v1838
      %v1874 = vpack.c.b16 %v1841, %v1840
      %v1875 = vpack.c.b16 %v1843, %v1842
      %v1876 = vpack.c.b16 %v1845, %v1844
      %v1877 = vpack.c.b16 %v1847, %v1846
      %v1878 = vpack.c.b16 %v1849, %v1848
      %v1879 = vpack.c.b16 %v1851, %v1850
      %v1880 = vpack.c.b16 %v1853, %v1852
      %v1881 = vpack.c.b16 %v1855, %v1854
      %v1882 = vpack.c.b16 %v1857, %v1856
      %v1883 = vpack.c.b16 %v1859, %v1858
      %v1884 = vpack.c.b16 %v1861, %v1860
      %v1885 = vpack.c.b16 %v1863, %v1862
      %v1886 = vpack.c.b16 %v1865, %v1864
      %v1887 = vpack.c.b16 %v1867, %v1866
      %v1888 = vpack.c.b16 %v1869, %v1868
      %v1889 = vpack.c.b16 %v1871, %v1870
      %vm1908 = vcmask 261120
      %v1910 = vsel %vm1908, %v1658, 0
      %v1913 = vsel %vm1908, %v1661, 0
      %v1916 = vsel %vm1908, %v1664, 0
      %v1919 = vsel %vm1908, %v1667, 0
      %v1922 = vsel %vm1908, %v1670, 0
      %v1925 = vsel %vm1908, %v1673, 0
      %v1928 = vsel %vm1908, %v1676, 0
      %v1931 = vsel %vm1908, %v1679, 0
      %v1934 = vsel %vm1908, %v1682, 0
      %v1937 = vsel %vm1908, %v1685, 0
      %v1940 = vsel %vm1908, %v1688, 0
      %v1943 = vsel %vm1908, %v1691, 0
      %v1946 = vsel %vm1908, %v1694, 0
      %v1949 = vsel %vm1908, %v1697, 0
      %v1952 = vsel %vm1908, %v1700, 0
      %v1955 = vsel %vm1908, %v1703, 0
      %v1958 = vsel %vm1908, %v1706, 0
      %v1961 = vsel %vm1908, %v1709, 0
      %v1964 = vsel %vm1908, %v1712, 0
      %v1967 = vsel %vm1908, %v1715, 0
      %v1970 = vsel %vm1908, %v1718, 0
      %v1973 = vsel %vm1908, %v1721, 0
      %v1976 = vsel %vm1908, %v1724, 0
      %v1979 = vsel %vm1908, %v1727, 0
      %v1982 = vsel %vm1908, %v1730, 0
      %v1985 = vsel %vm1908, %v1733, 0
      %v1988 = vsel %vm1908, %v1736, 0
      %v1991 = vsel %vm1908, %v1739, 0
      %v1994 = vsel %vm1908, %v1742, 0
      %v1997 = vsel %vm1908, %v1745, 0
      %v2000 = vsel %vm1908, %v1748, 0
      %v2003 = vsel %vm1908, %v1751, 0
      %v2006 = vsel %vm1908, %v1754, 0
      %v2009 = vsel %vm1908, %v1757, 0
      %v2012 = vsel %vm1908, %v1760, 0
      %v2015 = vsel %vm1908, %v1763, 0
      %2017 = vmatprep.subr.bf16.mxu0 0
      %2018 = vmatpush1.bf16.msra.mxu0 %v1872
      %2019 = vmatprep.subr.bf16.mxu0 0
      %2020 = vmatpush1.bf16.msra.mxu0 %v1873
      %2021 = vmatprep.subr.bf16.mxu0 0
      %2022 = vmatpush1.bf16.msra.mxu0 %v1874
      %2023 = vmatprep.subr.bf16.mxu0 0
      %2024 = vmatpush1.bf16.msra.mxu0 %v1875
      %2025 = vmatprep.subr.bf16.mxu0 0
      %2026 = vmatpush1.bf16.msra.mxu0 %v1876
      %2027 = vmatprep.subr.bf16.mxu0 0
      %2028 = vmatpush1.bf16.msra.mxu0 %v1877
      %2029 = vmatprep.subr.bf16.mxu0 0
      %2030 = vmatpush1.bf16.msra.mxu0 %v1878
      %2031 = vmatprep.subr.bf16.mxu0 0
      %2032 = vmatpush1.bf16.msra.mxu0 %v1879
      %2033 = vmatprep.subr.bf16.mxu0 0
      %2034 = vmatpush1.bf16.msra.mxu0 %v1880
      %2035 = vmatprep.subr.bf16.mxu0 0
      %2036 = vmatpush1.bf16.msra.mxu0 %v1881
      %2037 = vmatprep.subr.bf16.mxu0 0
      %2038 = vmatpush1.bf16.msra.mxu0 %v1882
      %2039 = vmatprep.subr.bf16.mxu0 0
      %2040 = vmatpush1.bf16.msra.mxu0 %v1883
      %2041 = vmatprep.subr.bf16.mxu0 0
      %2042 = vmatpush1.bf16.msra.mxu0 %v1884
      %2043 = vmatprep.subr.bf16.mxu0 0
      %2044 = vmatpush1.bf16.msra.mxu0 %v1885
      %2045 = vmatprep.subr.bf16.mxu0 0
      %2046 = vmatpush1.bf16.msra.mxu0 %v1886
      %2047 = vmatprep.subr.bf16.mxu0 0
      %2048 = vmatpush1.bf16.msra.mxu0 %v1887
      %2049 = vmatprep.mubr.bf16.mxu0 %v1657
      %2050 = vmatmul.mubr.bf16.gmra.mrb[0].mxu0 %v1656
      %v2051 = vpop.f32.mrb[0].mxu0
      %v2052 = vadd.f32 0.0, %v2051
      %v2053 = vpop.f32.mrb[0].mxu0
      %v2054 = vpop.f32.mrb[0].mxu0
      %v2055 = vadd.f32 0.0, %v2054
      %v2056 = vpop.f32.mrb[0].mxu0
      %2057 = vmatprep.mubr.bf16.mxu0 %v1660
      %2058 = vmatmul.mubr.bf16.gmra.mrb[0].mxu0 %v1659
      %v2059 = vpop.f32.mrb[0].mxu0
      %v2060 = vadd.f32 0.0, %v2059
      %v2061 = vpop.f32.mrb[0].mxu0
      %v2062 = vpop.f32.mrb[0].mxu0
      %v2063 = vadd.f32 0.0, %v2062
      %v2064 = vpop.f32.mrb[0].mxu0
      %2065 = vmatprep.mubr.bf16.mxu0 %v1663
      %2066 = vmatmul.mubr.bf16.gmra.mrb[0].mxu0 %v1662
      %v2067 = vpop.f32.mrb[0].mxu0
      %v2068 = vadd.f32 0.0, %v2067
      %v2069 = vpop.f32.mrb[0].mxu0
      %v2070 = vpop.f32.mrb[0].mxu0
      %v2071 = vadd.f32 0.0, %v2070
      %v2072 = vpop.f32.mrb[0].mxu0
      %2073 = vmatprep.mubr.bf16.mxu0 %v1666
      %2074 = vmatmul.mubr.bf16.gmra.mrb[0].mxu0 %v1665
      %v2075 = vpop.f32.mrb[0].mxu0
      %v2076 = vadd.f32 0.0, %v2075
      %v2077 = vpop.f32.mrb[0].mxu0
      %v2078 = vpop.f32.mrb[0].mxu0
      %v2079 = vadd.f32 0.0, %v2078
      %v2080 = vpop.f32.mrb[0].mxu0
      %2081 = vmatprep.mubr.bf16.mxu0 %v1669
      %2082 = vmatmul.mubr.bf16.gmra.mrb[0].mxu0 %v1668
      %v2083 = vpop.f32.mrb[0].mxu0
      %v2084 = vadd.f32 0.0, %v2083
      %v2085 = vpop.f32.mrb[0].mxu0
      %v2086 = vpop.f32.mrb[0].mxu0
      %v2087 = vadd.f32 0.0, %v2086
      %v2088 = vpop.f32.mrb[0].mxu0
      %2089 = vmatprep.mubr.bf16.mxu0 %v1672
      %2090 = vmatmul.mubr.bf16.gmra.mrb[0].mxu0 %v1671
      %v2091 = vpop.f32.mrb[0].mxu0
      %v2092 = vadd.f32 0.0, %v2091
      %v2093 = vpop.f32.mrb[0].mxu0
      %v2094 = vpop.f32.mrb[0].mxu0
      %v2095 = vadd.f32 0.0, %v2094
      %v2096 = vpop.f32.mrb[0].mxu0
      %2097 = vmatprep.mubr.bf16.mxu0 %v1675
      %2098 = vmatmul.mubr.bf16.gmra.mrb[0].mxu0 %v1674
      %v2099 = vpop.f32.mrb[0].mxu0
      %v2100 = vadd.f32 0.0, %v2099
      %v2101 = vpop.f32.mrb[0].mxu0
      %v2102 = vpop.f32.mrb[0].mxu0
      %v2103 = vadd.f32 0.0, %v2102
      %v2104 = vpop.f32.mrb[0].mxu0
      %2105 = vmatprep.mubr.bf16.mxu0 %v1678
      %2106 = vmatmul.mubr.bf16.gmra.mrb[0].mxu0 %v1677
      %v2107 = vpop.f32.mrb[0].mxu0
      %v2108 = vadd.f32 0.0, %v2107
      %v2109 = vpop.f32.mrb[0].mxu0
      %v2110 = vpop.f32.mrb[0].mxu0
      %v2111 = vadd.f32 0.0, %v2110
      %v2112 = vpop.f32.mrb[0].mxu0
      %2113 = vmatprep.mubr.bf16.mxu0 %v1681
      %2114 = vmatmul.mubr.bf16.gmra.mrb[0].mxu0 %v1680
      %v2115 = vpop.f32.mrb[0].mxu0
      %v2116 = vadd.f32 0.0, %v2115
      %v2117 = vpop.f32.mrb[0].mxu0
      %v2118 = vpop.f32.mrb[0].mxu0
      %v2119 = vadd.f32 0.0, %v2118
      %v2120 = vpop.f32.mrb[0].mxu0
      %2121 = vmatprep.mubr.bf16.mxu0 %v1684
      %2122 = vmatmul.mubr.bf16.gmra.mrb[0].mxu0 %v1683
      %v2123 = vpop.f32.mrb[0].mxu0
      %v2124 = vadd.f32 0.0, %v2123
      %v2125 = vpop.f32.mrb[0].mxu0
      %v2126 = vpop.f32.mrb[0].mxu0
      %v2127 = vadd.f32 0.0, %v2126
      %v2128 = vpop.f32.mrb[0].mxu0
      %2129 = vmatprep.mubr.bf16.mxu0 %v1687
      %2130 = vmatmul.mubr.bf16.gmra.mrb[0].mxu0 %v1686
      %v2131 = vpop.f32.mrb[0].mxu0
      %v2132 = vadd.f32 0.0, %v2131
      %v2133 = vpop.f32.mrb[0].mxu0
      %v2134 = vpop.f32.mrb[0].mxu0
      %v2135 = vadd.f32 0.0, %v2134
      %v2136 = vpop.f32.mrb[0].mxu0
      %2137 = vmatprep.mubr.bf16.mxu0 %v1690
      %2138 = vmatmul.mubr.bf16.gmra.mrb[0].mxu0 %v1689
      %v2139 = vpop.f32.mrb[0].mxu0
      %v2140 = vadd.f32 0.0, %v2139
      %v2141 = vpop.f32.mrb[0].mxu0
      %v2142 = vpop.f32.mrb[0].mxu0
      %v2143 = vadd.f32 0.0, %v2142
      %v2144 = vpop.f32.mrb[0].mxu0
      %2145 = vmatprep.mubr.bf16.mxu0 %v1693
      %2146 = vmatmul.mubr.bf16.gmra.mrb[0].mxu0 %v1692
      %v2147 = vpop.f32.mrb[0].mxu0
      %v2148 = vadd.f32 0.0, %v2147
      %v2149 = vpop.f32.mrb[0].mxu0
      %v2150 = vpop.f32.mrb[0].mxu0
      %v2151 = vadd.f32 0.0, %v2150
      %v2152 = vpop.f32.mrb[0].mxu0
      %2153 = vmatprep.mubr.bf16.mxu0 %v1696
      %2154 = vmatmul.mubr.bf16.gmra.mrb[0].mxu0 %v1695
      %v2155 = vpop.f32.mrb[0].mxu0
      %v2156 = vadd.f32 0.0, %v2155
      %v2157 = vpop.f32.mrb[0].mxu0
      %v2158 = vpop.f32.mrb[0].mxu0
      %v2159 = vadd.f32 0.0, %v2158
      %v2160 = vpop.f32.mrb[0].mxu0
      %2161 = vmatprep.mubr.bf16.mxu0 %v1699
      %2162 = vmatmul.mubr.bf16.gmra.mrb[0].mxu0 %v1698
      %v2163 = vpop.f32.mrb[0].mxu0
      %v2164 = vadd.f32 0.0, %v2163
      %v2165 = vpop.f32.mrb[0].mxu0
      %v2166 = vpop.f32.mrb[0].mxu0
      %v2167 = vadd.f32 0.0, %v2166
      %v2168 = vpop.f32.mrb[0].mxu0
      %2169 = vmatprep.mubr.bf16.mxu0 %v1702
      %2170 = vmatmul.mubr.bf16.gmra.mrb[0].mxu0 %v1701
      %v2171 = vpop.f32.mrb[0].mxu0
      %v2172 = vadd.f32 0.0, %v2171
      %v2173 = vpop.f32.mrb[0].mxu0
      %v2174 = vpop.f32.mrb[0].mxu0
      %v2175 = vadd.f32 0.0, %v2174
      %v2176 = vpop.f32.mrb[0].mxu0
      %2177 = vmatprep.mubr.bf16.mxu0 %v1705
      %2178 = vmatmul.mubr.bf16.gmra.mrb[0].mxu0 %v1704
      %v2179 = vpop.f32.mrb[0].mxu0
      %v2180 = vadd.f32 0.0, %v2179
      %v2181 = vpop.f32.mrb[0].mxu0
      %v2182 = vpop.f32.mrb[0].mxu0
      %v2183 = vadd.f32 0.0, %v2182
      %v2184 = vpop.f32.mrb[0].mxu0
      %2185 = vmatprep.mubr.bf16.mxu0 %v1708
      %2186 = vmatmul.mubr.bf16.gmra.mrb[0].mxu0 %v1707
      %v2187 = vpop.f32.mrb[0].mxu0
      %v2188 = vadd.f32 0.0, %v2187
      %v2189 = vpop.f32.mrb[0].mxu0
      %v2190 = vpop.f32.mrb[0].mxu0
      %v2191 = vadd.f32 0.0, %v2190
      %v2192 = vpop.f32.mrb[0].mxu0
      %2193 = vmatprep.mubr.bf16.mxu0 %v1711
      %2194 = vmatmul.mubr.bf16.gmra.mrb[0].mxu0 %v1710
      %v2195 = vpop.f32.mrb[0].mxu0
      %v2196 = vadd.f32 0.0, %v2195
      %v2197 = vpop.f32.mrb[0].mxu0
      %v2198 = vpop.f32.mrb[0].mxu0
      %v2199 = vadd.f32 0.0, %v2198
      %v2200 = vpop.f32.mrb[0].mxu0
      %2201 = vmatprep.mubr.bf16.mxu0 %v1714
      %2202 = vmatmul.mubr.bf16.gmra.mrb[0].mxu0 %v1713
      %v2203 = vpop.f32.mrb[0].mxu0
      %v2204 = vadd.f32 0.0, %v2203
      %v2205 = vpop.f32.mrb[0].mxu0
      %v2206 = vpop.f32.mrb[0].mxu0
      %v2207 = vadd.f32 0.0, %v2206
      %v2208 = vpop.f32.mrb[0].mxu0
      %2209 = vmatprep.mubr.bf16.mxu0 %v1717
      %2210 = vmatmul.mubr.bf16.gmra.mrb[0].mxu0 %v1716
      %v2211 = vpop.f32.mrb[0].mxu0
      %v2212 = vadd.f32 0.0, %v2211
      %v2213 = vpop.f32.mrb[0].mxu0
      %v2214 = vpop.f32.mrb[0].mxu0
      %v2215 = vadd.f32 0.0, %v2214
      %v2216 = vpop.f32.mrb[0].mxu0
      %2217 = vmatprep.mubr.bf16.mxu0 %v1720
      %2218 = vmatmul.mubr.bf16.gmra.mrb[0].mxu0 %v1719
      %v2219 = vpop.f32.mrb[0].mxu0
      %v2220 = vadd.f32 0.0, %v2219
      %v2221 = vpop.f32.mrb[0].mxu0
      %v2222 = vpop.f32.mrb[0].mxu0
      %v2223 = vadd.f32 0.0, %v2222
      %v2224 = vpop.f32.mrb[0].mxu0
      %2225 = vmatprep.mubr.bf16.mxu0 %v1723
      %2226 = vmatmul.mubr.bf16.gmra.mrb[0].mxu0 %v1722
      %v2227 = vpop.f32.mrb[0].mxu0
      %v2228 = vadd.f32 0.0, %v2227
      %v2229 = vpop.f32.mrb[0].mxu0
      %v2230 = vpop.f32.mrb[0].mxu0
      %v2231 = vadd.f32 0.0, %v2230
      %v2232 = vpop.f32.mrb[0].mxu0
      %2233 = vmatprep.mubr.bf16.mxu0 %v1726
      %2234 = vmatmul.mubr.bf16.gmra.mrb[0].mxu0 %v1725
      %v2235 = vpop.f32.mrb[0].mxu0
      %v2236 = vadd.f32 0.0, %v2235
      %v2237 = vpop.f32.mrb[0].mxu0
      %v2238 = vpop.f32.mrb[0].mxu0
      %v2239 = vadd.f32 0.0, %v2238
      %v2240 = vpop.f32.mrb[0].mxu0
      %2241 = vmatprep.mubr.bf16.mxu0 %v1729
      %2242 = vmatmul.mubr.bf16.gmra.mrb[0].mxu0 %v1728
      %v2243 = vpop.f32.mrb[0].mxu0
      %v2244 = vadd.f32 0.0, %v2243
      %v2245 = vpop.f32.mrb[0].mxu0
      %v2246 = vpop.f32.mrb[0].mxu0
      %v2247 = vadd.f32 0.0, %v2246
      %v2248 = vpop.f32.mrb[0].mxu0
      %2249 = vmatprep.mubr.bf16.mxu0 %v1732
      %2250 = vmatmul.mubr.bf16.gmra.mrb[0].mxu0 %v1731
      %v2251 = vpop.f32.mrb[0].mxu0
      %v2252 = vadd.f32 0.0, %v2251
      %v2253 = vpop.f32.mrb[0].mxu0
      %v2254 = vpop.f32.mrb[0].mxu0
      %v2255 = vadd.f32 0.0, %v2254
      %v2256 = vpop.f32.mrb[0].mxu0
      %2257 = vmatprep.mubr.bf16.mxu0 %v1735
      %2258 = vmatmul.mubr.bf16.gmra.mrb[0].mxu0 %v1734
      %v2259 = vpop.f32.mrb[0].mxu0
      %v2260 = vadd.f32 0.0, %v2259
      %v2261 = vpop.f32.mrb[0].mxu0
      %v2262 = vpop.f32.mrb[0].mxu0
      %v2263 = vadd.f32 0.0, %v2262
      %v2264 = vpop.f32.mrb[0].mxu0
      %2265 = vmatprep.mubr.bf16.mxu0 %v1738
      %2266 = vmatmul.mubr.bf16.gmra.mrb[0].mxu0 %v1737
      %v2267 = vpop.f32.mrb[0].mxu0
      %v2268 = vadd.f32 0.0, %v2267
      %v2269 = vpop.f32.mrb[0].mxu0
      %v2270 = vpop.f32.mrb[0].mxu0
      %v2271 = vadd.f32 0.0, %v2270
      %v2272 = vpop.f32.mrb[0].mxu0
      %2273 = vmatprep.mubr.bf16.mxu0 %v1741
      %2274 = vmatmul.mubr.bf16.gmra.mrb[0].mxu0 %v1740
      %v2275 = vpop.f32.mrb[0].mxu0
      %v2276 = vadd.f32 0.0, %v2275
      %v2277 = vpop.f32.mrb[0].mxu0
      %v2278 = vpop.f32.mrb[0].mxu0
      %v2279 = vadd.f32 0.0, %v2278
      %v2280 = vpop.f32.mrb[0].mxu0
      %2281 = vmatprep.mubr.bf16.mxu0 %v1744
      %2282 = vmatmul.mubr.bf16.gmra.mrb[0].mxu0 %v1743
      %v2283 = vpop.f32.mrb[0].mxu0
      %v2284 = vadd.f32 0.0, %v2283
      %v2285 = vpop.f32.mrb[0].mxu0
      %v2286 = vpop.f32.mrb[0].mxu0
      %v2287 = vadd.f32 0.0, %v2286
      %v2288 = vpop.f32.mrb[0].mxu0
      %2289 = vmatprep.mubr.bf16.mxu0 %v1747
      %2290 = vmatmul.mubr.bf16.gmra.mrb[0].mxu0 %v1746
      %v2291 = vpop.f32.mrb[0].mxu0
      %v2292 = vadd.f32 0.0, %v2291
      %v2293 = vpop.f32.mrb[0].mxu0
      %v2294 = vpop.f32.mrb[0].mxu0
      %v2295 = vadd.f32 0.0, %v2294
      %v2296 = vpop.f32.mrb[0].mxu0
      %2297 = vmatprep.mubr.bf16.mxu0 %v1750
      %2298 = vmatmul.mubr.bf16.gmra.mrb[0].mxu0 %v1749
      %v2299 = vpop.f32.mrb[0].mxu0
      %v2300 = vadd.f32 0.0, %v2299
      %v2301 = vpop.f32.mrb[0].mxu0
      %v2302 = vpop.f32.mrb[0].mxu0
      %v2303 = vadd.f32 0.0, %v2302
      %v2304 = vpop.f32.mrb[0].mxu0
      %2305 = vmatprep.mubr.bf16.mxu0 %v1753
      %2306 = vmatmul.mubr.bf16.gmra.mrb[0].mxu0 %v1752
      %v2307 = vpop.f32.mrb[0].mxu0
      %v2308 = vadd.f32 0.0, %v2307
      %v2309 = vpop.f32.mrb[0].mxu0
      %v2310 = vpop.f32.mrb[0].mxu0
      %v2311 = vadd.f32 0.0, %v2310
      %v2312 = vpop.f32.mrb[0].mxu0
      %2313 = vmatprep.mubr.bf16.mxu0 %v1756
      %2314 = vmatmul.mubr.bf16.gmra.mrb[0].mxu0 %v1755
      %v2315 = vpop.f32.mrb[0].mxu0
      %v2316 = vadd.f32 0.0, %v2315
      %v2317 = vpop.f32.mrb[0].mxu0
      %v2318 = vpop.f32.mrb[0].mxu0
      %v2319 = vadd.f32 0.0, %v2318
      %v2320 = vpop.f32.mrb[0].mxu0
      %2321 = vmatprep.mubr.bf16.mxu0 %v1759
      %2322 = vmatmul.mubr.bf16.gmra.mrb[0].mxu0 %v1758
      %v2323 = vpop.f32.mrb[0].mxu0
      %v2324 = vadd.f32 0.0, %v2323
      %v2325 = vpop.f32.mrb[0].mxu0
      %v2326 = vpop.f32.mrb[0].mxu0
      %v2327 = vadd.f32 0.0, %v2326
      %v2328 = vpop.f32.mrb[0].mxu0
      %2329 = vmatprep.mubr.bf16.mxu0 %v1762
      %2330 = vmatmul.mubr.bf16.gmra.mrb[0].mxu0 %v1761
      %v2331 = vpop.f32.mrb[0].mxu0
      %v2332 = vadd.f32 0.0, %v2331
      %v2333 = vpop.f32.mrb[0].mxu0
      %v2334 = vpop.f32.mrb[0].mxu0
      %v2335 = vadd.f32 0.0, %v2334
      %v2336 = vpop.f32.mrb[0].mxu0
      %2337 = vdwg.mxu0
      %2338 = vmatprep.subr.bf16.mxu0 0
      %2339 = vmatpush1.bf16.msra.mxu0 %v1888
      %2340 = vmatprep.subr.bf16.mxu0 0
      %2341 = vmatpush1.bf16.msra.mxu0 %v1889
      %2342 = vmatprep.subr.bf16.mxu0 0
      %2343 = vmatpush1.bf16.msra.mxu0 0
      %2344 = vmatprep.subr.bf16.mxu0 0
      %2345 = vmatpush1.bf16.msra.mxu0 0
      %2346 = vmatprep.subr.bf16.mxu0 0
      %2347 = vmatpush1.bf16.msra.mxu0 0
      %2348 = vmatprep.subr.bf16.mxu0 0
      %2349 = vmatpush1.bf16.msra.mxu0 0
      %2350 = vmatprep.subr.bf16.mxu0 0
      %2351 = vmatpush1.bf16.msra.mxu0 0
      %2352 = vmatprep.subr.bf16.mxu0 0
      %2353 = vmatpush1.bf16.msra.mxu0 0
      %2354 = vmatprep.subr.bf16.mxu0 0
      %2355 = vmatpush1.bf16.msra.mxu0 0
      %2356 = vmatprep.subr.bf16.mxu0 0
      %2357 = vmatpush1.bf16.msra.mxu0 0
      %2358 = vmatprep.subr.bf16.mxu0 0
      %2359 = vmatpush1.bf16.msra.mxu0 0
      %2360 = vmatprep.subr.bf16.mxu0 0
      %2361 = vmatpush1.bf16.msra.mxu0 0
      %2362 = vmatprep.subr.bf16.mxu0 0
      %2363 = vmatpush1.bf16.msra.mxu0 0
      %2364 = vmatprep.subr.bf16.mxu0 0
      %2365 = vmatpush1.bf16.msra.mxu0 0
      %2366 = vmatprep.subr.bf16.mxu0 0
      %2367 = vmatpush1.bf16.msra.mxu0 0
      %2368 = vmatprep.subr.bf16.mxu0 0
      %2369 = vmatpush1.bf16.msra.mxu0 0
      %2370 = vmatprep.mubr.bf16.mxu0 0
      %2371 = vmatmul.mubr.bf16.gmra.mrb[0].mxu0 %v1910
      %v2372 = vpop.f32.mrb[0].mxu0
      %v2373 = vadd.f32 %v2052, %v2372
      %v2374 = vpop.f32.mrb[0].mxu0
      %v2375 = vpop.f32.mrb[0].mxu0
      %v2376 = vadd.f32 %v2055, %v2375
      %v2377 = vpop.f32.mrb[0].mxu0
      %2378 = vmatprep.mubr.bf16.mxu0 0
      %2379 = vmatmul.mubr.bf16.gmra.mrb[0].mxu0 %v1913
      %v2380 = vpop.f32.mrb[0].mxu0
      %v2381 = vadd.f32 %v2060, %v2380
      %v2382 = vpop.f32.mrb[0].mxu0
      %v2383 = vpop.f32.mrb[0].mxu0
      %v2384 = vadd.f32 %v2063, %v2383
      %v2385 = vpop.f32.mrb[0].mxu0
      %2386 = vmatprep.mubr.bf16.mxu0 0
      %2387 = vmatmul.mubr.bf16.gmra.mrb[0].mxu0 %v1916
      %v2388 = vpop.f32.mrb[0].mxu0
      %v2389 = vadd.f32 %v2068, %v2388
      %v2390 = vpop.f32.mrb[0].mxu0
      %v2391 = vpop.f32.mrb[0].mxu0
      %v2392 = vadd.f32 %v2071, %v2391
      %v2393 = vpop.f32.mrb[0].mxu0
      %2394 = vmatprep.mubr.bf16.mxu0 0
      %2395 = vmatmul.mubr.bf16.gmra.mrb[0].mxu0 %v1919
      %v2396 = vpop.f32.mrb[0].mxu0
      %v2397 = vadd.f32 %v2076, %v2396
      %v2398 = vpop.f32.mrb[0].mxu0
      %v2399 = vpop.f32.mrb[0].mxu0
      %v2400 = vadd.f32 %v2079, %v2399
      %v2401 = vpop.f32.mrb[0].mxu0
      %2402 = vmatprep.mubr.bf16.mxu0 0
      %2403 = vmatmul.mubr.bf16.gmra.mrb[0].mxu0 %v1922
      %v2404 = vpop.f32.mrb[0].mxu0
      %v2405 = vadd.f32 %v2084, %v2404
      %v2406 = vpop.f32.mrb[0].mxu0
      %v2407 = vpop.f32.mrb[0].mxu0
      %v2408 = vadd.f32 %v2087, %v2407
      %v2409 = vpop.f32.mrb[0].mxu0
      %2410 = vmatprep.mubr.bf16.mxu0 0
      %2411 = vmatmul.mubr.bf16.gmra.mrb[0].mxu0 %v1925
      %v2412 = vpop.f32.mrb[0].mxu0
      %v2413 = vadd.f32 %v2092, %v2412
      %v2414 = vpop.f32.mrb[0].mxu0
      %v2415 = vpop.f32.mrb[0].mxu0
      %v2416 = vadd.f32 %v2095, %v2415
      %v2417 = vpop.f32.mrb[0].mxu0
      %2418 = vmatprep.mubr.bf16.mxu0 0
      %2419 = vmatmul.mubr.bf16.gmra.mrb[0].mxu0 %v1928
      %v2420 = vpop.f32.mrb[0].mxu0
      %v2421 = vadd.f32 %v2100, %v2420
      %v2422 = vpop.f32.mrb[0].mxu0
      %v2423 = vpop.f32.mrb[0].mxu0
      %v2424 = vadd.f32 %v2103, %v2423
      %v2425 = vpop.f32.mrb[0].mxu0
      %2426 = vmatprep.mubr.bf16.mxu0 0
      %2427 = vmatmul.mubr.bf16.gmra.mrb[0].mxu0 %v1931
      %v2428 = vpop.f32.mrb[0].mxu0
      %v2429 = vadd.f32 %v2108, %v2428
      %v2430 = vpop.f32.mrb[0].mxu0
      %v2431 = vpop.f32.mrb[0].mxu0
      %v2432 = vadd.f32 %v2111, %v2431
      %v2433 = vpop.f32.mrb[0].mxu0
      %2434 = vmatprep.mubr.bf16.mxu0 0
      %2435 = vmatmul.mubr.bf16.gmra.mrb[0].mxu0 %v1934
      %v2436 = vpop.f32.mrb[0].mxu0
      %v2437 = vadd.f32 %v2116, %v2436
      %v2438 = vpop.f32.mrb[0].mxu0
      %v2439 = vpop.f32.mrb[0].mxu0
      %v2440 = vadd.f32 %v2119, %v2439
      %v2441 = vpop.f32.mrb[0].mxu0
      %2442 = vmatprep.mubr.bf16.mxu0 0
      %2443 = vmatmul.mubr.bf16.gmra.mrb[0].mxu0 %v1937
      %v2444 = vpop.f32.mrb[0].mxu0
      %v2445 = vadd.f32 %v2124, %v2444
      %v2446 = vpop.f32.mrb[0].mxu0
      %v2447 = vpop.f32.mrb[0].mxu0
      %v2448 = vadd.f32 %v2127, %v2447
      %v2449 = vpop.f32.mrb[0].mxu0
      %2450 = vmatprep.mubr.bf16.mxu0 0
      %2451 = vmatmul.mubr.bf16.gmra.mrb[0].mxu0 %v1940
      %v2452 = vpop.f32.mrb[0].mxu0
      %v2453 = vadd.f32 %v2132, %v2452
      %v2454 = vpop.f32.mrb[0].mxu0
      %v2455 = vpop.f32.mrb[0].mxu0
      %v2456 = vadd.f32 %v2135, %v2455
      %v2457 = vpop.f32.mrb[0].mxu0
      %2458 = vmatprep.mubr.bf16.mxu0 0
      %2459 = vmatmul.mubr.bf16.gmra.mrb[0].mxu0 %v1943
      %v2460 = vpop.f32.mrb[0].mxu0
      %v2461 = vadd.f32 %v2140, %v2460
      %v2462 = vpop.f32.mrb[0].mxu0
      %v2463 = vpop.f32.mrb[0].mxu0
      %v2464 = vadd.f32 %v2143, %v2463
      %v2465 = vpop.f32.mrb[0].mxu0
      %2466 = vmatprep.mubr.bf16.mxu0 0
      %2467 = vmatmul.mubr.bf16.gmra.mrb[0].mxu0 %v1946
      %v2468 = vpop.f32.mrb[0].mxu0
      %v2469 = vadd.f32 %v2148, %v2468
      %v2470 = vpop.f32.mrb[0].mxu0
      %v2471 = vpop.f32.mrb[0].mxu0
      %v2472 = vadd.f32 %v2151, %v2471
      %v2473 = vpop.f32.mrb[0].mxu0
      %2474 = vmatprep.mubr.bf16.mxu0 0
      %2475 = vmatmul.mubr.bf16.gmra.mrb[0].mxu0 %v1949
      %v2476 = vpop.f32.mrb[0].mxu0
      %v2477 = vadd.f32 %v2156, %v2476
      %v2478 = vpop.f32.mrb[0].mxu0
      %v2479 = vpop.f32.mrb[0].mxu0
      %v2480 = vadd.f32 %v2159, %v2479
      %v2481 = vpop.f32.mrb[0].mxu0
      %2482 = vmatprep.mubr.bf16.mxu0 0
      %2483 = vmatmul.mubr.bf16.gmra.mrb[0].mxu0 %v1952
      %v2484 = vpop.f32.mrb[0].mxu0
      %v2485 = vadd.f32 %v2164, %v2484
      %v2486 = vpop.f32.mrb[0].mxu0
      %v2487 = vpop.f32.mrb[0].mxu0
      %v2488 = vadd.f32 %v2167, %v2487
      %v2489 = vpop.f32.mrb[0].mxu0
      %2490 = vmatprep.mubr.bf16.mxu0 0
      %2491 = vmatmul.mubr.bf16.gmra.mrb[0].mxu0 %v1955
      %v2492 = vpop.f32.mrb[0].mxu0
      %v2493 = vadd.f32 %v2172, %v2492
      %v2494 = vpop.f32.mrb[0].mxu0
      %v2495 = vpop.f32.mrb[0].mxu0
      %v2496 = vadd.f32 %v2175, %v2495
      %v2497 = vpop.f32.mrb[0].mxu0
      %2498 = vmatprep.mubr.bf16.mxu0 0
      %2499 = vmatmul.mubr.bf16.gmra.mrb[0].mxu0 %v1958
      %v2500 = vpop.f32.mrb[0].mxu0
      %v2501 = vadd.f32 %v2180, %v2500
      %v2502 = vpop.f32.mrb[0].mxu0
      %v2503 = vpop.f32.mrb[0].mxu0
      %v2504 = vadd.f32 %v2183, %v2503
      %v2505 = vpop.f32.mrb[0].mxu0
      %2506 = vmatprep.mubr.bf16.mxu0 0
      %2507 = vmatmul.mubr.bf16.gmra.mrb[0].mxu0 %v1961
      %v2508 = vpop.f32.mrb[0].mxu0
      %v2509 = vadd.f32 %v2188, %v2508
      %v2510 = vpop.f32.mrb[0].mxu0
      %v2511 = vpop.f32.mrb[0].mxu0
      %v2512 = vadd.f32 %v2191, %v2511
      %v2513 = vpop.f32.mrb[0].mxu0
      %2514 = vmatprep.mubr.bf16.mxu0 0
      %2515 = vmatmul.mubr.bf16.gmra.mrb[0].mxu0 %v1964
      %v2516 = vpop.f32.mrb[0].mxu0
      %v2517 = vadd.f32 %v2196, %v2516
      %v2518 = vpop.f32.mrb[0].mxu0
      %v2519 = vpop.f32.mrb[0].mxu0
      %v2520 = vadd.f32 %v2199, %v2519
      %v2521 = vpop.f32.mrb[0].mxu0
      %2522 = vmatprep.mubr.bf16.mxu0 0
      %2523 = vmatmul.mubr.bf16.gmra.mrb[0].mxu0 %v1967
      %v2524 = vpop.f32.mrb[0].mxu0
      %v2525 = vadd.f32 %v2204, %v2524
      %v2526 = vpop.f32.mrb[0].mxu0
      %v2527 = vpop.f32.mrb[0].mxu0
      %v2528 = vadd.f32 %v2207, %v2527
      %v2529 = vpop.f32.mrb[0].mxu0
      %2530 = vmatprep.mubr.bf16.mxu0 0
      %2531 = vmatmul.mubr.bf16.gmra.mrb[0].mxu0 %v1970
      %v2532 = vpop.f32.mrb[0].mxu0
      %v2533 = vadd.f32 %v2212, %v2532
      %v2534 = vpop.f32.mrb[0].mxu0
      %v2535 = vpop.f32.mrb[0].mxu0
      %v2536 = vadd.f32 %v2215, %v2535
      %v2537 = vpop.f32.mrb[0].mxu0
      %2538 = vmatprep.mubr.bf16.mxu0 0
      %2539 = vmatmul.mubr.bf16.gmra.mrb[0].mxu0 %v1973
      %v2540 = vpop.f32.mrb[0].mxu0
      %v2541 = vadd.f32 %v2220, %v2540
      %v2542 = vpop.f32.mrb[0].mxu0
      %v2543 = vpop.f32.mrb[0].mxu0
      %v2544 = vadd.f32 %v2223, %v2543
      %v2545 = vpop.f32.mrb[0].mxu0
      %2546 = vmatprep.mubr.bf16.mxu0 0
      %2547 = vmatmul.mubr.bf16.gmra.mrb[0].mxu0 %v1976
      %v2548 = vpop.f32.mrb[0].mxu0
      %v2549 = vadd.f32 %v2228, %v2548
      %v2550 = vpop.f32.mrb[0].mxu0
      %v2551 = vpop.f32.mrb[0].mxu0
      %v2552 = vadd.f32 %v2231, %v2551
      %v2553 = vpop.f32.mrb[0].mxu0
      %2554 = vmatprep.mubr.bf16.mxu0 0
      %2555 = vmatmul.mubr.bf16.gmra.mrb[0].mxu0 %v1979
      %v2556 = vpop.f32.mrb[0].mxu0
      %v2557 = vadd.f32 %v2236, %v2556
      %v2558 = vpop.f32.mrb[0].mxu0
      %v2559 = vpop.f32.mrb[0].mxu0
      %v2560 = vadd.f32 %v2239, %v2559
      %v2561 = vpop.f32.mrb[0].mxu0
      %2562 = vmatprep.mubr.bf16.mxu0 0
      %2563 = vmatmul.mubr.bf16.gmra.mrb[0].mxu0 %v1982
      %v2564 = vpop.f32.mrb[0].mxu0
      %v2565 = vadd.f32 %v2244, %v2564
      %v2566 = vpop.f32.mrb[0].mxu0
      %v2567 = vpop.f32.mrb[0].mxu0
      %v2568 = vadd.f32 %v2247, %v2567
      %v2569 = vpop.f32.mrb[0].mxu0
      %2570 = vmatprep.mubr.bf16.mxu0 0
      %2571 = vmatmul.mubr.bf16.gmra.mrb[0].mxu0 %v1985
      %v2572 = vpop.f32.mrb[0].mxu0
      %v2573 = vadd.f32 %v2252, %v2572
      %v2574 = vpop.f32.mrb[0].mxu0
      %v2575 = vpop.f32.mrb[0].mxu0
      %v2576 = vadd.f32 %v2255, %v2575
      %v2577 = vpop.f32.mrb[0].mxu0
      %2578 = vmatprep.mubr.bf16.mxu0 0
      %2579 = vmatmul.mubr.bf16.gmra.mrb[0].mxu0 %v1988
      %v2580 = vpop.f32.mrb[0].mxu0
      %v2581 = vadd.f32 %v2260, %v2580
      %v2582 = vpop.f32.mrb[0].mxu0
      %v2583 = vpop.f32.mrb[0].mxu0
      %v2584 = vadd.f32 %v2263, %v2583
      %v2585 = vpop.f32.mrb[0].mxu0
      %2586 = vmatprep.mubr.bf16.mxu0 0
      %2587 = vmatmul.mubr.bf16.gmra.mrb[0].mxu0 %v1991
      %v2588 = vpop.f32.mrb[0].mxu0
      %v2589 = vadd.f32 %v2268, %v2588
      %v2590 = vpop.f32.mrb[0].mxu0
      %v2591 = vpop.f32.mrb[0].mxu0
      %v2592 = vadd.f32 %v2271, %v2591
      %v2593 = vpop.f32.mrb[0].mxu0
      %2594 = vmatprep.mubr.bf16.mxu0 0
      %2595 = vmatmul.mubr.bf16.gmra.mrb[0].mxu0 %v1994
      %v2596 = vpop.f32.mrb[0].mxu0
      %v2597 = vadd.f32 %v2276, %v2596
      %v2598 = vpop.f32.mrb[0].mxu0
      %v2599 = vpop.f32.mrb[0].mxu0
      %v2600 = vadd.f32 %v2279, %v2599
      %v2601 = vpop.f32.mrb[0].mxu0
      %2602 = vmatprep.mubr.bf16.mxu0 0
      %2603 = vmatmul.mubr.bf16.gmra.mrb[0].mxu0 %v1997
      %v2604 = vpop.f32.mrb[0].mxu0
      %v2605 = vadd.f32 %v2284, %v2604
      %v2606 = vpop.f32.mrb[0].mxu0
      %v2607 = vpop.f32.mrb[0].mxu0
      %v2608 = vadd.f32 %v2287, %v2607
      %v2609 = vpop.f32.mrb[0].mxu0
      %2610 = vmatprep.mubr.bf16.mxu0 0
      %2611 = vmatmul.mubr.bf16.gmra.mrb[0].mxu0 %v2000
      %v2612 = vpop.f32.mrb[0].mxu0
      %v2613 = vadd.f32 %v2292, %v2612
      %v2614 = vpop.f32.mrb[0].mxu0
      %v2615 = vpop.f32.mrb[0].mxu0
      %v2616 = vadd.f32 %v2295, %v2615
      %v2617 = vpop.f32.mrb[0].mxu0
      %2618 = vmatprep.mubr.bf16.mxu0 0
      %2619 = vmatmul.mubr.bf16.gmra.mrb[0].mxu0 %v2003
      %v2620 = vpop.f32.mrb[0].mxu0
      %v2621 = vadd.f32 %v2300, %v2620
      %v2622 = vpop.f32.mrb[0].mxu0
      %v2623 = vpop.f32.mrb[0].mxu0
      %v2624 = vadd.f32 %v2303, %v2623
      %v2625 = vpop.f32.mrb[0].mxu0
      %2626 = vmatprep.mubr.bf16.mxu0 0
      %2627 = vmatmul.mubr.bf16.gmra.mrb[0].mxu0 %v2006
      %v2628 = vpop.f32.mrb[0].mxu0
      %v2629 = vadd.f32 %v2308, %v2628
      %v2630 = vpop.f32.mrb[0].mxu0
      %v2631 = vpop.f32.mrb[0].mxu0
      %v2632 = vadd.f32 %v2311, %v2631
      %v2633 = vpop.f32.mrb[0].mxu0
      %2634 = vmatprep.mubr.bf16.mxu0 0
      %2635 = vmatmul.mubr.bf16.gmra.mrb[0].mxu0 %v2009
      %v2636 = vpop.f32.mrb[0].mxu0
      %v2637 = vadd.f32 %v2316, %v2636
      %v2638 = vpop.f32.mrb[0].mxu0
      %v2639 = vpop.f32.mrb[0].mxu0
      %v2640 = vadd.f32 %v2319, %v2639
      %v2641 = vpop.f32.mrb[0].mxu0
      %2642 = vmatprep.mubr.bf16.mxu0 0
      %2643 = vmatmul.mubr.bf16.gmra.mrb[0].mxu0 %v2012
      %v2644 = vpop.f32.mrb[0].mxu0
      %v2645 = vadd.f32 %v2324, %v2644
      %v2646 = vpop.f32.mrb[0].mxu0
      %v2647 = vpop.f32.mrb[0].mxu0
      %v2648 = vadd.f32 %v2327, %v2647
      %v2649 = vpop.f32.mrb[0].mxu0
      %2650 = vmatprep.mubr.bf16.mxu0 0
      %2651 = vmatmul.mubr.bf16.gmra.mrb[0].mxu0 %v2015
      %v2652 = vpop.f32.mrb[0].mxu0
      %v2653 = vadd.f32 %v2332, %v2652
      %v2654 = vpop.f32.mrb[0].mxu0
      %v2655 = vpop.f32.mrb[0].mxu0
      %v2656 = vadd.f32 %v2335, %v2655
      %v2657 = vpop.f32.mrb[0].mxu0
      %2658 = vdwg.mxu0
      %v2659 = vmax.f32 %v2373, %v2445
      %v2660 = vmax.f32 %v2376, %v2448
      %v2661 = vmax.f32 %v2381, %v2453
      %v2662 = vmax.f32 %v2384, %v2456
      %v2663 = vmax.f32 %v2389, %v2461
      %v2664 = vmax.f32 %v2392, %v2464
      %v2665 = vmax.f32 %v2397, %v2469
      %v2666 = vmax.f32 %v2400, %v2472
      %v2667 = vmax.f32 %v2405, %v2477
      %v2668 = vmax.f32 %v2408, %v2480
      %v2669 = vmax.f32 %v2413, %v2485
      %v2670 = vmax.f32 %v2416, %v2488
      %v2671 = vmax.f32 %v2421, %v2493
      %v2672 = vmax.f32 %v2424, %v2496
      %v2673 = vmax.f32 %v2429, %v2501
      %v2674 = vmax.f32 %v2432, %v2504
      %v2675 = vmax.f32 %v2437, %v2509
      %v2676 = vmax.f32 %v2440, %v2512
      %v2677 = vmax.f32 %v2517, %v2589
      %v2678 = vmax.f32 %v2520, %v2592
      %v2679 = vmax.f32 %v2525, %v2597
      %v2680 = vmax.f32 %v2528, %v2600
      %v2681 = vmax.f32 %v2533, %v2605
      %v2682 = vmax.f32 %v2536, %v2608
      %v2683 = vmax.f32 %v2541, %v2613
      %v2684 = vmax.f32 %v2544, %v2616
      %v2685 = vmax.f32 %v2549, %v2621
      %v2686 = vmax.f32 %v2552, %v2624
      %v2687 = vmax.f32 %v2557, %v2629
      %v2688 = vmax.f32 %v2560, %v2632
      %v2689 = vmax.f32 %v2565, %v2637
      %v2690 = vmax.f32 %v2568, %v2640
      %v2691 = vmax.f32 %v2573, %v2645
      %v2692 = vmax.f32 %v2576, %v2648
      %v2693 = vmax.f32 %v2581, %v2653
      %v2694 = vmax.f32 %v2584, %v2656
      %v2695 = vmax.f32 %v2659, %v2677
      %v2696 = vmax.f32 %v2660, %v2678
      %v2697 = vmax.f32 %v2661, %v2679
      %v2698 = vmax.f32 %v2662, %v2680
      %v2699 = vmax.f32 %v2663, %v2681
      %v2700 = vmax.f32 %v2664, %v2682
      %v2701 = vmax.f32 %v2665, %v2683
      %v2702 = vmax.f32 %v2666, %v2684
      %v2703 = vmax.f32 %v2667, %v2685
      %v2704 = vmax.f32 %v2668, %v2686
      %v2705 = vmax.f32 %v2669, %v2687
      %v2706 = vmax.f32 %v2670, %v2688
      %v2707 = vmax.f32 %v2671, %v2689
      %v2708 = vmax.f32 %v2672, %v2690
      %v2709 = vmax.f32 %v2673, %v2691
      %v2710 = vmax.f32 %v2674, %v2692
      %v2711 = vmax.f32 %v2675, %v2693
      %v2712 = vmax.f32 %v2676, %v2694
      %v2713 = vld [vmem:[%s4] sm:$0x1]
      %v2715 = vlaneseq
      %v2716 = vshrl.u32 %v2715, 7
      %v2717 = vsub.s32 0, %v2716
      %v2718 = vrot.slane %v2713, %v2717
      %v2720 = vadd.f32 %v2695, %v2718
      %v2721 = vadd.f32 %v2696, %v2718
      %v2722 = vadd.f32 %v2697, %v2718
      %v2723 = vadd.f32 %v2698, %v2718
      %v2724 = vadd.f32 %v2699, %v2718
      %v2725 = vadd.f32 %v2700, %v2718
      %v2726 = vadd.f32 %v2701, %v2718
      %v2727 = vadd.f32 %v2702, %v2718
      %v2728 = vadd.f32 %v2703, %v2718
      %v2729 = vadd.f32 %v2704, %v2718
      %v2730 = vadd.f32 %v2705, %v2718
      %v2731 = vadd.f32 %v2706, %v2718
      %v2732 = vadd.f32 %v2707, %v2718
      %v2733 = vadd.f32 %v2708, %v2718
      %v2734 = vadd.f32 %v2709, %v2718
      %v2735 = vadd.f32 %v2710, %v2718
      %v2736 = vadd.f32 %v2711, %v2718
      %v2737 = vadd.f32 %v2712, %v2718
      %v2738 = vmax.f32 %v2720, 0.0
      %v2739 = vmax.f32 %v2721, 0.0
      %v2740 = vmax.f32 %v2722, 0.0
      %v2741 = vmax.f32 %v2723, 0.0
      %v2742 = vmax.f32 %v2724, 0.0
      %v2743 = vmax.f32 %v2725, 0.0
      %v2744 = vmax.f32 %v2726, 0.0
      %v2745 = vmax.f32 %v2727, 0.0
      %v2746 = vmax.f32 %v2728, 0.0
      %v2747 = vmax.f32 %v2729, 0.0
      %v2748 = vmax.f32 %v2730, 0.0
      %v2749 = vmax.f32 %v2731, 0.0
      %v2750 = vmax.f32 %v2732, 0.0
      %v2751 = vmax.f32 %v2733, 0.0
      %v2752 = vmax.f32 %v2734, 0.0
      %v2753 = vmax.f32 %v2735, 0.0
      %v2754 = vmax.f32 %v2736, 0.0
      %v2755 = vmax.f32 %v2737, 0.0
      %2765 = vrot.lane.b32.xlu0 %v2747, 64
      %v2766 = vpop.permute.xlu0 %2765
      %2767 = vrot.lane.b32.xlu0 %v2748, 64
      %v2768 = vpop.permute.xlu0 %2767
      %2769 = vrot.lane.b32.xlu0 %v2749, 64
      %v2770 = vpop.permute.xlu0 %2769
      %2771 = vrot.lane.b32.xlu0 %v2750, 64
      %v2772 = vpop.permute.xlu0 %2771
      %2773 = vrot.lane.b32.xlu0 %v2751, 64
      %v2774 = vpop.permute.xlu0 %2773
      %2775 = vrot.lane.b32.xlu0 %v2752, 64
      %v2776 = vpop.permute.xlu0 %2775
      %2777 = vrot.lane.b32.xlu0 %v2753, 64
      %v2778 = vpop.permute.xlu0 %2777
      %2779 = vrot.lane.b32.xlu0 %v2754, 64
      %v2780 = vpop.permute.xlu0 %2779
      %2781 = vrot.lane.b32.xlu0 %v2755, 64
      %v2782 = vpop.permute.xlu0 %2781
      %vm2792 = vcmask 523264
      %v2793 = vsel %vm2792, %v2738, %v2766
      %v2794 = vsel %vm2792, %v2739, %v2768
      %v2795 = vsel %vm2792, %v2740, %v2770
      %v2796 = vsel %vm2792, %v2741, %v2772
      %v2797 = vsel %vm2792, %v2742, %v2774
      %v2798 = vsel %vm2792, %v2743, %v2776
      %v2799 = vsel %vm2792, %v2744, %v2778
      %v2800 = vsel %vm2792, %v2745, %v2780
      %v2801 = vsel %vm2792, %v2746, %v2782
      %v2802 = vpack.c.bf16 %v2794, %v2793
      %v2803 = vpack.c.bf16 %v2796, %v2795
      %v2804 = vpack.c.bf16 %v2798, %v2797
      %v2805 = vpack.c.bf16 %v2800, %v2799
      %v2806 = vpack.c.bf16 %v2801, %v2801
      %v2812 = vunpack.c.l.b16 %v2802
      %v2813 = vunpack.c.h.b16 %v2802
      %v2814 = vunpack.c.l.b16 %v2803
      %v2815 = vunpack.c.h.b16 %v2803
      %v2816 = vunpack.c.l.b16 %v2804
      %v2817 = vunpack.c.h.b16 %v2804
      %v2818 = vunpack.c.l.b16 %v2805
      %v2819 = vunpack.c.h.b16 %v2805
      %v2820 = vunpack.c.l.b16 %v2806
      %v2821 = vpack.c.b16 %v2812, %v2812
      %v2822 = vpack.c.b16 %v2813, %v2813
      %v2823 = vpack.c.b16 %v2814, %v2814
      %v2824 = vpack.c.b16 %v2815, %v2815
      %v2825 = vpack.c.b16 %v2816, %v2816
      %v2826 = vpack.c.b16 %v2817, %v2817
      %v2827 = vpack.c.b16 %v2818, %v2818
      %v2828 = vpack.c.b16 %v2819, %v2819
      %v2829 = vpack.c.b16 %v2820, %v2820
      %2839 = vst [vmem:[%s224] sm:$0xf] %v2821
      %2840 = vst [vmem:[%s224 + $0x4] sm:$0xf] %v2822
      %2841 = vst [vmem:[%s224 + $0x8] sm:$0xf] %v2823
      %2842 = vst [vmem:[%s224 + $0xc] sm:$0xf] %v2824
      %2843 = vst [vmem:[%s224 + $0x10] sm:$0xf] %v2825
      %2844 = vst [vmem:[%s224 + $0x14] sm:$0xf] %v2826
      %2845 = vst [vmem:[%s224 + $0x18] sm:$0xf] %v2827
      %2846 = vst [vmem:[%s224 + $0x1c] sm:$0xf] %v2828
      %2847 = vst [vmem:[%s224 + $0x20] sm:$0xf] %v2829
      %p2848 = scmp.lt.s32.totalorder %s16, 1
      %s2849 = scalar_select %p2848, %s16, 1
      %s2850 = smul.addr %s2849, 9
      %s2851 = smul.addr %s2850, 4
      %s2852 = scalar_lea.vmem %s5, %s2851
      // Predicated region
      $region41: #{net_forward.2} parent=39 // pred_check
        %p2853 = pneg %p144
      $region42: #{net_forward.2} parent=39 // pred_check_branch
        %2855 = sbr.rel (%p2853) target = $region44
      $region43: #{net_forward.2} parent=39 // pred_region
        _
      $region44: #{net_forward.2} parent=39 // pred_fallthru
        _
    $region40: #{net_forward.2} parent=5 // pred_fallthru
      _
    %p2856 = scmp.le.s32.totalorder 2, %s11
    // Predicated region
    $region45: #{net_forward.2} parent=5 // pred_check
      %p2857 = pneg %p2856
    $region46: #{net_forward.2} parent=5 // pred_check_branch
      %2859 = sbr.rel (%p2857) target = $region48
    $region47: #{net_forward.2} parent=5 // pred_region
      %s2860 = ssub.s32 %s11, 2
      // Predicated region
      $region49: #{net_forward.2} parent=47 // pred_check
        %p2861 = pneg %p150
      $region50: #{net_forward.2} parent=47 // pred_check_branch
        %2863 = sbr.rel (%p2861) target = $region52
      $region51: #{net_forward.2} parent=47 // pred_region
        %p2864 = scmp.lt.s32.totalorder %s17, 1
        %s2865 = scalar_select %p2864, %s17, 1
        %s2866 = smul.addr %s2865, 9
        %s2867 = smul.addr %s2866, 4
        %s2868 = scalar_lea.vmem %s5, %s2867
      $region52: #{net_forward.2} parent=47 // pred_fallthru
        _
    $region48: #{net_forward.2} parent=5 // pred_fallthru
      _
  $region6: #{net_forward.2} parent=0 // loop_footer
    %s15 = sadd.s32 1, %s11
  $region7: #{net_forward.2} parent=0 // loop_footer_branch
    %10 = sbr.rel target = $region3
  $region8: #{net_forward.2} parent=0 // loop_exit
    _

// kernel: net_forward.3
$region0: #{net_forward.3}
  #allocation0 [shape = 'u32[]', space=smem, size = 0x4, offset = 0x4, fixed_abs, tag = 'smem constant byte address 0x4 - core index']
  #allocation1 [shape = 'u32[144,128]{1,0:T(1,128)}', space=vmem, size = 0x12000, scoped, tag = 'internal scratch']
  #allocation2 [shape = 'f32[2,128]{1,0:T(2,128)}', space=vmem, size = 0x400, scoped, tag = 'scratch operand']
  %s0 = inlined_call_operand.vmem [shape: bf16[2,9216], index: 0, kind: input, shape index: {}]
  %s1 = inlined_call_operand.vmem [shape: bf16[9216,128], index: 1, kind: input, shape index: {}]
  %s2 = inlined_call_operand.vmem [shape: f32[1,128], index: 2, kind: input, shape index: {}]
  %s3 = inlined_call_operand.vmem [shape: f32[128,10], index: 3, kind: input, shape index: {}]
  %s4 = inlined_call_operand.vmem [shape: f32[1,10], index: 4, kind: input, shape index: {}]
  %s5 = inlined_call_operand.hbm [shape: f32[2,128], index: 5, kind: output, shape index: {0}]
  %s6 = inlined_call_operand.hbm [shape: f32[2,10], index: 6, kind: output, shape index: {1}]
  %7 = xla_tuple %s5, %s6
  %s8 = sld [smem:[#allocation0]]
  $region69: #{net_forward.3} parent=0
    _
  %s10 = ssub.s32 1, %s8
  %s11 = scalar_select 0, %s10, %s8
  $region1: #{net_forward.3} parent=0
    #allocation3 [shape = 'u8[1024]{0}', space=vmem, size = 0x400, scoped, tag = 'output window, operand 0, single buffered']
    #allocation4 [shape = 's32[2]{0}', space=sflag, size = 0x8, scoped, tag = 'scoped memory for net_forward.3']
    #allocation5 [shape = 'u8[1024]{0}', space=vmem, size = 0x400, scoped, tag = 'output window, operand 1, single buffered']
    #allocation6 [shape = 's32[1]{0}', space=sflag, size = 0x4, scoped, tag = 'scoped memory for net_forward.3']
    %12 = vsyncpa [#allocation4], 0
    %13 = vsyncpa [#allocation6], 0
    loop: start=0, step=1, limit=4
    $region2: #{net_forward.3} parent=1 // loop_pre_header
      _
    $region3: #{net_forward.3} parent=1 // loop_header
      %s15 = sphi 0, %s19
      %p16 = scmp.ge.s32.totalorder %s15, 4
      %s25 = sphi 0, %s27
      %s28 = sphi 0, %s25
      %s29 = sphi 0, %s28
      %s45 = sphi 0, %s29
      %s51 = sphi 0, %s53
      %s54 = sphi 0, %s51
      %s55 = sphi 0, %s54
      %s71 = sphi 0, %s55
      %s75 = sphi 0, %s75
      %s77 = sphi 0, %s75
      %s78 = sphi 0, %s77
      %s92 = sphi 0, %s78
      %s96 = sphi 0, %s96
      %s98 = sphi 0, %s96
      %s99 = sphi 0, %s98
      %s113 = sphi 0, %s99
      %s117 = sphi 0, %s117
      %s119 = sphi 0, %s117
      %s120 = sphi 0, %s119
      %s134 = sphi 0, %s120
      %s138 = sphi 0, %s138
      %s140 = sphi 0, %s138
      %s141 = sphi 0, %s140
      %s155 = sphi 0, %s141
      %s159 = sphi 0, %s159
      %s161 = sphi 0, %s159
      %s162 = sphi 0, %s161
      %s176 = sphi 0, %s162
    $region4: #{net_forward.3} parent=1 // loop_header_branch
      %18 = sbr.rel (%p16) target = $region8
    $region5: #{net_forward.3} parent=1 // loop_body
      %s20 = ssub.s32 %s15, 1
      %s21 = ssub.s32 %s15, 2
      %s22 = sadd.s32 %s15, 1
      %s23 = ssub.s32 %s15, %s22
      %p24 = scmp.eq.s32.totalorder %s23, 0
      %s26 = sadd.s32 %s25, 1
      %s27 = scalar_select %p24, %s25, %s26
      %p30 = pneg %p24
      %p31 = scmp.eq.s32.totalorder %s15, 1
      %p32 = por %p30, %p31
      %p33 = scmp.ne.s32.totalorder %s25, %s28
      %p34 = scmp.eq.s32.totalorder %s15, 0
      %p35 = por %p33, %p34
      %p36 = scmp.ne.s32.totalorder %s25, %s28
      %p37 = scmp.eq.s32.totalorder %s20, 1
      %p38 = por %p36, %p37
      %p39 = scmp.ne.s32.totalorder %s28, %s29
      %p40 = scmp.eq.s32.totalorder %s20, 0
      %p41 = por %p39, %p40
      %p42 = scmp.ne.s32.totalorder %s28, %s29
      %p43 = scmp.eq.s32.totalorder %s21, 1
      %p44 = por %p42, %p43
      %p46 = scmp.ne.s32.totalorder %s29, %s45
      %p47 = scmp.eq.s32.totalorder %s21, 0
      %p48 = por %p46, %p47
      %s49 = ssub.s32 %s15, %s22
      %p50 = scmp.eq.s32.totalorder %s49, 0
      %s52 = sadd.s32 %s51, 1
      %s53 = scalar_select %p50, %s51, %s52
      %p56 = pneg %p50
      %p57 = scmp.eq.s32.totalorder %s15, 1
      %p58 = por %p56, %p57
      %p59 = scmp.ne.s32.totalorder %s51, %s54
      %p60 = scmp.eq.s32.totalorder %s15, 0
      %p61 = por %p59, %p60
      %p62 = scmp.ne.s32.totalorder %s51, %s54
      %p63 = scmp.eq.s32.totalorder %s20, 1
      %p64 = por %p62, %p63
      %p65 = scmp.ne.s32.totalorder %s54, %s55
      %p66 = scmp.eq.s32.totalorder %s20, 0
      %p67 = por %p65, %p66
      %p68 = scmp.ne.s32.totalorder %s54, %s55
      %p69 = scmp.eq.s32.totalorder %s21, 1
      %p70 = por %p68, %p69
      %p72 = scmp.ne.s32.totalorder %s55, %s71
      %p73 = scmp.eq.s32.totalorder %s21, 0
      %p74 = por %p72, %p73
      %s76 = sadd.s32 %s75, 1
      %p79 = scmp.eq.s32.totalorder %s15, 1
      %p80 = scmp.ne.s32.totalorder %s75, %s77
      %p81 = scmp.eq.s32.totalorder %s15, 0
      %p82 = por %p80, %p81
      %p83 = scmp.ne.s32.totalorder %s75, %s77
      %p84 = scmp.eq.s32.totalorder %s20, 1
      %p85 = por %p83, %p84
      %p86 = scmp.ne.s32.totalorder %s77, %s78
      %p87 = scmp.eq.s32.totalorder %s20, 0
      %p88 = por %p86, %p87
      %p89 = scmp.ne.s32.totalorder %s77, %s78
      %p90 = scmp.eq.s32.totalorder %s21, 1
      %p91 = por %p89, %p90
      %p93 = scmp.ne.s32.totalorder %s78, %s92
      %p94 = scmp.eq.s32.totalorder %s21, 0
      %p95 = por %p93, %p94
      %s97 = sadd.s32 %s96, 1
      %p100 = scmp.eq.s32.totalorder %s15, 1
      %p101 = scmp.ne.s32.totalorder %s96, %s98
      %p102 = scmp.eq.s32.totalorder %s15, 0
      %p103 = por %p101, %p102
      %p104 = scmp.ne.s32.totalorder %s96, %s98
      %p105 = scmp.eq.s32.totalorder %s20, 1
      %p106 = por %p104, %p105
      %p107 = scmp.ne.s32.totalorder %s98, %s99
      %p108 = scmp.eq.s32.totalorder %s20, 0
      %p109 = por %p107, %p108
      %p110 = scmp.ne.s32.totalorder %s98, %s99
      %p111 = scmp.eq.s32.totalorder %s21, 1
      %p112 = por %p110, %p111
      %p114 = scmp.ne.s32.totalorder %s99, %s113
      %p115 = scmp.eq.s32.totalorder %s21, 0
      %p116 = por %p114, %p115
      %s118 = sadd.s32 %s117, 1
      %p121 = scmp.eq.s32.totalorder %s15, 1
      %p122 = scmp.ne.s32.totalorder %s117, %s119
      %p123 = scmp.eq.s32.totalorder %s15, 0
      %p124 = por %p122, %p123
      %p125 = scmp.ne.s32.totalorder %s117, %s119
      %p126 = scmp.eq.s32.totalorder %s20, 1
      %p127 = por %p125, %p126
      %p128 = scmp.ne.s32.totalorder %s119, %s120
      %p129 = scmp.eq.s32.totalorder %s20, 0
      %p130 = por %p128, %p129
      %p131 = scmp.ne.s32.totalorder %s119, %s120
      %p132 = scmp.eq.s32.totalorder %s21, 1
      %p133 = por %p131, %p132
      %p135 = scmp.ne.s32.totalorder %s120, %s134
      %p136 = scmp.eq.s32.totalorder %s21, 0
      %p137 = por %p135, %p136
      %s139 = sadd.s32 %s138, 1
      %p142 = scmp.eq.s32.totalorder %s15, 1
      %p143 = scmp.ne.s32.totalorder %s138, %s140
      %p144 = scmp.eq.s32.totalorder %s15, 0
      %p145 = por %p143, %p144
      %p146 = scmp.ne.s32.totalorder %s138, %s140
      %p147 = scmp.eq.s32.totalorder %s20, 1
      %p148 = por %p146, %p147
      %p149 = scmp.ne.s32.totalorder %s140, %s141
      %p150 = scmp.eq.s32.totalorder %s20, 0
      %p151 = por %p149, %p150
      %p152 = scmp.ne.s32.totalorder %s140, %s141
      %p153 = scmp.eq.s32.totalorder %s21, 1
      %p154 = por %p152, %p153
      %p156 = scmp.ne.s32.totalorder %s141, %s155
      %p157 = scmp.eq.s32.totalorder %s21, 0
      %p158 = por %p156, %p157
      %s160 = sadd.s32 %s159, 1
      %p163 = scmp.eq.s32.totalorder %s15, 1
      %p164 = scmp.ne.s32.totalorder %s159, %s161
      %p165 = scmp.eq.s32.totalorder %s15, 0
      %p166 = por %p164, %p165
      %p167 = scmp.ne.s32.totalorder %s159, %s161
      %p168 = scmp.eq.s32.totalorder %s20, 1
      %p169 = por %p167, %p168
      %p170 = scmp.ne.s32.totalorder %s161, %s162
      %p171 = scmp.eq.s32.totalorder %s20, 0
      %p172 = por %p170, %p171
      %p173 = scmp.ne.s32.totalorder %s161, %s162
      %p174 = scmp.eq.s32.totalorder %s21, 1
      %p175 = por %p173, %p174
      %p177 = scmp.ne.s32.totalorder %s162, %s176
      %p178 = scmp.eq.s32.totalorder %s21, 0
      %p179 = por %p177, %p178
      %p180 = scmp.le.s32.totalorder 1, %s15
      %p181 = scmp.lt.s32.totalorder %s15, 3
      %p182 = pnand %p180, %p181
      %p183 = pneg %p182
      // Predicated region
      $region9: #{net_forward.3} parent=5 // pred_check
        _
      $region10: #{net_forward.3} parent=5 // pred_check_branch
        %185 = sbr.rel (%p182) target = $region12
      $region11: #{net_forward.3} parent=5 // pred_region
        %s186 = ssub.s32 %s15, 1
        // Predicated region
        $region13: #{net_forward.3} parent=11 // pred_check
          %p187 = pneg %p88
        $region14: #{net_forward.3} parent=11 // pred_check_branch
          %189 = sbr.rel (%p187) target = $region16
        $region15: #{net_forward.3} parent=11 // pred_region
          _
        $region16: #{net_forward.3} parent=11 // pred_fallthru
          _
        // Predicated region
        $region17: #{net_forward.3} parent=11 // pred_check
          %p190 = pneg %p109
        $region18: #{net_forward.3} parent=11 // pred_check_branch
          %192 = sbr.rel (%p190) target = $region20
        $region19: #{net_forward.3} parent=11 // pred_region
          _
        $region20: #{net_forward.3} parent=11 // pred_fallthru
          _
        // Predicated region
        $region21: #{net_forward.3} parent=11 // pred_check
          %p193 = pneg %p130
        $region22: #{net_forward.3} parent=11 // pred_check_branch
          %195 = sbr.rel (%p193) target = $region24
        $region23: #{net_forward.3} parent=11 // pred_region
          _
        $region24: #{net_forward.3} parent=11 // pred_fallthru
          _
      $region12: #{net_forward.3} parent=5 // pred_fallthru
        _
      %p196 = scmp.lt.s32.totalorder %s15, 2
      // Predicated region
      $region25: #{net_forward.3} parent=5 // pred_check
        %p197 = pneg %p196
      $region26: #{net_forward.3} parent=5 // pred_check_branch
        %199 = sbr.rel (%p197) target = $region28
      $region27: #{net_forward.3} parent=5 // pred_region
        // Predicated region
        $region29: #{net_forward.3} parent=27 // pred_check
          %p200 = pneg %p35
        $region30: #{net_forward.3} parent=27 // pred_check_branch
          %202 = sbr.rel (%p200) target = $region32
        $region31: #{net_forward.3} parent=27 // pred_region
          %s203 = smul.u32 36, %s15
          %p204 = scmp.lt.s32.totalorder %s203, 71
          %s205 = scalar_select %p204, %s203, 71
          %s206 = scalar_lea.vmem %s0, %s205
          %s207 = smul.u32 36, %s15
        $region32: #{net_forward.3} parent=27 // pred_fallthru
          _
        // Predicated region
        $region33: #{net_forward.3} parent=27 // pred_check
          %p208 = pneg %p61
        $region34: #{net_forward.3} parent=27 // pred_check_branch
          %210 = sbr.rel (%p208) target = $region36
        $region35: #{net_forward.3} parent=27 // pred_region
          %s211 = smul.u32 576, %s15
          %p212 = scmp.lt.s32.totalorder %s211, 1151
          %s213 = scalar_select %p212, %s211, 1151
          %s214 = smul.addr %s213, 4
          %s215 = scalar_lea.vmem %s1, %s214
          %s216 = smul.u32 576, %s15
        $region36: #{net_forward.3} parent=27 // pred_fallthru
          _
      $region28: #{net_forward.3} parent=5 // pred_fallthru
        _
      %p217 = scmp.le.s32.totalorder 1, %s15
      %p218 = scmp.lt.s32.totalorder %s15, 3
      %p219 = pnand %p217, %p218
      %p220 = pneg %p219
      // Predicated region
      $region37: #{net_forward.3} parent=5 // pred_check
        _
      $region38: #{net_forward.3} parent=5 // pred_check_branch
        %222 = sbr.rel (%p219) target = $region40
      $region39: #{net_forward.3} parent=5 // pred_region
        %s223 = ssub.s32 %s15, 1
        %s224 = smul.u32 36, %s20
        %p225 = scmp.lt.s32.totalorder %s224, 71
        %s226 = scalar_select %p225, %s224, 71
        %s227 = scalar_lea.vmem %s0, %s226
        %p228 = pneg %p41
        %p229 = pneg %p38
        %s230 = smul.u32 576, %s20
        %p231 = scmp.lt.s32.totalorder %s230, 1151
        %s232 = scalar_select %p231, %s230, 1151
        %s233 = smul.addr %s232, 4
        %s234 = scalar_lea.vmem %s1, %s233
        %p235 = pneg %p67
        %p236 = pneg %p64
        %p237 = pneg %p88
        %p238 = pneg %p85
        %p239 = pneg %p109
        %p240 = pneg %p106
        %p241 = pneg %p130
        %p242 = pneg %p127
        %p243 = pneg %p151
        %p244 = pneg %p148
        %p245 = pneg %p172
        %p246 = pneg %p169
        %s247 = smul.u32 36, %s20
        %p248 = scmp.lt.s32.totalorder %s247, 71
        %s249 = scalar_select %p248, %s247, 71
        %s250 = scalar_lea.vmem %s0, %s249
        %s251 = smul.u32 36, %s20
        %s252 = smul.u32 576, %s20
        %p253 = scmp.lt.s32.totalorder %s252, 1151
        %s254 = scalar_select %p253, %s252, 1151
        %s255 = smul.addr %s254, 4
        %s256 = scalar_lea.vmem %s1, %s255
        %s257 = smul.u32 576, %s20
        %p259 = scmp.eq.s32.totalorder %s20, 0
        // Predicated region
        $region41: #{net_forward.3} parent=39 // pred_check
          %p260 = pneg %p259
        $region42: #{net_forward.3} parent=39 // pred_check_branch
          %262 = sbr.rel (%p260) target = $region44
        $region43: #{net_forward.3} parent=39 // pred_region
          %263 = vst [vmem:[#allocation2] sm:$0x3] 0.0
        $region44: #{net_forward.3} parent=39 // pred_fallthru
          _
        %v264 = vld [vmem:[#allocation2] sm:$0x3]
        %v265 = vld [vmem:[%s250] sm:$0xff]
        %v266 = vld [vmem:[%s250 + $0x8] sm:$0xff]
        %v267 = vld [vmem:[%s250 + $0x10] sm:$0xff]
        %v268 = vld [vmem:[%s250 + $0x18] sm:$0xff]
        %v269 = vld [vmem:[%s250 + $0x20] sm:$0xf]
        %v270 = vld [vmem:[%s256] sm:$0xf]
        %v271 = vld [vmem:[%s256 + $0x4] sm:$0xf]
        %v272 = vld [vmem:[%s256 + $0x8] sm:$0xf]
        %v273 = vld [vmem:[%s256 + $0xc] sm:$0xf]
        %v274 = vld [vmem:[%s256 + $0x10] sm:$0xf]
        %v275 = vld [vmem:[%s256 + $0x14] sm:$0xf]
        %v276 = vld [vmem:[%s256 + $0x18] sm:$0xf]
        %v277 = vld [vmem:[%s256 + $0x1c] sm:$0xf]
        %v278 = vld [vmem:[%s256 + $0x20] sm:$0xf]
        %v279 = vld [vmem:[%s256 + $0x24] sm:$0xf]
        %v280 = vld [vmem:[%s256 + $0x28] sm:$0xf]
        %v281 = vld [vmem:[%s256 + $0x2c] sm:$0xf]
        %v282 = vld [vmem:[%s256 + $0x30] sm:$0xf]
        %v283 = vld [vmem:[%s256 + $0x34] sm:$0xf]
        %v284 = vld [vmem:[%s256 + $0x38] sm:$0xf]
        %v285 = vld [vmem:[%s256 + $0x3c] sm:$0xf]
        %v286 = vld [vmem:[%s256 + $0x40] sm:$0xf]
        %v287 = vld [vmem:[%s256 + $0x44] sm:$0xf]
        %v288 = vld [vmem:[%s256 + $0x48] sm:$0xf]
        %v289 = vld [vmem:[%s256 + $0x4c] sm:$0xf]
        %v290 = vld [vmem:[%s256 + $0x50] sm:$0xf]
        %v291 = vld [vmem:[%s256 + $0x54] sm:$0xf]
        %v292 = vld [vmem:[%s256 + $0x58] sm:$0xf]
        %v293 = vld [vmem:[%s256 + $0x5c] sm:$0xf]
        %v294 = vld [vmem:[%s256 + $0x60] sm:$0xf]
        %v295 = vld [vmem:[%s256 + $0x64] sm:$0xf]
        %v296 = vld [vmem:[%s256 + $0x68] sm:$0xf]
        %v297 = vld [vmem:[%s256 + $0x6c] sm:$0xf]
        %v298 = vld [vmem:[%s256 + $0x70] sm:$0xf]
        %v299 = vld [vmem:[%s256 + $0x74] sm:$0xf]
        %v300 = vld [vmem:[%s256 + $0x78] sm:$0xf]
        %v301 = vld [vmem:[%s256 + $0x7c] sm:$0xf]
        %v302 = vld [vmem:[%s256 + $0x80] sm:$0xf]
        %v303 = vld [vmem:[%s256 + $0x84] sm:$0xf]
        %v304 = vld [vmem:[%s256 + $0x88] sm:$0xf]
        %v305 = vld [vmem:[%s256 + $0x8c] sm:$0xf]
        %v306 = vld [vmem:[%s256 + $0x90] sm:$0xf]
        %v307 = vld [vmem:[%s256 + $0x94] sm:$0xf]
        %v308 = vld [vmem:[%s256 + $0x98] sm:$0xf]
        %v309 = vld [vmem:[%s256 + $0x9c] sm:$0xf]
        %v310 = vld [vmem:[%s256 + $0xa0] sm:$0xf]
        %v311 = vld [vmem:[%s256 + $0xa4] sm:$0xf]
        %v312 = vld [vmem:[%s256 + $0xa8] sm:$0xf]
        %v313 = vld [vmem:[%s256 + $0xac] sm:$0xf]
        %v314 = vld [vmem:[%s256 + $0xb0] sm:$0xf]
        %v315 = vld [vmem:[%s256 + $0xb4] sm:$0xf]
        %v316 = vld [vmem:[%s256 + $0xb8] sm:$0xf]
        %v317 = vld [vmem:[%s256 + $0xbc] sm:$0xf]
        %v318 = vld [vmem:[%s256 + $0xc0] sm:$0xf]
        %v319 = vld [vmem:[%s256 + $0xc4] sm:$0xf]
        %v320 = vld [vmem:[%s256 + $0xc8] sm:$0xf]
        %v321 = vld [vmem:[%s256 + $0xcc] sm:$0xf]
        %v322 = vld [vmem:[%s256 + $0xd0] sm:$0xf]
        %v323 = vld [vmem:[%s256 + $0xd4] sm:$0xf]
        %v324 = vld [vmem:[%s256 + $0xd8] sm:$0xf]
        %v325 = vld [vmem:[%s256 + $0xdc] sm:$0xf]
        %v326 = vld [vmem:[%s256 + $0xe0] sm:$0xf]
        %v327 = vld [vmem:[%s256 + $0xe4] sm:$0xf]
        %v328 = vld [vmem:[%s256 + $0xe8] sm:$0xf]
        %v329 = vld [vmem:[%s256 + $0xec] sm:$0xf]
        %v330 = vld [vmem:[%s256 + $0xf0] sm:$0xf]
        %v331 = vld [vmem:[%s256 + $0xf4] sm:$0xf]
        %v332 = vld [vmem:[%s256 + $0xf8] sm:$0xf]
        %v333 = vld [vmem:[%s256 + $0xfc] sm:$0xf]
        %v334 = vld [vmem:[%s256 + $0x100] sm:$0xf]
        %v335 = vld [vmem:[%s256 + $0x104] sm:$0xf]
        %v336 = vld [vmem:[%s256 + $0x108] sm:$0xf]
        %v337 = vld [vmem:[%s256 + $0x10c] sm:$0xf]
        %v338 = vld [vmem:[%s256 + $0x110] sm:$0xf]
        %v339 = vld [vmem:[%s256 + $0x114] sm:$0xf]
        %v340 = vld [vmem:[%s256 + $0x118] sm:$0xf]
        %v341 = vld [vmem:[%s256 + $0x11c] sm:$0xf]
        %v342 = vld [vmem:[%s256 + $0x120] sm:$0xf]
        %v343 = vld [vmem:[%s256 + $0x124] sm:$0xf]
        %v344 = vld [vmem:[%s256 + $0x128] sm:$0xf]
        %v345 = vld [vmem:[%s256 + $0x12c] sm:$0xf]
        %v346 = vld [vmem:[%s256 + $0x130] sm:$0xf]
        %v347 = vld [vmem:[%s256 + $0x134] sm:$0xf]
        %v348 = vld [vmem:[%s256 + $0x138] sm:$0xf]
        %v349 = vld [vmem:[%s256 + $0x13c] sm:$0xf]
        %v350 = vld [vmem:[%s256 + $0x140] sm:$0xf]
        %v351 = vld [vmem:[%s256 + $0x144] sm:$0xf]
        %v352 = vld [vmem:[%s256 + $0x148] sm:$0xf]
        %v353 = vld [vmem:[%s256 + $0x14c] sm:$0xf]
        %v354 = vld [vmem:[%s256 + $0x150] sm:$0xf]
        %v355 = vld [vmem:[%s256 + $0x154] sm:$0xf]
        %v356 = vld [vmem:[%s256 + $0x158] sm:$0xf]
        %v357 = vld [vmem:[%s256 + $0x15c] sm:$0xf]
        %v358 = vld [vmem:[%s256 + $0x160] sm:$0xf]
        %v359 = vld [vmem:[%s256 + $0x164] sm:$0xf]
        %v360 = vld [vmem:[%s256 + $0x168] sm:$0xf]
        %v361 = vld [vmem:[%s256 + $0x16c] sm:$0xf]
        %v362 = vld [vmem:[%s256 + $0x170] sm:$0xf]
        %v363 = vld [vmem:[%s256 + $0x174] sm:$0xf]
        %v364 = vld [vmem:[%s256 + $0x178] sm:$0xf]
        %v365 = vld [vmem:[%s256 + $0x17c] sm:$0xf]
        %v366 = vld [vmem:[%s256 + $0x180] sm:$0xf]
        %v367 = vld [vmem:[%s256 + $0x184] sm:$0xf]
        %v368 = vld [vmem:[%s256 + $0x188] sm:$0xf]
        %v369 = vld [vmem:[%s256 + $0x18c] sm:$0xf]
        %v370 = vld [vmem:[%s256 + $0x190] sm:$0xf]
        %v371 = vld [vmem:[%s256 + $0x194] sm:$0xf]
        %v372 = vld [vmem:[%s256 + $0x198] sm:$0xf]
        %v373 = vld [vmem:[%s256 + $0x19c] sm:$0xf]
        %v374 = vld [vmem:[%s256 + $0x1a0] sm:$0xf]
        %v375 = vld [vmem:[%s256 + $0x1a4] sm:$0xf]
        %v376 = vld [vmem:[%s256 + $0x1a8] sm:$0xf]
        %v377 = vld [vmem:[%s256 + $0x1ac] sm:$0xf]
        %v378 = vld [vmem:[%s256 + $0x1b0] sm:$0xf]
        %v379 = vld [vmem:[%s256 + $0x1b4] sm:$0xf]
        %v380 = vld [vmem:[%s256 + $0x1b8] sm:$0xf]
        %v381 = vld [vmem:[%s256 + $0x1bc] sm:$0xf]
        %v382 = vld [vmem:[%s256 + $0x1c0] sm:$0xf]
        %v383 = vld [vmem:[%s256 + $0x1c4] sm:$0xf]
        %v384 = vld [vmem:[%s256 + $0x1c8] sm:$0xf]
        %v385 = vld [vmem:[%s256 + $0x1cc] sm:$0xf]
        %v386 = vld [vmem:[%s256 + $0x1d0] sm:$0xf]
        %v387 = vld [vmem:[%s256 + $0x1d4] sm:$0xf]
        %v388 = vld [vmem:[%s256 + $0x1d8] sm:$0xf]
        %v389 = vld [vmem:[%s256 + $0x1dc] sm:$0xf]
        %v390 = vld [vmem:[%s256 + $0x1e0] sm:$0xf]
        %v391 = vld [vmem:[%s256 + $0x1e4] sm:$0xf]
        %v392 = vld [vmem:[%s256 + $0x1e8] sm:$0xf]
        %v393 = vld [vmem:[%s256 + $0x1ec] sm:$0xf]
        %v394 = vld [vmem:[%s256 + $0x1f0] sm:$0xf]
        %v395 = vld [vmem:[%s256 + $0x1f4] sm:$0xf]
        %v396 = vld [vmem:[%s256 + $0x1f8] sm:$0xf]
        %v397 = vld [vmem:[%s256 + $0x1fc] sm:$0xf]
        %v398 = vld [vmem:[%s256 + $0x200] sm:$0xf]
        %v399 = vld [vmem:[%s256 + $0x204] sm:$0xf]
        %v400 = vld [vmem:[%s256 + $0x208] sm:$0xf]
        %v401 = vld [vmem:[%s256 + $0x20c] sm:$0xf]
        %v402 = vld [vmem:[%s256 + $0x210] sm:$0xf]
        %v403 = vld [vmem:[%s256 + $0x214] sm:$0xf]
        %v404 = vld [vmem:[%s256 + $0x218] sm:$0xf]
        %v405 = vld [vmem:[%s256 + $0x21c] sm:$0xf]
        %v406 = vld [vmem:[%s256 + $0x220] sm:$0xf]
        %v407 = vld [vmem:[%s256 + $0x224] sm:$0xf]
        %v408 = vld [vmem:[%s256 + $0x228] sm:$0xf]
        %v409 = vld [vmem:[%s256 + $0x22c] sm:$0xf]
        %v410 = vld [vmem:[%s256 + $0x230] sm:$0xf]
        %v411 = vld [vmem:[%s256 + $0x234] sm:$0xf]
        %v412 = vld [vmem:[%s256 + $0x238] sm:$0xf]
        %v413 = vld [vmem:[%s256 + $0x23c] sm:$0xf]
        %v414 = vld [vmem:[%s256 + $0x240] sm:$0xf]
        %v415 = vld [vmem:[%s256 + $0x244] sm:$0xf]
        %v416 = vld [vmem:[%s256 + $0x248] sm:$0xf]
        %v417 = vld [vmem:[%s256 + $0x24c] sm:$0xf]
        %v418 = vld [vmem:[%s256 + $0x250] sm:$0xf]
        %v419 = vld [vmem:[%s256 + $0x254] sm:$0xf]
        %v420 = vld [vmem:[%s256 + $0x258] sm:$0xf]
        %v421 = vld [vmem:[%s256 + $0x25c] sm:$0xf]
        %v422 = vld [vmem:[%s256 + $0x260] sm:$0xf]
        %v423 = vld [vmem:[%s256 + $0x264] sm:$0xf]
        %v424 = vld [vmem:[%s256 + $0x268] sm:$0xf]
        %v425 = vld [vmem:[%s256 + $0x26c] sm:$0xf]
        %v426 = vld [vmem:[%s256 + $0x270] sm:$0xf]
        %v427 = vld [vmem:[%s256 + $0x274] sm:$0xf]
        %v428 = vld [vmem:[%s256 + $0x278] sm:$0xf]
        %v429 = vld [vmem:[%s256 + $0x27c] sm:$0xf]
        %v430 = vld [vmem:[%s256 + $0x280] sm:$0xf]
        %v431 = vld [vmem:[%s256 + $0x284] sm:$0xf]
        %v432 = vld [vmem:[%s256 + $0x288] sm:$0xf]
        %v433 = vld [vmem:[%s256 + $0x28c] sm:$0xf]
        %v434 = vld [vmem:[%s256 + $0x290] sm:$0xf]
        %v435 = vld [vmem:[%s256 + $0x294] sm:$0xf]
        %v436 = vld [vmem:[%s256 + $0x298] sm:$0xf]
        %v437 = vld [vmem:[%s256 + $0x29c] sm:$0xf]
        %v438 = vld [vmem:[%s256 + $0x2a0] sm:$0xf]
        %v439 = vld [vmem:[%s256 + $0x2a4] sm:$0xf]
        %v440 = vld [vmem:[%s256 + $0x2a8] sm:$0xf]
        %v441 = vld [vmem:[%s256 + $0x2ac] sm:$0xf]
        %v442 = vld [vmem:[%s256 + $0x2b0] sm:$0xf]
        %v443 = vld [vmem:[%s256 + $0x2b4] sm:$0xf]
        %v444 = vld [vmem:[%s256 + $0x2b8] sm:$0xf]
        %v445 = vld [vmem:[%s256 + $0x2bc] sm:$0xf]
        %v446 = vld [vmem:[%s256 + $0x2c0] sm:$0xf]
        %v447 = vld [vmem:[%s256 + $0x2c4] sm:$0xf]
        %v448 = vld [vmem:[%s256 + $0x2c8] sm:$0xf]
        %v449 = vld [vmem:[%s256 + $0x2cc] sm:$0xf]
        %v450 = vld [vmem:[%s256 + $0x2d0] sm:$0xf]
        %v451 = vld [vmem:[%s256 + $0x2d4] sm:$0xf]
        %v452 = vld [vmem:[%s256 + $0x2d8] sm:$0xf]
        %v453 = vld [vmem:[%s256 + $0x2dc] sm:$0xf]
        %v454 = vld [vmem:[%s256 + $0x2e0] sm:$0xf]
        %v455 = vld [vmem:[%s256 + $0x2e4] sm:$0xf]
        %v456 = vld [vmem:[%s256 + $0x2e8] sm:$0xf]
        %v457 = vld [vmem:[%s256 + $0x2ec] sm:$0xf]
        %v458 = vld [vmem:[%s256 + $0x2f0] sm:$0xf]
        %v459 = vld [vmem:[%s256 + $0x2f4] sm:$0xf]
        %v460 = vld [vmem:[%s256 + $0x2f8] sm:$0xf]
        %v461 = vld [vmem:[%s256 + $0x2fc] sm:$0xf]
        %v462 = vld [vmem:[%s256 + $0x300] sm:$0xf]
        %v463 = vld [vmem:[%s256 + $0x304] sm:$0xf]
        %v464 = vld [vmem:[%s256 + $0x308] sm:$0xf]
        %v465 = vld [vmem:[%s256 + $0x30c] sm:$0xf]
        %v466 = vld [vmem:[%s256 + $0x310] sm:$0xf]
        %v467 = vld [vmem:[%s256 + $0x314] sm:$0xf]
        %v468 = vld [vmem:[%s256 + $0x318] sm:$0xf]
        %v469 = vld [vmem:[%s256 + $0x31c] sm:$0xf]
        %v470 = vld [vmem:[%s256 + $0x320] sm:$0xf]
        %v471 = vld [vmem:[%s256 + $0x324] sm:$0xf]
        %v472 = vld [vmem:[%s256 + $0x328] sm:$0xf]
        %v473 = vld [vmem:[%s256 + $0x32c] sm:$0xf]
        %v474 = vld [vmem:[%s256 + $0x330] sm:$0xf]
        %v475 = vld [vmem:[%s256 + $0x334] sm:$0xf]
        %v476 = vld [vmem:[%s256 + $0x338] sm:$0xf]
        %v477 = vld [vmem:[%s256 + $0x33c] sm:$0xf]
        %v478 = vld [vmem:[%s256 + $0x340] sm:$0xf]
        %v479 = vld [vmem:[%s256 + $0x344] sm:$0xf]
        %v480 = vld [vmem:[%s256 + $0x348] sm:$0xf]
        %v481 = vld [vmem:[%s256 + $0x34c] sm:$0xf]
        %v482 = vld [vmem:[%s256 + $0x350] sm:$0xf]
        %v483 = vld [vmem:[%s256 + $0x354] sm:$0xf]
        %v484 = vld [vmem:[%s256 + $0x358] sm:$0xf]
        %v485 = vld [vmem:[%s256 + $0x35c] sm:$0xf]
        %v486 = vld [vmem:[%s256 + $0x360] sm:$0xf]
        %v487 = vld [vmem:[%s256 + $0x364] sm:$0xf]
        %v488 = vld [vmem:[%s256 + $0x368] sm:$0xf]
        %v489 = vld [vmem:[%s256 + $0x36c] sm:$0xf]
        %v490 = vld [vmem:[%s256 + $0x370] sm:$0xf]
        %v491 = vld [vmem:[%s256 + $0x374] sm:$0xf]
        %v492 = vld [vmem:[%s256 + $0x378] sm:$0xf]
        %v493 = vld [vmem:[%s256 + $0x37c] sm:$0xf]
        %v494 = vld [vmem:[%s256 + $0x380] sm:$0xf]
        %v495 = vld [vmem:[%s256 + $0x384] sm:$0xf]
        %v496 = vld [vmem:[%s256 + $0x388] sm:$0xf]
        %v497 = vld [vmem:[%s256 + $0x38c] sm:$0xf]
        %v498 = vld [vmem:[%s256 + $0x390] sm:$0xf]
        %v499 = vld [vmem:[%s256 + $0x394] sm:$0xf]
        %v500 = vld [vmem:[%s256 + $0x398] sm:$0xf]
        %v501 = vld [vmem:[%s256 + $0x39c] sm:$0xf]
        %v502 = vld [vmem:[%s256 + $0x3a0] sm:$0xf]
        %v503 = vld [vmem:[%s256 + $0x3a4] sm:$0xf]
        %v504 = vld [vmem:[%s256 + $0x3a8] sm:$0xf]
        %v505 = vld [vmem:[%s256 + $0x3ac] sm:$0xf]
        %v506 = vld [vmem:[%s256 + $0x3b0] sm:$0xf]
        %v507 = vld [vmem:[%s256 + $0x3b4] sm:$0xf]
        %v508 = vld [vmem:[%s256 + $0x3b8] sm:$0xf]
        %v509 = vld [vmem:[%s256 + $0x3bc] sm:$0xf]
        %v510 = vld [vmem:[%s256 + $0x3c0] sm:$0xf]
        %v511 = vld [vmem:[%s256 + $0x3c4] sm:$0xf]
        %v512 = vld [vmem:[%s256 + $0x3c8] sm:$0xf]
        %v513 = vld [vmem:[%s256 + $0x3cc] sm:$0xf]
        %v514 = vld [vmem:[%s256 + $0x3d0] sm:$0xf]
        %v515 = vld [vmem:[%s256 + $0x3d4] sm:$0xf]
        %v516 = vld [vmem:[%s256 + $0x3d8] sm:$0xf]
        %v517 = vld [vmem:[%s256 + $0x3dc] sm:$0xf]
        %v518 = vld [vmem:[%s256 + $0x3e0] sm:$0xf]
        %v519 = vld [vmem:[%s256 + $0x3e4] sm:$0xf]
        %v520 = vld [vmem:[%s256 + $0x3e8] sm:$0xf]
        %v521 = vld [vmem:[%s256 + $0x3ec] sm:$0xf]
        %v522 = vld [vmem:[%s256 + $0x3f0] sm:$0xf]
        %v523 = vld [vmem:[%s256 + $0x3f4] sm:$0xf]
        %v524 = vld [vmem:[%s256 + $0x3f8] sm:$0xf]
        %v525 = vld [vmem:[%s256 + $0x3fc] sm:$0xf]
        %v526 = vld [vmem:[%s256 + $0x400] sm:$0xf]
        %v527 = vld [vmem:[%s256 + $0x404] sm:$0xf]
        %v528 = vld [vmem:[%s256 + $0x408] sm:$0xf]
        %v529 = vld [vmem:[%s256 + $0x40c] sm:$0xf]
        %v530 = vld [vmem:[%s256 + $0x410] sm:$0xf]
        %v531 = vld [vmem:[%s256 + $0x414] sm:$0xf]
        %v532 = vld [vmem:[%s256 + $0x418] sm:$0xf]
        %v533 = vld [vmem:[%s256 + $0x41c] sm:$0xf]
        %v534 = vld [vmem:[%s256 + $0x420] sm:$0xf]
        %v535 = vld [vmem:[%s256 + $0x424] sm:$0xf]
        %v536 = vld [vmem:[%s256 + $0x428] sm:$0xf]
        %v537 = vld [vmem:[%s256 + $0x42c] sm:$0xf]
        %v538 = vld [vmem:[%s256 + $0x430] sm:$0xf]
        %v539 = vld [vmem:[%s256 + $0x434] sm:$0xf]
        %v540 = vld [vmem:[%s256 + $0x438] sm:$0xf]
        %v541 = vld [vmem:[%s256 + $0x43c] sm:$0xf]
        %v542 = vld [vmem:[%s256 + $0x440] sm:$0xf]
        %v543 = vld [vmem:[%s256 + $0x444] sm:$0xf]
        %v544 = vld [vmem:[%s256 + $0x448] sm:$0xf]
        %v545 = vld [vmem:[%s256 + $0x44c] sm:$0xf]
        %v546 = vld [vmem:[%s256 + $0x450] sm:$0xf]
        %v547 = vld [vmem:[%s256 + $0x454] sm:$0xf]
        %v548 = vld [vmem:[%s256 + $0x458] sm:$0xf]
        %v549 = vld [vmem:[%s256 + $0x45c] sm:$0xf]
        %v550 = vld [vmem:[%s256 + $0x460] sm:$0xf]
        %v551 = vld [vmem:[%s256 + $0x464] sm:$0xf]
        %v552 = vld [vmem:[%s256 + $0x468] sm:$0xf]
        %v553 = vld [vmem:[%s256 + $0x46c] sm:$0xf]
        %v554 = vld [vmem:[%s256 + $0x470] sm:$0xf]
        %v555 = vld [vmem:[%s256 + $0x474] sm:$0xf]
        %v556 = vld [vmem:[%s256 + $0x478] sm:$0xf]
        %v557 = vld [vmem:[%s256 + $0x47c] sm:$0xf]
        %v558 = vld [vmem:[%s256 + $0x480] sm:$0xf]
        %v559 = vld [vmem:[%s256 + $0x484] sm:$0xf]
        %v560 = vld [vmem:[%s256 + $0x488] sm:$0xf]
        %v561 = vld [vmem:[%s256 + $0x48c] sm:$0xf]
        %v562 = vld [vmem:[%s256 + $0x490] sm:$0xf]
        %v563 = vld [vmem:[%s256 + $0x494] sm:$0xf]
        %v564 = vld [vmem:[%s256 + $0x498] sm:$0xf]
        %v565 = vld [vmem:[%s256 + $0x49c] sm:$0xf]
        %v566 = vld [vmem:[%s256 + $0x4a0] sm:$0xf]
        %v567 = vld [vmem:[%s256 + $0x4a4] sm:$0xf]
        %v568 = vld [vmem:[%s256 + $0x4a8] sm:$0xf]
        %v569 = vld [vmem:[%s256 + $0x4ac] sm:$0xf]
        %v570 = vld [vmem:[%s256 + $0x4b0] sm:$0xf]
        %v571 = vld [vmem:[%s256 + $0x4b4] sm:$0xf]
        %v572 = vld [vmem:[%s256 + $0x4b8] sm:$0xf]
        %v573 = vld [vmem:[%s256 + $0x4bc] sm:$0xf]
        %v574 = vld [vmem:[%s256 + $0x4c0] sm:$0xf]
        %v575 = vld [vmem:[%s256 + $0x4c4] sm:$0xf]
        %v576 = vld [vmem:[%s256 + $0x4c8] sm:$0xf]
        %v577 = vld [vmem:[%s256 + $0x4cc] sm:$0xf]
        %v578 = vld [vmem:[%s256 + $0x4d0] sm:$0xf]
        %v579 = vld [vmem:[%s256 + $0x4d4] sm:$0xf]
        %v580 = vld [vmem:[%s256 + $0x4d8] sm:$0xf]
        %v581 = vld [vmem:[%s256 + $0x4dc] sm:$0xf]
        %v582 = vld [vmem:[%s256 + $0x4e0] sm:$0xf]
        %v583 = vld [vmem:[%s256 + $0x4e4] sm:$0xf]
        %v584 = vld [vmem:[%s256 + $0x4e8] sm:$0xf]
        %v585 = vld [vmem:[%s256 + $0x4ec] sm:$0xf]
        %v586 = vld [vmem:[%s256 + $0x4f0] sm:$0xf]
        %v587 = vld [vmem:[%s256 + $0x4f4] sm:$0xf]
        %v588 = vld [vmem:[%s256 + $0x4f8] sm:$0xf]
        %v589 = vld [vmem:[%s256 + $0x4fc] sm:$0xf]
        %v590 = vld [vmem:[%s256 + $0x500] sm:$0xf]
        %v591 = vld [vmem:[%s256 + $0x504] sm:$0xf]
        %v592 = vld [vmem:[%s256 + $0x508] sm:$0xf]
        %v593 = vld [vmem:[%s256 + $0x50c] sm:$0xf]
        %v594 = vld [vmem:[%s256 + $0x510] sm:$0xf]
        %v595 = vld [vmem:[%s256 + $0x514] sm:$0xf]
        %v596 = vld [vmem:[%s256 + $0x518] sm:$0xf]
        %v597 = vld [vmem:[%s256 + $0x51c] sm:$0xf]
        %v598 = vld [vmem:[%s256 + $0x520] sm:$0xf]
        %v599 = vld [vmem:[%s256 + $0x524] sm:$0xf]
        %v600 = vld [vmem:[%s256 + $0x528] sm:$0xf]
        %v601 = vld [vmem:[%s256 + $0x52c] sm:$0xf]
        %v602 = vld [vmem:[%s256 + $0x530] sm:$0xf]
        %v603 = vld [vmem:[%s256 + $0x534] sm:$0xf]
        %v604 = vld [vmem:[%s256 + $0x538] sm:$0xf]
        %v605 = vld [vmem:[%s256 + $0x53c] sm:$0xf]
        %v606 = vld [vmem:[%s256 + $0x540] sm:$0xf]
        %v607 = vld [vmem:[%s256 + $0x544] sm:$0xf]
        %v608 = vld [vmem:[%s256 + $0x548] sm:$0xf]
        %v609 = vld [vmem:[%s256 + $0x54c] sm:$0xf]
        %v610 = vld [vmem:[%s256 + $0x550] sm:$0xf]
        %v611 = vld [vmem:[%s256 + $0x554] sm:$0xf]
        %v612 = vld [vmem:[%s256 + $0x558] sm:$0xf]
        %v613 = vld [vmem:[%s256 + $0x55c] sm:$0xf]
        %v614 = vld [vmem:[%s256 + $0x560] sm:$0xf]
        %v615 = vld [vmem:[%s256 + $0x564] sm:$0xf]
        %v616 = vld [vmem:[%s256 + $0x568] sm:$0xf]
        %v617 = vld [vmem:[%s256 + $0x56c] sm:$0xf]
        %v618 = vld [vmem:[%s256 + $0x570] sm:$0xf]
        %v619 = vld [vmem:[%s256 + $0x574] sm:$0xf]
        %v620 = vld [vmem:[%s256 + $0x578] sm:$0xf]
        %v621 = vld [vmem:[%s256 + $0x57c] sm:$0xf]
        %v622 = vld [vmem:[%s256 + $0x580] sm:$0xf]
        %v623 = vld [vmem:[%s256 + $0x584] sm:$0xf]
        %v624 = vld [vmem:[%s256 + $0x588] sm:$0xf]
        %v625 = vld [vmem:[%s256 + $0x58c] sm:$0xf]
        %v626 = vld [vmem:[%s256 + $0x590] sm:$0xf]
        %v627 = vld [vmem:[%s256 + $0x594] sm:$0xf]
        %v628 = vld [vmem:[%s256 + $0x598] sm:$0xf]
        %v629 = vld [vmem:[%s256 + $0x59c] sm:$0xf]
        %v630 = vld [vmem:[%s256 + $0x5a0] sm:$0xf]
        %v631 = vld [vmem:[%s256 + $0x5a4] sm:$0xf]
        %v632 = vld [vmem:[%s256 + $0x5a8] sm:$0xf]
        %v633 = vld [vmem:[%s256 + $0x5ac] sm:$0xf]
        %v634 = vld [vmem:[%s256 + $0x5b0] sm:$0xf]
        %v635 = vld [vmem:[%s256 + $0x5b4] sm:$0xf]
        %v636 = vld [vmem:[%s256 + $0x5b8] sm:$0xf]
        %v637 = vld [vmem:[%s256 + $0x5bc] sm:$0xf]
        %v638 = vld [vmem:[%s256 + $0x5c0] sm:$0xf]
        %v639 = vld [vmem:[%s256 + $0x5c4] sm:$0xf]
        %v640 = vld [vmem:[%s256 + $0x5c8] sm:$0xf]
        %v641 = vld [vmem:[%s256 + $0x5cc] sm:$0xf]
        %v642 = vld [vmem:[%s256 + $0x5d0] sm:$0xf]
        %v643 = vld [vmem:[%s256 + $0x5d4] sm:$0xf]
        %v644 = vld [vmem:[%s256 + $0x5d8] sm:$0xf]
        %v645 = vld [vmem:[%s256 + $0x5dc] sm:$0xf]
        %v646 = vld [vmem:[%s256 + $0x5e0] sm:$0xf]
        %v647 = vld [vmem:[%s256 + $0x5e4] sm:$0xf]
        %v648 = vld [vmem:[%s256 + $0x5e8] sm:$0xf]
        %v649 = vld [vmem:[%s256 + $0x5ec] sm:$0xf]
        %v650 = vld [vmem:[%s256 + $0x5f0] sm:$0xf]
        %v651 = vld [vmem:[%s256 + $0x5f4] sm:$0xf]
        %v652 = vld [vmem:[%s256 + $0x5f8] sm:$0xf]
        %v653 = vld [vmem:[%s256 + $0x5fc] sm:$0xf]
        %v654 = vld [vmem:[%s256 + $0x600] sm:$0xf]
        %v655 = vld [vmem:[%s256 + $0x604] sm:$0xf]
        %v656 = vld [vmem:[%s256 + $0x608] sm:$0xf]
        %v657 = vld [vmem:[%s256 + $0x60c] sm:$0xf]
        %v658 = vld [vmem:[%s256 + $0x610] sm:$0xf]
        %v659 = vld [vmem:[%s256 + $0x614] sm:$0xf]
        %v660 = vld [vmem:[%s256 + $0x618] sm:$0xf]
        %v661 = vld [vmem:[%s256 + $0x61c] sm:$0xf]
        %v662 = vld [vmem:[%s256 + $0x620] sm:$0xf]
        %v663 = vld [vmem:[%s256 + $0x624] sm:$0xf]
        %v664 = vld [vmem:[%s256 + $0x628] sm:$0xf]
        %v665 = vld [vmem:[%s256 + $0x62c] sm:$0xf]
        %v666 = vld [vmem:[%s256 + $0x630] sm:$0xf]
        %v667 = vld [vmem:[%s256 + $0x634] sm:$0xf]
        %v668 = vld [vmem:[%s256 + $0x638] sm:$0xf]
        %v669 = vld [vmem:[%s256 + $0x63c] sm:$0xf]
        %v670 = vld [vmem:[%s256 + $0x640] sm:$0xf]
        %v671 = vld [vmem:[%s256 + $0x644] sm:$0xf]
        %v672 = vld [vmem:[%s256 + $0x648] sm:$0xf]
        %v673 = vld [vmem:[%s256 + $0x64c] sm:$0xf]
        %v674 = vld [vmem:[%s256 + $0x650] sm:$0xf]
        %v675 = vld [vmem:[%s256 + $0x654] sm:$0xf]
        %v676 = vld [vmem:[%s256 + $0x658] sm:$0xf]
        %v677 = vld [vmem:[%s256 + $0x65c] sm:$0xf]
        %v678 = vld [vmem:[%s256 + $0x660] sm:$0xf]
        %v679 = vld [vmem:[%s256 + $0x664] sm:$0xf]
        %v680 = vld [vmem:[%s256 + $0x668] sm:$0xf]
        %v681 = vld [vmem:[%s256 + $0x66c] sm:$0xf]
        %v682 = vld [vmem:[%s256 + $0x670] sm:$0xf]
        %v683 = vld [vmem:[%s256 + $0x674] sm:$0xf]
        %v684 = vld [vmem:[%s256 + $0x678] sm:$0xf]
        %v685 = vld [vmem:[%s256 + $0x67c] sm:$0xf]
        %v686 = vld [vmem:[%s256 + $0x680] sm:$0xf]
        %v687 = vld [vmem:[%s256 + $0x684] sm:$0xf]
        %v688 = vld [vmem:[%s256 + $0x688] sm:$0xf]
        %v689 = vld [vmem:[%s256 + $0x68c] sm:$0xf]
        %v690 = vld [vmem:[%s256 + $0x690] sm:$0xf]
        %v691 = vld [vmem:[%s256 + $0x694] sm:$0xf]
        %v692 = vld [vmem:[%s256 + $0x698] sm:$0xf]
        %v693 = vld [vmem:[%s256 + $0x69c] sm:$0xf]
        %v694 = vld [vmem:[%s256 + $0x6a0] sm:$0xf]
        %v695 = vld [vmem:[%s256 + $0x6a4] sm:$0xf]
        %v696 = vld [vmem:[%s256 + $0x6a8] sm:$0xf]
        %v697 = vld [vmem:[%s256 + $0x6ac] sm:$0xf]
        %v698 = vld [vmem:[%s256 + $0x6b0] sm:$0xf]
        %v699 = vld [vmem:[%s256 + $0x6b4] sm:$0xf]
        %v700 = vld [vmem:[%s256 + $0x6b8] sm:$0xf]
        %v701 = vld [vmem:[%s256 + $0x6bc] sm:$0xf]
        %v702 = vld [vmem:[%s256 + $0x6c0] sm:$0xf]
        %v703 = vld [vmem:[%s256 + $0x6c4] sm:$0xf]
        %v704 = vld [vmem:[%s256 + $0x6c8] sm:$0xf]
        %v705 = vld [vmem:[%s256 + $0x6cc] sm:$0xf]
        %v706 = vld [vmem:[%s256 + $0x6d0] sm:$0xf]
        %v707 = vld [vmem:[%s256 + $0x6d4] sm:$0xf]
        %v708 = vld [vmem:[%s256 + $0x6d8] sm:$0xf]
        %v709 = vld [vmem:[%s256 + $0x6dc] sm:$0xf]
        %v710 = vld [vmem:[%s256 + $0x6e0] sm:$0xf]
        %v711 = vld [vmem:[%s256 + $0x6e4] sm:$0xf]
        %v712 = vld [vmem:[%s256 + $0x6e8] sm:$0xf]
        %v713 = vld [vmem:[%s256 + $0x6ec] sm:$0xf]
        %v714 = vld [vmem:[%s256 + $0x6f0] sm:$0xf]
        %v715 = vld [vmem:[%s256 + $0x6f4] sm:$0xf]
        %v716 = vld [vmem:[%s256 + $0x6f8] sm:$0xf]
        %v717 = vld [vmem:[%s256 + $0x6fc] sm:$0xf]
        %v718 = vld [vmem:[%s256 + $0x700] sm:$0xf]
        %v719 = vld [vmem:[%s256 + $0x704] sm:$0xf]
        %v720 = vld [vmem:[%s256 + $0x708] sm:$0xf]
        %v721 = vld [vmem:[%s256 + $0x70c] sm:$0xf]
        %v722 = vld [vmem:[%s256 + $0x710] sm:$0xf]
        %v723 = vld [vmem:[%s256 + $0x714] sm:$0xf]
        %v724 = vld [vmem:[%s256 + $0x718] sm:$0xf]
        %v725 = vld [vmem:[%s256 + $0x71c] sm:$0xf]
        %v726 = vld [vmem:[%s256 + $0x720] sm:$0xf]
        %v727 = vld [vmem:[%s256 + $0x724] sm:$0xf]
        %v728 = vld [vmem:[%s256 + $0x728] sm:$0xf]
        %v729 = vld [vmem:[%s256 + $0x72c] sm:$0xf]
        %v730 = vld [vmem:[%s256 + $0x730] sm:$0xf]
        %v731 = vld [vmem:[%s256 + $0x734] sm:$0xf]
        %v732 = vld [vmem:[%s256 + $0x738] sm:$0xf]
        %v733 = vld [vmem:[%s256 + $0x73c] sm:$0xf]
        %v734 = vld [vmem:[%s256 + $0x740] sm:$0xf]
        %v735 = vld [vmem:[%s256 + $0x744] sm:$0xf]
        %v736 = vld [vmem:[%s256 + $0x748] sm:$0xf]
        %v737 = vld [vmem:[%s256 + $0x74c] sm:$0xf]
        %v738 = vld [vmem:[%s256 + $0x750] sm:$0xf]
        %v739 = vld [vmem:[%s256 + $0x754] sm:$0xf]
        %v740 = vld [vmem:[%s256 + $0x758] sm:$0xf]
        %v741 = vld [vmem:[%s256 + $0x75c] sm:$0xf]
        %v742 = vld [vmem:[%s256 + $0x760] sm:$0xf]
        %v743 = vld [vmem:[%s256 + $0x764] sm:$0xf]
        %v744 = vld [vmem:[%s256 + $0x768] sm:$0xf]
        %v745 = vld [vmem:[%s256 + $0x76c] sm:$0xf]
        %v746 = vld [vmem:[%s256 + $0x770] sm:$0xf]
        %v747 = vld [vmem:[%s256 + $0x774] sm:$0xf]
        %v748 = vld [vmem:[%s256 + $0x778] sm:$0xf]
        %v749 = vld [vmem:[%s256 + $0x77c] sm:$0xf]
        %v750 = vld [vmem:[%s256 + $0x780] sm:$0xf]
        %v751 = vld [vmem:[%s256 + $0x784] sm:$0xf]
        %v752 = vld [vmem:[%s256 + $0x788] sm:$0xf]
        %v753 = vld [vmem:[%s256 + $0x78c] sm:$0xf]
        %v754 = vld [vmem:[%s256 + $0x790] sm:$0xf]
        %v755 = vld [vmem:[%s256 + $0x794] sm:$0xf]
        %v756 = vld [vmem:[%s256 + $0x798] sm:$0xf]
        %v757 = vld [vmem:[%s256 + $0x79c] sm:$0xf]
        %v758 = vld [vmem:[%s256 + $0x7a0] sm:$0xf]
        %v759 = vld [vmem:[%s256 + $0x7a4] sm:$0xf]
        %v760 = vld [vmem:[%s256 + $0x7a8] sm:$0xf]
        %v761 = vld [vmem:[%s256 + $0x7ac] sm:$0xf]
        %v762 = vld [vmem:[%s256 + $0x7b0] sm:$0xf]
        %v763 = vld [vmem:[%s256 + $0x7b4] sm:$0xf]
        %v764 = vld [vmem:[%s256 + $0x7b8] sm:$0xf]
        %v765 = vld [vmem:[%s256 + $0x7bc] sm:$0xf]
        %v766 = vld [vmem:[%s256 + $0x7c0] sm:$0xf]
        %v767 = vld [vmem:[%s256 + $0x7c4] sm:$0xf]
        %v768 = vld [vmem:[%s256 + $0x7c8] sm:$0xf]
        %v769 = vld [vmem:[%s256 + $0x7cc] sm:$0xf]
        %v770 = vld [vmem:[%s256 + $0x7d0] sm:$0xf]
        %v771 = vld [vmem:[%s256 + $0x7d4] sm:$0xf]
        %v772 = vld [vmem:[%s256 + $0x7d8] sm:$0xf]
        %v773 = vld [vmem:[%s256 + $0x7dc] sm:$0xf]
        %v774 = vld [vmem:[%s256 + $0x7e0] sm:$0xf]
        %v775 = vld [vmem:[%s256 + $0x7e4] sm:$0xf]
        %v776 = vld [vmem:[%s256 + $0x7e8] sm:$0xf]
        %v777 = vld [vmem:[%s256 + $0x7ec] sm:$0xf]
        %v778 = vld [vmem:[%s256 + $0x7f0] sm:$0xf]
        %v779 = vld [vmem:[%s256 + $0x7f4] sm:$0xf]
        %v780 = vld [vmem:[%s256 + $0x7f8] sm:$0xf]
        %v781 = vld [vmem:[%s256 + $0x7fc] sm:$0xf]
        %v782 = vld [vmem:[%s256 + $0x800] sm:$0xf]
        %v783 = vld [vmem:[%s256 + $0x804] sm:$0xf]
        %v784 = vld [vmem:[%s256 + $0x808] sm:$0xf]
        %v785 = vld [vmem:[%s256 + $0x80c] sm:$0xf]
        %v786 = vld [vmem:[%s256 + $0x810] sm:$0xf]
        %v787 = vld [vmem:[%s256 + $0x814] sm:$0xf]
        %v788 = vld [vmem:[%s256 + $0x818] sm:$0xf]
        %v789 = vld [vmem:[%s256 + $0x81c] sm:$0xf]
        %v790 = vld [vmem:[%s256 + $0x820] sm:$0xf]
        %v791 = vld [vmem:[%s256 + $0x824] sm:$0xf]
        %v792 = vld [vmem:[%s256 + $0x828] sm:$0xf]
        %v793 = vld [vmem:[%s256 + $0x82c] sm:$0xf]
        %v794 = vld [vmem:[%s256 + $0x830] sm:$0xf]
        %v795 = vld [vmem:[%s256 + $0x834] sm:$0xf]
        %v796 = vld [vmem:[%s256 + $0x838] sm:$0xf]
        %v797 = vld [vmem:[%s256 + $0x83c] sm:$0xf]
        %v798 = vld [vmem:[%s256 + $0x840] sm:$0xf]
        %v799 = vld [vmem:[%s256 + $0x844] sm:$0xf]
        %v800 = vld [vmem:[%s256 + $0x848] sm:$0xf]
        %v801 = vld [vmem:[%s256 + $0x84c] sm:$0xf]
        %v802 = vld [vmem:[%s256 + $0x850] sm:$0xf]
        %v803 = vld [vmem:[%s256 + $0x854] sm:$0xf]
        %v804 = vld [vmem:[%s256 + $0x858] sm:$0xf]
        %v805 = vld [vmem:[%s256 + $0x85c] sm:$0xf]
        %v806 = vld [vmem:[%s256 + $0x860] sm:$0xf]
        %v807 = vld [vmem:[%s256 + $0x864] sm:$0xf]
        %v808 = vld [vmem:[%s256 + $0x868] sm:$0xf]
        %v809 = vld [vmem:[%s256 + $0x86c] sm:$0xf]
        %v810 = vld [vmem:[%s256 + $0x870] sm:$0xf]
        %v811 = vld [vmem:[%s256 + $0x874] sm:$0xf]
        %v812 = vld [vmem:[%s256 + $0x878] sm:$0xf]
        %v813 = vld [vmem:[%s256 + $0x87c] sm:$0xf]
        %v814 = vld [vmem:[%s256 + $0x880] sm:$0xf]
        %v815 = vld [vmem:[%s256 + $0x884] sm:$0xf]
        %v816 = vld [vmem:[%s256 + $0x888] sm:$0xf]
        %v817 = vld [vmem:[%s256 + $0x88c] sm:$0xf]
        %v818 = vld [vmem:[%s256 + $0x890] sm:$0xf]
        %v819 = vld [vmem:[%s256 + $0x894] sm:$0xf]
        %v820 = vld [vmem:[%s256 + $0x898] sm:$0xf]
        %v821 = vld [vmem:[%s256 + $0x89c] sm:$0xf]
        %v822 = vld [vmem:[%s256 + $0x8a0] sm:$0xf]
        %v823 = vld [vmem:[%s256 + $0x8a4] sm:$0xf]
        %v824 = vld [vmem:[%s256 + $0x8a8] sm:$0xf]
        %v825 = vld [vmem:[%s256 + $0x8ac] sm:$0xf]
        %v826 = vld [vmem:[%s256 + $0x8b0] sm:$0xf]
        %v827 = vld [vmem:[%s256 + $0x8b4] sm:$0xf]
        %v828 = vld [vmem:[%s256 + $0x8b8] sm:$0xf]
        %v829 = vld [vmem:[%s256 + $0x8bc] sm:$0xf]
        %v830 = vld [vmem:[%s256 + $0x8c0] sm:$0xf]
        %v831 = vld [vmem:[%s256 + $0x8c4] sm:$0xf]
        %v832 = vld [vmem:[%s256 + $0x8c8] sm:$0xf]
        %v833 = vld [vmem:[%s256 + $0x8cc] sm:$0xf]
        %v834 = vld [vmem:[%s256 + $0x8d0] sm:$0xf]
        %v835 = vld [vmem:[%s256 + $0x8d4] sm:$0xf]
        %v836 = vld [vmem:[%s256 + $0x8d8] sm:$0xf]
        %v837 = vld [vmem:[%s256 + $0x8dc] sm:$0xf]
        %v838 = vld [vmem:[%s256 + $0x8e0] sm:$0xf]
        %v839 = vld [vmem:[%s256 + $0x8e4] sm:$0xf]
        %v840 = vld [vmem:[%s256 + $0x8e8] sm:$0xf]
        %v841 = vld [vmem:[%s256 + $0x8ec] sm:$0xf]
        %v842 = vld [vmem:[%s256 + $0x8f0] sm:$0xf]
        %v843 = vld [vmem:[%s256 + $0x8f4] sm:$0xf]
        %v844 = vld [vmem:[%s256 + $0x8f8] sm:$0xf]
        %v845 = vld [vmem:[%s256 + $0x8fc] sm:$0xf]
        %v851 = vcombine.high %v265, %v265
        %v853 = vunpack.c.l.s4 1966171168
        %v854 = vunpack.c.0.s8 %v853
        %v855 = vlaneseq
        %v856 = vshrl.u32 %v855, 7
        %v857 = vsub.s32 %v854, %v856
        %v858 = vrot.slane %v265, %v857
        %v860 = vunpack.c.l.s4 1966171168
        %v861 = vunpack.c.0.s8 %v860
        %v862 = vlaneseq
        %v863 = vshrl.u32 %v862, 7
        %v864 = vsub.s32 %v861, %v863
        %v865 = vrot.slane %v851, %v864
        %v866 = vcombine.high %v858, %v858
        %v867 = vcombine.high %v865, %v865
        %v869 = vunpack.c.l.s4 1966171168
        %v870 = vunpack.c.0.s8 %v869
        %v871 = vlaneseq
        %v872 = vshrl.u32 %v871, 7
        %v873 = vsub.s32 %v870, %v872
        %v874 = vrot.slane %v858, %v873
        %v876 = vunpack.c.l.s4 1966171168
        %v877 = vunpack.c.0.s8 %v876
        %v878 = vlaneseq
        %v879 = vshrl.u32 %v878, 7
        %v880 = vsub.s32 %v877, %v879
        %v881 = vrot.slane %v865, %v880
        %v883 = vunpack.c.l.s4 1966171168
        %v884 = vunpack.c.0.s8 %v883
        %v885 = vlaneseq
        %v886 = vshrl.u32 %v885, 7
        %v887 = vsub.s32 %v884, %v886
        %v888 = vrot.slane %v866, %v887
        %v890 = vunpack.c.l.s4 1966171168
        %v891 = vunpack.c.0.s8 %v890
        %v892 = vlaneseq
        %v893 = vshrl.u32 %v892, 7
        %v894 = vsub.s32 %v891, %v893
        %v895 = vrot.slane %v867, %v894
        %v896 = vcombine.high %v874, %v874
        %v897 = vcombine.high %v881, %v881
        %v898 = vcombine.high %v888, %v888
        %v899 = vcombine.high %v895, %v895
        %v900 = vcombine.high %v266, %v266
        %v902 = vunpack.c.l.s4 1966171168
        %v903 = vunpack.c.0.s8 %v902
        %v904 = vlaneseq
        %v905 = vshrl.u32 %v904, 7
        %v906 = vsub.s32 %v903, %v905
        %v907 = vrot.slane %v266, %v906
        %v909 = vunpack.c.l.s4 1966171168
        %v910 = vunpack.c.0.s8 %v909
        %v911 = vlaneseq
        %v912 = vshrl.u32 %v911, 7
        %v913 = vsub.s32 %v910, %v912
        %v914 = vrot.slane %v900, %v913
        %v915 = vcombine.high %v907, %v907
        %v916 = vcombine.high %v914, %v914
        %v918 = vunpack.c.l.s4 1966171168
        %v919 = vunpack.c.0.s8 %v918
        %v920 = vlaneseq
        %v921 = vshrl.u32 %v920, 7
        %v922 = vsub.s32 %v919, %v921
        %v923 = vrot.slane %v907, %v922
        %v925 = vunpack.c.l.s4 1966171168
        %v926 = vunpack.c.0.s8 %v925
        %v927 = vlaneseq
        %v928 = vshrl.u32 %v927, 7
        %v929 = vsub.s32 %v926, %v928
        %v930 = vrot.slane %v914, %v929
        %v932 = vunpack.c.l.s4 1966171168
        %v933 = vunpack.c.0.s8 %v932
        %v934 = vlaneseq
        %v935 = vshrl.u32 %v934, 7
        %v936 = vsub.s32 %v933, %v935
        %v937 = vrot.slane %v915, %v936
        %v939 = vunpack.c.l.s4 1966171168
        %v940 = vunpack.c.0.s8 %v939
        %v941 = vlaneseq
        %v942 = vshrl.u32 %v941, 7
        %v943 = vsub.s32 %v940, %v942
        %v944 = vrot.slane %v916, %v943
        %v945 = vcombine.high %v923, %v923
        %v946 = vcombine.high %v930, %v930
        %v947 = vcombine.high %v937, %v937
        %v948 = vcombine.high %v944, %v944
        %v949 = vcombine.high %v267, %v267
        %v951 = vunpack.c.l.s4 1966171168
        %v952 = vunpack.c.0.s8 %v951
        %v953 = vlaneseq
        %v954 = vshrl.u32 %v953, 7
        %v955 = vsub.s32 %v952, %v954
        %v956 = vrot.slane %v267, %v955
        %v958 = vunpack.c.l.s4 1966171168
        %v959 = vunpack.c.0.s8 %v958
        %v960 = vlaneseq
        %v961 = vshrl.u32 %v960, 7
        %v962 = vsub.s32 %v959, %v961
        %v963 = vrot.slane %v949, %v962
        %v964 = vcombine.high %v956, %v956
        %v965 = vcombine.high %v963, %v963
        %v967 = vunpack.c.l.s4 1966171168
        %v968 = vunpack.c.0.s8 %v967
        %v969 = vlaneseq
        %v970 = vshrl.u32 %v969, 7
        %v971 = vsub.s32 %v968, %v970
        %v972 = vrot.slane %v956, %v971
        %v974 = vunpack.c.l.s4 1966171168
        %v975 = vunpack.c.0.s8 %v974
        %v976 = vlaneseq
        %v977 = vshrl.u32 %v976, 7
        %v978 = vsub.s32 %v975, %v977
        %v979 = vrot.slane %v963, %v978
        %v981 = vunpack.c.l.s4 1966171168
        %v982 = vunpack.c.0.s8 %v981
        %v983 = vlaneseq
        %v984 = vshrl.u32 %v983, 7
        %v985 = vsub.s32 %v982, %v984
        %v986 = vrot.slane %v964, %v985
        %v988 = vunpack.c.l.s4 1966171168
        %v989 = vunpack.c.0.s8 %v988
        %v990 = vlaneseq
        %v991 = vshrl.u32 %v990, 7
        %v992 = vsub.s32 %v989, %v991
        %v993 = vrot.slane %v965, %v992
        %v994 = vcombine.high %v972, %v972
        %v995 = vcombine.high %v979, %v979
        %v996 = vcombine.high %v986, %v986
        %v997 = vcombine.high %v993, %v993
        %v998 = vcombine.high %v268, %v268
        %v1000 = vunpack.c.l.s4 1966171168
        %v1001 = vunpack.c.0.s8 %v1000
        %v1002 = vlaneseq
        %v1003 = vshrl.u32 %v1002, 7
        %v1004 = vsub.s32 %v1001, %v1003
        %v1005 = vrot.slane %v268, %v1004
        %v1007 = vunpack.c.l.s4 1966171168
        %v1008 = vunpack.c.0.s8 %v1007
        %v1009 = vlaneseq
        %v1010 = vshrl.u32 %v1009, 7
        %v1011 = vsub.s32 %v1008, %v1010
        %v1012 = vrot.slane %v998, %v1011
        %v1013 = vcombine.high %v1005, %v1005
        %v1014 = vcombine.high %v1012, %v1012
        %v1016 = vunpack.c.l.s4 1966171168
        %v1017 = vunpack.c.0.s8 %v1016
        %v1018 = vlaneseq
        %v1019 = vshrl.u32 %v1018, 7
        %v1020 = vsub.s32 %v1017, %v1019
        %v1021 = vrot.slane %v1005, %v1020
        %v1023 = vunpack.c.l.s4 1966171168
        %v1024 = vunpack.c.0.s8 %v1023
        %v1025 = vlaneseq
        %v1026 = vshrl.u32 %v1025, 7
        %v1027 = vsub.s32 %v1024, %v1026
        %v1028 = vrot.slane %v1012, %v1027
        %v1030 = vunpack.c.l.s4 1966171168
        %v1031 = vunpack.c.0.s8 %v1030
        %v1032 = vlaneseq
        %v1033 = vshrl.u32 %v1032, 7
        %v1034 = vsub.s32 %v1031, %v1033
        %v1035 = vrot.slane %v1013, %v1034
        %v1037 = vunpack.c.l.s4 1966171168
        %v1038 = vunpack.c.0.s8 %v1037
        %v1039 = vlaneseq
        %v1040 = vshrl.u32 %v1039, 7
        %v1041 = vsub.s32 %v1038, %v1040
        %v1042 = vrot.slane %v1014, %v1041
        %v1043 = vcombine.high %v1021, %v1021
        %v1044 = vcombine.high %v1028, %v1028
        %v1045 = vcombine.high %v1035, %v1035
        %v1046 = vcombine.high %v1042, %v1042
        %v1048 = vunpack.c.l.s4 1966171168
        %v1049 = vunpack.c.0.s8 %v1048
        %v1050 = vlaneseq
        %v1051 = vshrl.u32 %v1050, 7
        %v1052 = vsub.s32 %v1049, %v1051
        %v1053 = vrot.slane %v269, %v1052
        %v1054 = vcombine.high %v1053, %v1053
        %v1056 = vunpack.c.l.s4 1966171168
        %v1057 = vunpack.c.0.s8 %v1056
        %v1058 = vlaneseq
        %v1059 = vshrl.u32 %v1058, 7
        %v1060 = vsub.s32 %v1057, %v1059
        %v1061 = vrot.slane %v1053, %v1060
        %v1063 = vunpack.c.l.s4 1966171168
        %v1064 = vunpack.c.0.s8 %v1063
        %v1065 = vlaneseq
        %v1066 = vshrl.u32 %v1065, 7
        %v1067 = vsub.s32 %v1064, %v1066
        %v1068 = vrot.slane %v1054, %v1067
        %v1069 = vcombine.high %v1061, %v1061
        %v1070 = vcombine.high %v1068, %v1068
        %v1683 = vunpack.c.l.b16 %v270
        %v1684 = vunpack.c.l.b16 %v271
        %v1685 = vunpack.c.l.b16 %v272
        %v1686 = vunpack.c.l.b16 %v273
        %v1687 = vunpack.c.l.b16 %v274
        %v1688 = vunpack.c.l.b16 %v275
        %v1689 = vunpack.c.l.b16 %v276
        %v1690 = vunpack.c.l.b16 %v277
        %v1691 = vunpack.c.l.b16 %v278
        %v1692 = vunpack.c.l.b16 %v279
        %v1693 = vunpack.c.l.b16 %v280
        %v1694 = vunpack.c.l.b16 %v281
        %v1695 = vunpack.c.l.b16 %v282
        %v1696 = vunpack.c.l.b16 %v283
        %v1697 = vunpack.c.l.b16 %v284
        %v1698 = vunpack.c.l.b16 %v285
        %v1699 = vunpack.c.l.b16 %v286
        %v1700 = vunpack.c.l.b16 %v287
        %v1701 = vunpack.c.l.b16 %v288
        %v1702 = vunpack.c.l.b16 %v289
        %v1703 = vunpack.c.l.b16 %v290
        %v1704 = vunpack.c.l.b16 %v291
        %v1705 = vunpack.c.l.b16 %v292
        %v1706 = vunpack.c.l.b16 %v293
        %v1707 = vunpack.c.l.b16 %v294
        %v1708 = vunpack.c.l.b16 %v295
        %v1709 = vunpack.c.l.b16 %v296
        %v1710 = vunpack.c.l.b16 %v297
        %v1711 = vunpack.c.l.b16 %v298
        %v1712 = vunpack.c.l.b16 %v299
        %v1713 = vunpack.c.l.b16 %v300
        %v1714 = vunpack.c.l.b16 %v301
        %v1715 = vunpack.c.l.b16 %v302
        %v1716 = vunpack.c.l.b16 %v303
        %v1717 = vunpack.c.l.b16 %v304
        %v1718 = vunpack.c.l.b16 %v305
        %v1719 = vunpack.c.l.b16 %v306
        %v1720 = vunpack.c.l.b16 %v307
        %v1721 = vunpack.c.l.b16 %v308
        %v1722 = vunpack.c.l.b16 %v309
        %v1723 = vunpack.c.l.b16 %v310
        %v1724 = vunpack.c.l.b16 %v311
        %v1725 = vunpack.c.l.b16 %v312
        %v1726 = vunpack.c.l.b16 %v313
        %v1727 = vunpack.c.l.b16 %v314
        %v1728 = vunpack.c.l.b16 %v315
        %v1729 = vunpack.c.l.b16 %v316
        %v1730 = vunpack.c.l.b16 %v317
        %v1731 = vunpack.c.l.b16 %v318
        %v1732 = vunpack.c.l.b16 %v319
        %v1733 = vunpack.c.l.b16 %v320
        %v1734 = vunpack.c.l.b16 %v321
        %v1735 = vunpack.c.l.b16 %v322
        %v1736 = vunpack.c.l.b16 %v323
        %v1737 = vunpack.c.l.b16 %v324
        %v1738 = vunpack.c.l.b16 %v325
        %v1739 = vunpack.c.l.b16 %v326
        %v1740 = vunpack.c.l.b16 %v327
        %v1741 = vunpack.c.l.b16 %v328
        %v1742 = vunpack.c.l.b16 %v329
        %v1743 = vunpack.c.l.b16 %v330
        %v1744 = vunpack.c.l.b16 %v331
        %v1745 = vunpack.c.l.b16 %v332
        %v1746 = vunpack.c.l.b16 %v333
        %v1747 = vunpack.c.l.b16 %v334
        %v1748 = vunpack.c.l.b16 %v335
        %v1749 = vunpack.c.l.b16 %v336
        %v1750 = vunpack.c.l.b16 %v337
        %v1751 = vunpack.c.l.b16 %v338
        %v1752 = vunpack.c.l.b16 %v339
        %v1753 = vunpack.c.l.b16 %v340
        %v1754 = vunpack.c.l.b16 %v341
        %v1755 = vunpack.c.l.b16 %v342
        %v1756 = vunpack.c.l.b16 %v343
        %v1757 = vunpack.c.l.b16 %v344
        %v1758 = vunpack.c.l.b16 %v345
        %v1759 = vunpack.c.l.b16 %v346
        %v1760 = vunpack.c.l.b16 %v347
        %v1761 = vunpack.c.l.b16 %v348
        %v1762 = vunpack.c.l.b16 %v349
        %v1763 = vunpack.c.l.b16 %v350
        %v1764 = vunpack.c.l.b16 %v351
        %v1765 = vunpack.c.l.b16 %v352
        %v1766 = vunpack.c.l.b16 %v353
        %v1767 = vunpack.c.l.b16 %v354
        %v1768 = vunpack.c.l.b16 %v355
        %v1769 = vunpack.c.l.b16 %v356
        %v1770 = vunpack.c.l.b16 %v357
        %v1771 = vunpack.c.l.b16 %v358
        %v1772 = vunpack.c.l.b16 %v359
        %v1773 = vunpack.c.l.b16 %v360
        %v1774 = vunpack.c.l.b16 %v361
        %v1775 = vunpack.c.l.b16 %v362
        %v1776 = vunpack.c.l.b16 %v363
        %v1777 = vunpack.c.l.b16 %v364
        %v1778 = vunpack.c.l.b16 %v365
        %v1779 = vunpack.c.l.b16 %v366
        %v1780 = vunpack.c.l.b16 %v367
        %v1781 = vunpack.c.l.b16 %v368
        %v1782 = vunpack.c.l.b16 %v369
        %v1783 = vunpack.c.l.b16 %v370
        %v1784 = vunpack.c.l.b16 %v371
        %v1785 = vunpack.c.l.b16 %v372
        %v1786 = vunpack.c.l.b16 %v373
        %v1787 = vunpack.c.l.b16 %v374
        %v1788 = vunpack.c.l.b16 %v375
        %v1789 = vunpack.c.l.b16 %v376
        %v1790 = vunpack.c.l.b16 %v377
        %v1791 = vunpack.c.l.b16 %v378
        %v1792 = vunpack.c.l.b16 %v379
        %v1793 = vunpack.c.l.b16 %v380
        %v1794 = vunpack.c.l.b16 %v381
        %v1795 = vunpack.c.l.b16 %v382
        %v1796 = vunpack.c.l.b16 %v383
        %v1797 = vunpack.c.l.b16 %v384
        %v1798 = vunpack.c.l.b16 %v385
        %v1799 = vunpack.c.l.b16 %v386
        %v1800 = vunpack.c.l.b16 %v387
        %v1801 = vunpack.c.l.b16 %v388
        %v1802 = vunpack.c.l.b16 %v389
        %v1803 = vunpack.c.l.b16 %v390
        %v1804 = vunpack.c.l.b16 %v391
        %v1805 = vunpack.c.l.b16 %v392
        %v1806 = vunpack.c.l.b16 %v393
        %v1807 = vunpack.c.l.b16 %v394
        %v1808 = vunpack.c.l.b16 %v395
        %v1809 = vunpack.c.l.b16 %v396
        %v1810 = vunpack.c.l.b16 %v397
        %v1811 = vunpack.c.l.b16 %v398
        %v1812 = vunpack.c.l.b16 %v399
        %v1813 = vunpack.c.l.b16 %v400
        %v1814 = vunpack.c.l.b16 %v401
        %v1815 = vunpack.c.l.b16 %v402
        %v1816 = vunpack.c.l.b16 %v403
        %v1817 = vunpack.c.l.b16 %v404
        %v1818 = vunpack.c.l.b16 %v405
        %v1819 = vunpack.c.l.b16 %v406
        %v1820 = vunpack.c.l.b16 %v407
        %v1821 = vunpack.c.l.b16 %v408
        %v1822 = vunpack.c.l.b16 %v409
        %v1823 = vunpack.c.l.b16 %v410
        %v1824 = vunpack.c.l.b16 %v411
        %v1825 = vunpack.c.l.b16 %v412
        %v1826 = vunpack.c.l.b16 %v413
        %v1827 = vunpack.c.l.b16 %v414
        %v1828 = vunpack.c.l.b16 %v415
        %v1829 = vunpack.c.l.b16 %v416
        %v1830 = vunpack.c.l.b16 %v417
        %v1831 = vunpack.c.l.b16 %v418
        %v1832 = vunpack.c.l.b16 %v419
        %v1833 = vunpack.c.l.b16 %v420
        %v1834 = vunpack.c.l.b16 %v421
        %v1835 = vunpack.c.l.b16 %v422
        %v1836 = vunpack.c.l.b16 %v423
        %v1837 = vunpack.c.l.b16 %v424
        %v1838 = vunpack.c.l.b16 %v425
        %v1839 = vunpack.c.l.b16 %v426
        %v1840 = vunpack.c.l.b16 %v427
        %v1841 = vunpack.c.l.b16 %v428
        %v1842 = vunpack.c.l.b16 %v429
        %v1843 = vunpack.c.l.b16 %v430
        %v1844 = vunpack.c.l.b16 %v431
        %v1845 = vunpack.c.l.b16 %v432
        %v1846 = vunpack.c.l.b16 %v433
        %v1847 = vunpack.c.l.b16 %v434
        %v1848 = vunpack.c.l.b16 %v435
        %v1849 = vunpack.c.l.b16 %v436
        %v1850 = vunpack.c.l.b16 %v437
        %v1851 = vunpack.c.l.b16 %v438
        %v1852 = vunpack.c.l.b16 %v439
        %v1853 = vunpack.c.l.b16 %v440
        %v1854 = vunpack.c.l.b16 %v441
        %v1855 = vunpack.c.l.b16 %v442
        %v1856 = vunpack.c.l.b16 %v443
        %v1857 = vunpack.c.l.b16 %v444
        %v1858 = vunpack.c.l.b16 %v445
        %v1859 = vunpack.c.l.b16 %v446
        %v1860 = vunpack.c.l.b16 %v447
        %v1861 = vunpack.c.l.b16 %v448
        %v1862 = vunpack.c.l.b16 %v449
        %v1863 = vunpack.c.l.b16 %v450
        %v1864 = vunpack.c.l.b16 %v451
        %v1865 = vunpack.c.l.b16 %v452
        %v1866 = vunpack.c.l.b16 %v453
        %v1867 = vunpack.c.l.b16 %v454
        %v1868 = vunpack.c.l.b16 %v455
        %v1869 = vunpack.c.l.b16 %v456
        %v1870 = vunpack.c.l.b16 %v457
        %v1871 = vunpack.c.l.b16 %v458
        %v1872 = vunpack.c.l.b16 %v459
        %v1873 = vunpack.c.l.b16 %v460
        %v1874 = vunpack.c.l.b16 %v461
        %v1875 = vunpack.c.l.b16 %v462
        %v1876 = vunpack.c.l.b16 %v463
        %v1877 = vunpack.c.l.b16 %v464
        %v1878 = vunpack.c.l.b16 %v465
        %v1879 = vunpack.c.l.b16 %v466
        %v1880 = vunpack.c.l.b16 %v467
        %v1881 = vunpack.c.l.b16 %v468
        %v1882 = vunpack.c.l.b16 %v469
        %v1883 = vunpack.c.l.b16 %v470
        %v1884 = vunpack.c.l.b16 %v471
        %v1885 = vunpack.c.l.b16 %v472
        %v1886 = vunpack.c.l.b16 %v473
        %v1887 = vunpack.c.l.b16 %v474
        %v1888 = vunpack.c.l.b16 %v475
        %v1889 = vunpack.c.l.b16 %v476
        %v1890 = vunpack.c.l.b16 %v477
        %v1891 = vunpack.c.l.b16 %v478
        %v1892 = vunpack.c.l.b16 %v479
        %v1893 = vunpack.c.l.b16 %v480
        %v1894 = vunpack.c.l.b16 %v481
        %v1895 = vunpack.c.l.b16 %v482
        %v1896 = vunpack.c.l.b16 %v483
        %v1897 = vunpack.c.l.b16 %v484
        %v1898 = vunpack.c.l.b16 %v485
        %v1899 = vunpack.c.l.b16 %v486
        %v1900 = vunpack.c.l.b16 %v487
        %v1901 = vunpack.c.l.b16 %v488
        %v1902 = vunpack.c.l.b16 %v489
        %v1903 = vunpack.c.l.b16 %v490
        %v1904 = vunpack.c.l.b16 %v491
        %v1905 = vunpack.c.l.b16 %v492
        %v1906 = vunpack.c.l.b16 %v493
        %v1907 = vunpack.c.l.b16 %v494
        %v1908 = vunpack.c.l.b16 %v495
        %v1909 = vunpack.c.l.b16 %v496
        %v1910 = vunpack.c.l.b16 %v497
        %v1911 = vunpack.c.l.b16 %v498
        %v1912 = vunpack.c.l.b16 %v499
        %v1913 = vunpack.c.l.b16 %v500
        %v1914 = vunpack.c.l.b16 %v501
        %v1915 = vunpack.c.l.b16 %v502
        %v1916 = vunpack.c.l.b16 %v503
        %v1917 = vunpack.c.l.b16 %v504
        %v1918 = vunpack.c.l.b16 %v505
        %v1919 = vunpack.c.l.b16 %v506
        %v1920 = vunpack.c.l.b16 %v507
        %v1921 = vunpack.c.l.b16 %v508
        %v1922 = vunpack.c.l.b16 %v509
        %v1923 = vunpack.c.l.b16 %v510
        %v1924 = vunpack.c.l.b16 %v511
        %v1925 = vunpack.c.l.b16 %v512
        %v1926 = vunpack.c.l.b16 %v513
        %v1927 = vunpack.c.l.b16 %v514
        %v1928 = vunpack.c.l.b16 %v515
        %v1929 = vunpack.c.l.b16 %v516
        %v1930 = vunpack.c.l.b16 %v517
        %v1931 = vunpack.c.l.b16 %v518
        %v1932 = vunpack.c.l.b16 %v519
        %v1933 = vunpack.c.l.b16 %v520
        %v1934 = vunpack.c.l.b16 %v521
        %v1935 = vunpack.c.l.b16 %v522
        %v1936 = vunpack.c.l.b16 %v523
        %v1937 = vunpack.c.l.b16 %v524
        %v1938 = vunpack.c.l.b16 %v525
        %v1939 = vunpack.c.l.b16 %v526
        %v1940 = vunpack.c.l.b16 %v527
        %v1941 = vunpack.c.l.b16 %v528
        %v1942 = vunpack.c.l.b16 %v529
        %v1943 = vunpack.c.l.b16 %v530
        %v1944 = vunpack.c.l.b16 %v531
        %v1945 = vunpack.c.l.b16 %v532
        %v1946 = vunpack.c.l.b16 %v533
        %v1947 = vunpack.c.l.b16 %v534
        %v1948 = vunpack.c.l.b16 %v535
        %v1949 = vunpack.c.l.b16 %v536
        %v1950 = vunpack.c.l.b16 %v537
        %v1951 = vunpack.c.l.b16 %v538
        %v1952 = vunpack.c.l.b16 %v539
        %v1953 = vunpack.c.l.b16 %v540
        %v1954 = vunpack.c.l.b16 %v541
        %v1955 = vunpack.c.l.b16 %v542
        %v1956 = vunpack.c.l.b16 %v543
        %v1957 = vunpack.c.l.b16 %v544
        %v1958 = vunpack.c.l.b16 %v545
        %v1959 = vunpack.c.l.b16 %v546
        %v1960 = vunpack.c.l.b16 %v547
        %v1961 = vunpack.c.l.b16 %v548
        %v1962 = vunpack.c.l.b16 %v549
        %v1963 = vunpack.c.l.b16 %v550
        %v1964 = vunpack.c.l.b16 %v551
        %v1965 = vunpack.c.l.b16 %v552
        %v1966 = vunpack.c.l.b16 %v553
        %v1967 = vunpack.c.l.b16 %v554
        %v1968 = vunpack.c.l.b16 %v555
        %v1969 = vunpack.c.l.b16 %v556
        %v1970 = vunpack.c.l.b16 %v557
        %v1971 = vunpack.c.l.b16 %v558
        %v1972 = vunpack.c.l.b16 %v559
        %v1973 = vunpack.c.l.b16 %v560
        %v1974 = vunpack.c.l.b16 %v561
        %v1975 = vunpack.c.l.b16 %v562
        %v1976 = vunpack.c.l.b16 %v563
        %v1977 = vunpack.c.l.b16 %v564
        %v1978 = vunpack.c.l.b16 %v565
        %v1979 = vunpack.c.l.b16 %v566
        %v1980 = vunpack.c.l.b16 %v567
        %v1981 = vunpack.c.l.b16 %v568
        %v1982 = vunpack.c.l.b16 %v569
        %v1983 = vunpack.c.l.b16 %v570
        %v1984 = vunpack.c.l.b16 %v571
        %v1985 = vunpack.c.l.b16 %v572
        %v1986 = vunpack.c.l.b16 %v573
        %v1987 = vunpack.c.l.b16 %v574
        %v1988 = vunpack.c.l.b16 %v575
        %v1989 = vunpack.c.l.b16 %v576
        %v1990 = vunpack.c.l.b16 %v577
        %v1991 = vunpack.c.l.b16 %v578
        %v1992 = vunpack.c.l.b16 %v579
        %v1993 = vunpack.c.l.b16 %v580
        %v1994 = vunpack.c.l.b16 %v581
        %v1995 = vunpack.c.l.b16 %v582
        %v1996 = vunpack.c.l.b16 %v583
        %v1997 = vunpack.c.l.b16 %v584
        %v1998 = vunpack.c.l.b16 %v585
        %v1999 = vunpack.c.l.b16 %v586
        %v2000 = vunpack.c.l.b16 %v587
        %v2001 = vunpack.c.l.b16 %v588
        %v2002 = vunpack.c.l.b16 %v589
        %v2003 = vunpack.c.l.b16 %v590
        %v2004 = vunpack.c.l.b16 %v591
        %v2005 = vunpack.c.l.b16 %v592
        %v2006 = vunpack.c.l.b16 %v593
        %v2007 = vunpack.c.l.b16 %v594
        %v2008 = vunpack.c.l.b16 %v595
        %v2009 = vunpack.c.l.b16 %v596
        %v2010 = vunpack.c.l.b16 %v597
        %v2011 = vunpack.c.l.b16 %v598
        %v2012 = vunpack.c.l.b16 %v599
        %v2013 = vunpack.c.l.b16 %v600
        %v2014 = vunpack.c.l.b16 %v601
        %v2015 = vunpack.c.l.b16 %v602
        %v2016 = vunpack.c.l.b16 %v603
        %v2017 = vunpack.c.l.b16 %v604
        %v2018 = vunpack.c.l.b16 %v605
        %v2019 = vunpack.c.l.b16 %v606
        %v2020 = vunpack.c.l.b16 %v607
        %v2021 = vunpack.c.l.b16 %v608
        %v2022 = vunpack.c.l.b16 %v609
        %v2023 = vunpack.c.l.b16 %v610
        %v2024 = vunpack.c.l.b16 %v611
        %v2025 = vunpack.c.l.b16 %v612
        %v2026 = vunpack.c.l.b16 %v613
        %v2027 = vunpack.c.l.b16 %v614
        %v2028 = vunpack.c.l.b16 %v615
        %v2029 = vunpack.c.l.b16 %v616
        %v2030 = vunpack.c.l.b16 %v617
        %v2031 = vunpack.c.l.b16 %v618
        %v2032 = vunpack.c.l.b16 %v619
        %v2033 = vunpack.c.l.b16 %v620
        %v2034 = vunpack.c.l.b16 %v621
        %v2035 = vunpack.c.l.b16 %v622
        %v2036 = vunpack.c.l.b16 %v623
        %v2037 = vunpack.c.l.b16 %v624
        %v2038 = vunpack.c.l.b16 %v625
        %v2039 = vunpack.c.l.b16 %v626
        %v2040 = vunpack.c.l.b16 %v627
        %v2041 = vunpack.c.l.b16 %v628
        %v2042 = vunpack.c.l.b16 %v629
        %v2043 = vunpack.c.l.b16 %v630
        %v2044 = vunpack.c.l.b16 %v631
        %v2045 = vunpack.c.l.b16 %v632
        %v2046 = vunpack.c.l.b16 %v633
        %v2047 = vunpack.c.l.b16 %v634
        %v2048 = vunpack.c.l.b16 %v635
        %v2049 = vunpack.c.l.b16 %v636
        %v2050 = vunpack.c.l.b16 %v637
        %v2051 = vunpack.c.l.b16 %v638
        %v2052 = vunpack.c.l.b16 %v639
        %v2053 = vunpack.c.l.b16 %v640
        %v2054 = vunpack.c.l.b16 %v641
        %v2055 = vunpack.c.l.b16 %v642
        %v2056 = vunpack.c.l.b16 %v643
        %v2057 = vunpack.c.l.b16 %v644
        %v2058 = vunpack.c.l.b16 %v645
        %v2059 = vunpack.c.l.b16 %v646
        %v2060 = vunpack.c.l.b16 %v647
        %v2061 = vunpack.c.l.b16 %v648
        %v2062 = vunpack.c.l.b16 %v649
        %v2063 = vunpack.c.l.b16 %v650
        %v2064 = vunpack.c.l.b16 %v651
        %v2065 = vunpack.c.l.b16 %v652
        %v2066 = vunpack.c.l.b16 %v653
        %v2067 = vunpack.c.l.b16 %v654
        %v2068 = vunpack.c.l.b16 %v655
        %v2069 = vunpack.c.l.b16 %v656
        %v2070 = vunpack.c.l.b16 %v657
        %v2071 = vunpack.c.l.b16 %v658
        %v2072 = vunpack.c.l.b16 %v659
        %v2073 = vunpack.c.l.b16 %v660
        %v2074 = vunpack.c.l.b16 %v661
        %v2075 = vunpack.c.l.b16 %v662
        %v2076 = vunpack.c.l.b16 %v663
        %v2077 = vunpack.c.l.b16 %v664
        %v2078 = vunpack.c.l.b16 %v665
        %v2079 = vunpack.c.l.b16 %v666
        %v2080 = vunpack.c.l.b16 %v667
        %v2081 = vunpack.c.l.b16 %v668
        %v2082 = vunpack.c.l.b16 %v669
        %v2083 = vunpack.c.l.b16 %v670
        %v2084 = vunpack.c.l.b16 %v671
        %v2085 = vunpack.c.l.b16 %v672
        %v2086 = vunpack.c.l.b16 %v673
        %v2087 = vunpack.c.l.b16 %v674
        %v2088 = vunpack.c.l.b16 %v675
        %v2089 = vunpack.c.l.b16 %v676
        %v2090 = vunpack.c.l.b16 %v677
        %v2091 = vunpack.c.l.b16 %v678
        %v2092 = vunpack.c.l.b16 %v679
        %v2093 = vunpack.c.l.b16 %v680
        %v2094 = vunpack.c.l.b16 %v681
        %v2095 = vunpack.c.l.b16 %v682
        %v2096 = vunpack.c.l.b16 %v683
        %v2097 = vunpack.c.l.b16 %v684
        %v2098 = vunpack.c.l.b16 %v685
        %v2099 = vunpack.c.l.b16 %v686
        %v2100 = vunpack.c.l.b16 %v687
        %v2101 = vunpack.c.l.b16 %v688
        %v2102 = vunpack.c.l.b16 %v689
        %v2103 = vunpack.c.l.b16 %v690
        %v2104 = vunpack.c.l.b16 %v691
        %v2105 = vunpack.c.l.b16 %v692
        %v2106 = vunpack.c.l.b16 %v693
        %v2107 = vunpack.c.l.b16 %v694
        %v2108 = vunpack.c.l.b16 %v695
        %v2109 = vunpack.c.l.b16 %v696
        %v2110 = vunpack.c.l.b16 %v697
        %v2111 = vunpack.c.l.b16 %v698
        %v2112 = vunpack.c.l.b16 %v699
        %v2113 = vunpack.c.l.b16 %v700
        %v2114 = vunpack.c.l.b16 %v701
        %v2115 = vunpack.c.l.b16 %v702
        %v2116 = vunpack.c.l.b16 %v703
        %v2117 = vunpack.c.l.b16 %v704
        %v2118 = vunpack.c.l.b16 %v705
        %v2119 = vunpack.c.l.b16 %v706
        %v2120 = vunpack.c.l.b16 %v707
        %v2121 = vunpack.c.l.b16 %v708
        %v2122 = vunpack.c.l.b16 %v709
        %v2123 = vunpack.c.l.b16 %v710
        %v2124 = vunpack.c.l.b16 %v711
        %v2125 = vunpack.c.l.b16 %v712
        %v2126 = vunpack.c.l.b16 %v713
        %v2127 = vunpack.c.l.b16 %v714
        %v2128 = vunpack.c.l.b16 %v715
        %v2129 = vunpack.c.l.b16 %v716
        %v2130 = vunpack.c.l.b16 %v717
        %v2131 = vunpack.c.l.b16 %v718
        %v2132 = vunpack.c.l.b16 %v719
        %v2133 = vunpack.c.l.b16 %v720
        %v2134 = vunpack.c.l.b16 %v721
        %v2135 = vunpack.c.l.b16 %v722
        %v2136 = vunpack.c.l.b16 %v723
        %v2137 = vunpack.c.l.b16 %v724
        %v2138 = vunpack.c.l.b16 %v725
        %v2139 = vunpack.c.l.b16 %v726
        %v2140 = vunpack.c.l.b16 %v727
        %v2141 = vunpack.c.l.b16 %v728
        %v2142 = vunpack.c.l.b16 %v729
        %v2143 = vunpack.c.l.b16 %v730
        %v2144 = vunpack.c.l.b16 %v731
        %v2145 = vunpack.c.l.b16 %v732
        %v2146 = vunpack.c.l.b16 %v733
        %v2147 = vunpack.c.l.b16 %v734
        %v2148 = vunpack.c.l.b16 %v735
        %v2149 = vunpack.c.l.b16 %v736
        %v2150 = vunpack.c.l.b16 %v737
        %v2151 = vunpack.c.l.b16 %v738
        %v2152 = vunpack.c.l.b16 %v739
        %v2153 = vunpack.c.l.b16 %v740
        %v2154 = vunpack.c.l.b16 %v741
        %v2155 = vunpack.c.l.b16 %v742
        %v2156 = vunpack.c.l.b16 %v743
        %v2157 = vunpack.c.l.b16 %v744
        %v2158 = vunpack.c.l.b16 %v745
        %v2159 = vunpack.c.l.b16 %v746
        %v2160 = vunpack.c.l.b16 %v747
        %v2161 = vunpack.c.l.b16 %v748
        %v2162 = vunpack.c.l.b16 %v749
        %v2163 = vunpack.c.l.b16 %v750
        %v2164 = vunpack.c.l.b16 %v751
        %v2165 = vunpack.c.l.b16 %v752
        %v2166 = vunpack.c.l.b16 %v753
        %v2167 = vunpack.c.l.b16 %v754
        %v2168 = vunpack.c.l.b16 %v755
        %v2169 = vunpack.c.l.b16 %v756
        %v2170 = vunpack.c.l.b16 %v757
        %v2171 = vunpack.c.l.b16 %v758
        %v2172 = vunpack.c.l.b16 %v759
        %v2173 = vunpack.c.l.b16 %v760
        %v2174 = vunpack.c.l.b16 %v761
        %v2175 = vunpack.c.l.b16 %v762
        %v2176 = vunpack.c.l.b16 %v763
        %v2177 = vunpack.c.l.b16 %v764
        %v2178 = vunpack.c.l.b16 %v765
        %v2179 = vunpack.c.l.b16 %v766
        %v2180 = vunpack.c.l.b16 %v767
        %v2181 = vunpack.c.l.b16 %v768
        %v2182 = vunpack.c.l.b16 %v769
        %v2183 = vunpack.c.l.b16 %v770
        %v2184 = vunpack.c.l.b16 %v771
        %v2185 = vunpack.c.l.b16 %v772
        %v2186 = vunpack.c.l.b16 %v773
        %v2187 = vunpack.c.l.b16 %v774
        %v2188 = vunpack.c.l.b16 %v775
        %v2189 = vunpack.c.l.b16 %v776
        %v2190 = vunpack.c.l.b16 %v777
        %v2191 = vunpack.c.l.b16 %v778
        %v2192 = vunpack.c.l.b16 %v779
        %v2193 = vunpack.c.l.b16 %v780
        %v2194 = vunpack.c.l.b16 %v781
        %v2195 = vunpack.c.l.b16 %v782
        %v2196 = vunpack.c.l.b16 %v783
        %v2197 = vunpack.c.l.b16 %v784
        %v2198 = vunpack.c.l.b16 %v785
        %v2199 = vunpack.c.l.b16 %v786
        %v2200 = vunpack.c.l.b16 %v787
        %v2201 = vunpack.c.l.b16 %v788
        %v2202 = vunpack.c.l.b16 %v789
        %v2203 = vunpack.c.l.b16 %v790
        %v2204 = vunpack.c.l.b16 %v791
        %v2205 = vunpack.c.l.b16 %v792
        %v2206 = vunpack.c.l.b16 %v793
        %v2207 = vunpack.c.l.b16 %v794
        %v2208 = vunpack.c.l.b16 %v795
        %v2209 = vunpack.c.l.b16 %v796
        %v2210 = vunpack.c.l.b16 %v797
        %v2211 = vunpack.c.l.b16 %v798
        %v2212 = vunpack.c.l.b16 %v799
        %v2213 = vunpack.c.l.b16 %v800
        %v2214 = vunpack.c.l.b16 %v801
        %v2215 = vunpack.c.l.b16 %v802
        %v2216 = vunpack.c.l.b16 %v803
        %v2217 = vunpack.c.l.b16 %v804
        %v2218 = vunpack.c.l.b16 %v805
        %v2219 = vunpack.c.l.b16 %v806
        %v2220 = vunpack.c.l.b16 %v807
        %v2221 = vunpack.c.l.b16 %v808
        %v2222 = vunpack.c.l.b16 %v809
        %v2223 = vunpack.c.l.b16 %v810
        %v2224 = vunpack.c.l.b16 %v811
        %v2225 = vunpack.c.l.b16 %v812
        %v2226 = vunpack.c.l.b16 %v813
        %v2227 = vunpack.c.l.b16 %v814
        %v2228 = vunpack.c.l.b16 %v815
        %v2229 = vunpack.c.l.b16 %v816
        %v2230 = vunpack.c.l.b16 %v817
        %v2231 = vunpack.c.l.b16 %v818
        %v2232 = vunpack.c.l.b16 %v819
        %v2233 = vunpack.c.l.b16 %v820
        %v2234 = vunpack.c.l.b16 %v821
        %v2235 = vunpack.c.l.b16 %v822
        %v2236 = vunpack.c.l.b16 %v823
        %v2237 = vunpack.c.l.b16 %v824
        %v2238 = vunpack.c.l.b16 %v825
        %v2239 = vunpack.c.l.b16 %v826
        %v2240 = vunpack.c.l.b16 %v827
        %v2241 = vunpack.c.l.b16 %v828
        %v2242 = vunpack.c.l.b16 %v829
        %v2243 = vunpack.c.l.b16 %v830
        %v2244 = vunpack.c.l.b16 %v831
        %v2245 = vunpack.c.l.b16 %v832
        %v2246 = vunpack.c.l.b16 %v833
        %v2247 = vunpack.c.l.b16 %v834
        %v2248 = vunpack.c.l.b16 %v835
        %v2249 = vunpack.c.l.b16 %v836
        %v2250 = vunpack.c.l.b16 %v837
        %v2251 = vunpack.c.l.b16 %v838
        %v2252 = vunpack.c.l.b16 %v839
        %v2253 = vunpack.c.l.b16 %v840
        %v2254 = vunpack.c.l.b16 %v841
        %v2255 = vunpack.c.l.b16 %v842
        %v2256 = vunpack.c.l.b16 %v843
        %v2257 = vunpack.c.l.b16 %v844
        %v2258 = vunpack.c.l.b16 %v845
        %v2259 = vpack.c.b16 %v1684, %v1683
        %v2260 = vpack.c.b16 %v1686, %v1685
        %v2261 = vpack.c.b16 %v1688, %v1687
        %v2262 = vpack.c.b16 %v1690, %v1689
        %v2263 = vpack.c.b16 %v1692, %v1691
        %v2264 = vpack.c.b16 %v1694, %v1693
        %v2265 = vpack.c.b16 %v1696, %v1695
        %v2266 = vpack.c.b16 %v1698, %v1697
        %v2267 = vpack.c.b16 %v1700, %v1699
        %v2268 = vpack.c.b16 %v1702, %v1701
        %v2269 = vpack.c.b16 %v1704, %v1703
        %v2270 = vpack.c.b16 %v1706, %v1705
        %v2271 = vpack.c.b16 %v1708, %v1707
        %v2272 = vpack.c.b16 %v1710, %v1709
        %v2273 = vpack.c.b16 %v1712, %v1711
        %v2274 = vpack.c.b16 %v1714, %v1713
        %v2275 = vpack.c.b16 %v1716, %v1715
        %v2276 = vpack.c.b16 %v1718, %v1717
        %v2277 = vpack.c.b16 %v1720, %v1719
        %v2278 = vpack.c.b16 %v1722, %v1721
        %v2279 = vpack.c.b16 %v1724, %v1723
        %v2280 = vpack.c.b16 %v1726, %v1725
        %v2281 = vpack.c.b16 %v1728, %v1727
        %v2282 = vpack.c.b16 %v1730, %v1729
        %v2283 = vpack.c.b16 %v1732, %v1731
        %v2284 = vpack.c.b16 %v1734, %v1733
        %v2285 = vpack.c.b16 %v1736, %v1735
        %v2286 = vpack.c.b16 %v1738, %v1737
        %v2287 = vpack.c.b16 %v1740, %v1739
        %v2288 = vpack.c.b16 %v1742, %v1741
        %v2289 = vpack.c.b16 %v1744, %v1743
        %v2290 = vpack.c.b16 %v1746, %v1745
        %v2291 = vpack.c.b16 %v1748, %v1747
        %v2292 = vpack.c.b16 %v1750, %v1749
        %v2293 = vpack.c.b16 %v1752, %v1751
        %v2294 = vpack.c.b16 %v1754, %v1753
        %v2295 = vpack.c.b16 %v1756, %v1755
        %v2296 = vpack.c.b16 %v1758, %v1757
        %v2297 = vpack.c.b16 %v1760, %v1759
        %v2298 = vpack.c.b16 %v1762, %v1761
        %v2299 = vpack.c.b16 %v1764, %v1763
        %v2300 = vpack.c.b16 %v1766, %v1765
        %v2301 = vpack.c.b16 %v1768, %v1767
        %v2302 = vpack.c.b16 %v1770, %v1769
        %v2303 = vpack.c.b16 %v1772, %v1771
        %v2304 = vpack.c.b16 %v1774, %v1773
        %v2305 = vpack.c.b16 %v1776, %v1775
        %v2306 = vpack.c.b16 %v1778, %v1777
        %v2307 = vpack.c.b16 %v1780, %v1779
        %v2308 = vpack.c.b16 %v1782, %v1781
        %v2309 = vpack.c.b16 %v1784, %v1783
        %v2310 = vpack.c.b16 %v1786, %v1785
        %v2311 = vpack.c.b16 %v1788, %v1787
        %v2312 = vpack.c.b16 %v1790, %v1789
        %v2313 = vpack.c.b16 %v1792, %v1791
        %v2314 = vpack.c.b16 %v1794, %v1793
        %v2315 = vpack.c.b16 %v1796, %v1795
        %v2316 = vpack.c.b16 %v1798, %v1797
        %v2317 = vpack.c.b16 %v1800, %v1799
        %v2318 = vpack.c.b16 %v1802, %v1801
        %v2319 = vpack.c.b16 %v1804, %v1803
        %v2320 = vpack.c.b16 %v1806, %v1805
        %v2321 = vpack.c.b16 %v1808, %v1807
        %v2322 = vpack.c.b16 %v1810, %v1809
        %v2323 = vpack.c.b16 %v1812, %v1811
        %v2324 = vpack.c.b16 %v1814, %v1813
        %v2325 = vpack.c.b16 %v1816, %v1815
        %v2326 = vpack.c.b16 %v1818, %v1817
        %v2327 = vpack.c.b16 %v1820, %v1819
        %v2328 = vpack.c.b16 %v1822, %v1821
        %v2329 = vpack.c.b16 %v1824, %v1823
        %v2330 = vpack.c.b16 %v1826, %v1825
        %v2331 = vpack.c.b16 %v1828, %v1827
        %v2332 = vpack.c.b16 %v1830, %v1829
        %v2333 = vpack.c.b16 %v1832, %v1831
        %v2334 = vpack.c.b16 %v1834, %v1833
        %v2335 = vpack.c.b16 %v1836, %v1835
        %v2336 = vpack.c.b16 %v1838, %v1837
        %v2337 = vpack.c.b16 %v1840, %v1839
        %v2338 = vpack.c.b16 %v1842, %v1841
        %v2339 = vpack.c.b16 %v1844, %v1843
        %v2340 = vpack.c.b16 %v1846, %v1845
        %v2341 = vpack.c.b16 %v1848, %v1847
        %v2342 = vpack.c.b16 %v1850, %v1849
        %v2343 = vpack.c.b16 %v1852, %v1851
        %v2344 = vpack.c.b16 %v1854, %v1853
        %v2345 = vpack.c.b16 %v1856, %v1855
        %v2346 = vpack.c.b16 %v1858, %v1857
        %v2347 = vpack.c.b16 %v1860, %v1859
        %v2348 = vpack.c.b16 %v1862, %v1861
        %v2349 = vpack.c.b16 %v1864, %v1863
        %v2350 = vpack.c.b16 %v1866, %v1865
        %v2351 = vpack.c.b16 %v1868, %v1867
        %v2352 = vpack.c.b16 %v1870, %v1869
        %v2353 = vpack.c.b16 %v1872, %v1871
        %v2354 = vpack.c.b16 %v1874, %v1873
        %v2355 = vpack.c.b16 %v1876, %v1875
        %v2356 = vpack.c.b16 %v1878, %v1877
        %v2357 = vpack.c.b16 %v1880, %v1879
        %v2358 = vpack.c.b16 %v1882, %v1881
        %v2359 = vpack.c.b16 %v1884, %v1883
        %v2360 = vpack.c.b16 %v1886, %v1885
        %v2361 = vpack.c.b16 %v1888, %v1887
        %v2362 = vpack.c.b16 %v1890, %v1889
        %v2363 = vpack.c.b16 %v1892, %v1891
        %v2364 = vpack.c.b16 %v1894, %v1893
        %v2365 = vpack.c.b16 %v1896, %v1895
        %v2366 = vpack.c.b16 %v1898, %v1897
        %v2367 = vpack.c.b16 %v1900, %v1899
        %v2368 = vpack.c.b16 %v1902, %v1901
        %v2369 = vpack.c.b16 %v1904, %v1903
        %v2370 = vpack.c.b16 %v1906, %v1905
        %v2371 = vpack.c.b16 %v1908, %v1907
        %v2372 = vpack.c.b16 %v1910, %v1909
        %v2373 = vpack.c.b16 %v1912, %v1911
        %v2374 = vpack.c.b16 %v1914, %v1913
        %v2375 = vpack.c.b16 %v1916, %v1915
        %v2376 = vpack.c.b16 %v1918, %v1917
        %v2377 = vpack.c.b16 %v1920, %v1919
        %v2378 = vpack.c.b16 %v1922, %v1921
        %v2379 = vpack.c.b16 %v1924, %v1923
        %v2380 = vpack.c.b16 %v1926, %v1925
        %v2381 = vpack.c.b16 %v1928, %v1927
        %v2382 = vpack.c.b16 %v1930, %v1929
        %v2383 = vpack.c.b16 %v1932, %v1931
        %v2384 = vpack.c.b16 %v1934, %v1933
        %v2385 = vpack.c.b16 %v1936, %v1935
        %v2386 = vpack.c.b16 %v1938, %v1937
        %v2387 = vpack.c.b16 %v1940, %v1939
        %v2388 = vpack.c.b16 %v1942, %v1941
        %v2389 = vpack.c.b16 %v1944, %v1943
        %v2390 = vpack.c.b16 %v1946, %v1945
        %v2391 = vpack.c.b16 %v1948, %v1947
        %v2392 = vpack.c.b16 %v1950, %v1949
        %v2393 = vpack.c.b16 %v1952, %v1951
        %v2394 = vpack.c.b16 %v1954, %v1953
        %v2395 = vpack.c.b16 %v1956, %v1955
        %v2396 = vpack.c.b16 %v1958, %v1957
        %v2397 = vpack.c.b16 %v1960, %v1959
        %v2398 = vpack.c.b16 %v1962, %v1961
        %v2399 = vpack.c.b16 %v1964, %v1963
        %v2400 = vpack.c.b16 %v1966, %v1965
        %v2401 = vpack.c.b16 %v1968, %v1967
        %v2402 = vpack.c.b16 %v1970, %v1969
        %v2403 = vpack.c.b16 %v1972, %v1971
        %v2404 = vpack.c.b16 %v1974, %v1973
        %v2405 = vpack.c.b16 %v1976, %v1975
        %v2406 = vpack.c.b16 %v1978, %v1977
        %v2407 = vpack.c.b16 %v1980, %v1979
        %v2408 = vpack.c.b16 %v1982, %v1981
        %v2409 = vpack.c.b16 %v1984, %v1983
        %v2410 = vpack.c.b16 %v1986, %v1985
        %v2411 = vpack.c.b16 %v1988, %v1987
        %v2412 = vpack.c.b16 %v1990, %v1989
        %v2413 = vpack.c.b16 %v1992, %v1991
        %v2414 = vpack.c.b16 %v1994, %v1993
        %v2415 = vpack.c.b16 %v1996, %v1995
        %v2416 = vpack.c.b16 %v1998, %v1997
        %v2417 = vpack.c.b16 %v2000, %v1999
        %v2418 = vpack.c.b16 %v2002, %v2001
        %v2419 = vpack.c.b16 %v2004, %v2003
        %v2420 = vpack.c.b16 %v2006, %v2005
        %v2421 = vpack.c.b16 %v2008, %v2007
        %v2422 = vpack.c.b16 %v2010, %v2009
        %v2423 = vpack.c.b16 %v2012, %v2011
        %v2424 = vpack.c.b16 %v2014, %v2013
        %v2425 = vpack.c.b16 %v2016, %v2015
        %v2426 = vpack.c.b16 %v2018, %v2017
        %v2427 = vpack.c.b16 %v2020, %v2019
        %v2428 = vpack.c.b16 %v2022, %v2021
        %v2429 = vpack.c.b16 %v2024, %v2023
        %v2430 = vpack.c.b16 %v2026, %v2025
        %v2431 = vpack.c.b16 %v2028, %v2027
        %v2432 = vpack.c.b16 %v2030, %v2029
        %v2433 = vpack.c.b16 %v2032, %v2031
        %v2434 = vpack.c.b16 %v2034, %v2033
        %v2435 = vpack.c.b16 %v2036, %v2035
        %v2436 = vpack.c.b16 %v2038, %v2037
        %v2437 = vpack.c.b16 %v2040, %v2039
        %v2438 = vpack.c.b16 %v2042, %v2041
        %v2439 = vpack.c.b16 %v2044, %v2043
        %v2440 = vpack.c.b16 %v2046, %v2045
        %v2441 = vpack.c.b16 %v2048, %v2047
        %v2442 = vpack.c.b16 %v2050, %v2049
        %v2443 = vpack.c.b16 %v2052, %v2051
        %v2444 = vpack.c.b16 %v2054, %v2053
        %v2445 = vpack.c.b16 %v2056, %v2055
        %v2446 = vpack.c.b16 %v2058, %v2057
        %v2447 = vpack.c.b16 %v2060, %v2059
        %v2448 = vpack.c.b16 %v2062, %v2061
        %v2449 = vpack.c.b16 %v2064, %v2063
        %v2450 = vpack.c.b16 %v2066, %v2065
        %v2451 = vpack.c.b16 %v2068, %v2067
        %v2452 = vpack.c.b16 %v2070, %v2069
        %v2453 = vpack.c.b16 %v2072, %v2071
        %v2454 = vpack.c.b16 %v2074, %v2073
        %v2455 = vpack.c.b16 %v2076, %v2075
        %v2456 = vpack.c.b16 %v2078, %v2077
        %v2457 = vpack.c.b16 %v2080, %v2079
        %v2458 = vpack.c.b16 %v2082, %v2081
        %v2459 = vpack.c.b16 %v2084, %v2083
        %v2460 = vpack.c.b16 %v2086, %v2085
        %v2461 = vpack.c.b16 %v2088, %v2087
        %v2462 = vpack.c.b16 %v2090, %v2089
        %v2463 = vpack.c.b16 %v2092, %v2091
        %v2464 = vpack.c.b16 %v2094, %v2093
        %v2465 = vpack.c.b16 %v2096, %v2095
        %v2466 = vpack.c.b16 %v2098, %v2097
        %v2467 = vpack.c.b16 %v2100, %v2099
        %v2468 = vpack.c.b16 %v2102, %v2101
        %v2469 = vpack.c.b16 %v2104, %v2103
        %v2470 = vpack.c.b16 %v2106, %v2105
        %v2471 = vpack.c.b16 %v2108, %v2107
        %v2472 = vpack.c.b16 %v2110, %v2109
        %v2473 = vpack.c.b16 %v2112, %v2111
        %v2474 = vpack.c.b16 %v2114, %v2113
        %v2475 = vpack.c.b16 %v2116, %v2115
        %v2476 = vpack.c.b16 %v2118, %v2117
        %v2477 = vpack.c.b16 %v2120, %v2119
        %v2478 = vpack.c.b16 %v2122, %v2121
        %v2479 = vpack.c.b16 %v2124, %v2123
        %v2480 = vpack.c.b16 %v2126, %v2125
        %v2481 = vpack.c.b16 %v2128, %v2127
        %v2482 = vpack.c.b16 %v2130, %v2129
        %v2483 = vpack.c.b16 %v2132, %v2131
        %v2484 = vpack.c.b16 %v2134, %v2133
        %v2485 = vpack.c.b16 %v2136, %v2135
        %v2486 = vpack.c.b16 %v2138, %v2137
        %v2487 = vpack.c.b16 %v2140, %v2139
        %v2488 = vpack.c.b16 %v2142, %v2141
        %v2489 = vpack.c.b16 %v2144, %v2143
        %v2490 = vpack.c.b16 %v2146, %v2145
        %v2491 = vpack.c.b16 %v2148, %v2147
        %v2492 = vpack.c.b16 %v2150, %v2149
        %v2493 = vpack.c.b16 %v2152, %v2151
        %v2494 = vpack.c.b16 %v2154, %v2153
        %v2495 = vpack.c.b16 %v2156, %v2155
        %v2496 = vpack.c.b16 %v2158, %v2157
        %v2497 = vpack.c.b16 %v2160, %v2159
        %v2498 = vpack.c.b16 %v2162, %v2161
        %v2499 = vpack.c.b16 %v2164, %v2163
        %v2500 = vpack.c.b16 %v2166, %v2165
        %v2501 = vpack.c.b16 %v2168, %v2167
        %v2502 = vpack.c.b16 %v2170, %v2169
        %v2503 = vpack.c.b16 %v2172, %v2171
        %v2504 = vpack.c.b16 %v2174, %v2173
        %v2505 = vpack.c.b16 %v2176, %v2175
        %v2506 = vpack.c.b16 %v2178, %v2177
        %v2507 = vpack.c.b16 %v2180, %v2179
        %v2508 = vpack.c.b16 %v2182, %v2181
        %v2509 = vpack.c.b16 %v2184, %v2183
        %v2510 = vpack.c.b16 %v2186, %v2185
        %v2511 = vpack.c.b16 %v2188, %v2187
        %v2512 = vpack.c.b16 %v2190, %v2189
        %v2513 = vpack.c.b16 %v2192, %v2191
        %v2514 = vpack.c.b16 %v2194, %v2193
        %v2515 = vpack.c.b16 %v2196, %v2195
        %v2516 = vpack.c.b16 %v2198, %v2197
        %v2517 = vpack.c.b16 %v2200, %v2199
        %v2518 = vpack.c.b16 %v2202, %v2201
        %v2519 = vpack.c.b16 %v2204, %v2203
        %v2520 = vpack.c.b16 %v2206, %v2205
        %v2521 = vpack.c.b16 %v2208, %v2207
        %v2522 = vpack.c.b16 %v2210, %v2209
        %v2523 = vpack.c.b16 %v2212, %v2211
        %v2524 = vpack.c.b16 %v2214, %v2213
        %v2525 = vpack.c.b16 %v2216, %v2215
        %v2526 = vpack.c.b16 %v2218, %v2217
        %v2527 = vpack.c.b16 %v2220, %v2219
        %v2528 = vpack.c.b16 %v2222, %v2221
        %v2529 = vpack.c.b16 %v2224, %v2223
        %v2530 = vpack.c.b16 %v2226, %v2225
        %v2531 = vpack.c.b16 %v2228, %v2227
        %v2532 = vpack.c.b16 %v2230, %v2229
        %v2533 = vpack.c.b16 %v2232, %v2231
        %v2534 = vpack.c.b16 %v2234, %v2233
        %v2535 = vpack.c.b16 %v2236, %v2235
        %v2536 = vpack.c.b16 %v2238, %v2237
        %v2537 = vpack.c.b16 %v2240, %v2239
        %v2538 = vpack.c.b16 %v2242, %v2241
        %v2539 = vpack.c.b16 %v2244, %v2243
        %v2540 = vpack.c.b16 %v2246, %v2245
        %v2541 = vpack.c.b16 %v2248, %v2247
        %v2542 = vpack.c.b16 %v2250, %v2249
        %v2543 = vpack.c.b16 %v2252, %v2251
        %v2544 = vpack.c.b16 %v2254, %v2253
        %v2545 = vpack.c.b16 %v2256, %v2255
        %v2546 = vpack.c.b16 %v2258, %v2257
        %2835 = vmatprep.subr.bf16.mxu0 0
        %2836 = vmatpush1.bf16.msra.mxu0 %v2259
        %2837 = vmatprep.subr.bf16.mxu0 0
        %2838 = vmatpush1.bf16.msra.mxu0 %v2260
        %2839 = vmatprep.subr.bf16.mxu0 0
        %2840 = vmatpush1.bf16.msra.mxu0 %v2261
        %2841 = vmatprep.subr.bf16.mxu0 0
        %2842 = vmatpush1.bf16.msra.mxu0 %v2262
        %2843 = vmatprep.subr.bf16.mxu0 0
        %2844 = vmatpush1.bf16.msra.mxu0 %v2263
        %2845 = vmatprep.subr.bf16.mxu0 0
        %2846 = vmatpush1.bf16.msra.mxu0 %v2264
        %2847 = vmatprep.subr.bf16.mxu0 0
        %2848 = vmatpush1.bf16.msra.mxu0 %v2265
        %2849 = vmatprep.subr.bf16.mxu0 0
        %2850 = vmatpush1.bf16.msra.mxu0 %v2266
        %2851 = vmatprep.subr.bf16.mxu0 0
        %2852 = vmatpush1.bf16.msra.mxu0 %v2267
        %2853 = vmatprep.subr.bf16.mxu0 0
        %2854 = vmatpush1.bf16.msra.mxu0 %v2268
        %2855 = vmatprep.subr.bf16.mxu0 0
        %2856 = vmatpush1.bf16.msra.mxu0 %v2269
        %2857 = vmatprep.subr.bf16.mxu0 0
        %2858 = vmatpush1.bf16.msra.mxu0 %v2270
        %2859 = vmatprep.subr.bf16.mxu0 0
        %2860 = vmatpush1.bf16.msra.mxu0 %v2271
        %2861 = vmatprep.subr.bf16.mxu0 0
        %2862 = vmatpush1.bf16.msra.mxu0 %v2272
        %2863 = vmatprep.subr.bf16.mxu0 0
        %2864 = vmatpush1.bf16.msra.mxu0 %v2273
        %2865 = vmatprep.subr.bf16.mxu0 0
        %2866 = vmatpush1.bf16.msra.mxu0 %v2274
        %2867 = vmatprep.mubr.bf16.mxu0 %v888
        %2868 = vmatmul.mubr.bf16.gmra.mrb[0].mxu0 %v874
        %v2869 = vpop.f32.mrb[0].mxu0
        %v2870 = vadd.f32 0.0, %v2869
        %v2871 = vpop.f32.mrb[0].mxu0
        %v2872 = vpop.f32.mrb[0].mxu0
        %v2873 = vpop.f32.mrb[0].mxu0
        %2874 = vdwg.mxu0
        %2875 = vmatprep.subr.bf16.mxu0 0
        %2876 = vmatpush1.bf16.msra.mxu0 %v2275
        %2877 = vmatprep.subr.bf16.mxu0 0
        %2878 = vmatpush1.bf16.msra.mxu0 %v2276
        %2879 = vmatprep.subr.bf16.mxu0 0
        %2880 = vmatpush1.bf16.msra.mxu0 %v2277
        %2881 = vmatprep.subr.bf16.mxu0 0
        %2882 = vmatpush1.bf16.msra.mxu0 %v2278
        %2883 = vmatprep.subr.bf16.mxu0 0
        %2884 = vmatpush1.bf16.msra.mxu0 %v2279
        %2885 = vmatprep.subr.bf16.mxu0 0
        %2886 = vmatpush1.bf16.msra.mxu0 %v2280
        %2887 = vmatprep.subr.bf16.mxu0 0
        %2888 = vmatpush1.bf16.msra.mxu0 %v2281
        %2889 = vmatprep.subr.bf16.mxu0 0
        %2890 = vmatpush1.bf16.msra.mxu0 %v2282
        %2891 = vmatprep.subr.bf16.mxu0 0
        %2892 = vmatpush1.bf16.msra.mxu0 %v2283
        %2893 = vmatprep.subr.bf16.mxu0 0
        %2894 = vmatpush1.bf16.msra.mxu0 %v2284
        %2895 = vmatprep.subr.bf16.mxu0 0
        %2896 = vmatpush1.bf16.msra.mxu0 %v2285
        %2897 = vmatprep.subr.bf16.mxu0 0
        %2898 = vmatpush1.bf16.msra.mxu0 %v2286
        %2899 = vmatprep.subr.bf16.mxu0 0
        %2900 = vmatpush1.bf16.msra.mxu0 %v2287
        %2901 = vmatprep.subr.bf16.mxu0 0
        %2902 = vmatpush1.bf16.msra.mxu0 %v2288
        %2903 = vmatprep.subr.bf16.mxu0 0
        %2904 = vmatpush1.bf16.msra.mxu0 %v2289
        %2905 = vmatprep.subr.bf16.mxu0 0
        %2906 = vmatpush1.bf16.msra.mxu0 %v2290
        %2907 = vmatprep.mubr.bf16.mxu0 %v898
        %2908 = vmatmul.mubr.bf16.gmra.mrb[0].mxu0 %v896
        %v2909 = vpop.f32.mrb[0].mxu0
        %v2910 = vadd.f32 %v2870, %v2909
        %v2911 = vpop.f32.mrb[0].mxu0
        %v2912 = vpop.f32.mrb[0].mxu0
        %v2913 = vpop.f32.mrb[0].mxu0
        %2914 = vdwg.mxu0
        %2915 = vmatprep.subr.bf16.mxu0 0
        %2916 = vmatpush1.bf16.msra.mxu0 %v2291
        %2917 = vmatprep.subr.bf16.mxu0 0
        %2918 = vmatpush1.bf16.msra.mxu0 %v2292
        %2919 = vmatprep.subr.bf16.mxu0 0
        %2920 = vmatpush1.bf16.msra.mxu0 %v2293
        %2921 = vmatprep.subr.bf16.mxu0 0
        %2922 = vmatpush1.bf16.msra.mxu0 %v2294
        %2923 = vmatprep.subr.bf16.mxu0 0
        %2924 = vmatpush1.bf16.msra.mxu0 %v2295
        %2925 = vmatprep.subr.bf16.mxu0 0
        %2926 = vmatpush1.bf16.msra.mxu0 %v2296
        %2927 = vmatprep.subr.bf16.mxu0 0
        %2928 = vmatpush1.bf16.msra.mxu0 %v2297
        %2929 = vmatprep.subr.bf16.mxu0 0
        %2930 = vmatpush1.bf16.msra.mxu0 %v2298
        %2931 = vmatprep.subr.bf16.mxu0 0
        %2932 = vmatpush1.bf16.msra.mxu0 %v2299
        %2933 = vmatprep.subr.bf16.mxu0 0
        %2934 = vmatpush1.bf16.msra.mxu0 %v2300
        %2935 = vmatprep.subr.bf16.mxu0 0
        %2936 = vmatpush1.bf16.msra.mxu0 %v2301
        %2937 = vmatprep.subr.bf16.mxu0 0
        %2938 = vmatpush1.bf16.msra.mxu0 %v2302
        %2939 = vmatprep.subr.bf16.mxu0 0
        %2940 = vmatpush1.bf16.msra.mxu0 %v2303
        %2941 = vmatprep.subr.bf16.mxu0 0
        %2942 = vmatpush1.bf16.msra.mxu0 %v2304
        %2943 = vmatprep.subr.bf16.mxu0 0
        %2944 = vmatpush1.bf16.msra.mxu0 %v2305
        %2945 = vmatprep.subr.bf16.mxu0 0
        %2946 = vmatpush1.bf16.msra.mxu0 %v2306
        %2947 = vmatprep.mubr.bf16.mxu0 %v895
        %2948 = vmatmul.mubr.bf16.gmra.mrb[0].mxu0 %v881
        %v2949 = vpop.f32.mrb[0].mxu0
        %v2950 = vadd.f32 %v2910, %v2949
        %v2951 = vpop.f32.mrb[0].mxu0
        %v2952 = vpop.f32.mrb[0].mxu0
        %v2953 = vpop.f32.mrb[0].mxu0
        %2954 = vdwg.mxu0
        %2955 = vmatprep.subr.bf16.mxu0 0
        %2956 = vmatpush1.bf16.msra.mxu0 %v2307
        %2957 = vmatprep.subr.bf16.mxu0 0
        %2958 = vmatpush1.bf16.msra.mxu0 %v2308
        %2959 = vmatprep.subr.bf16.mxu0 0
        %2960 = vmatpush1.bf16.msra.mxu0 %v2309
        %2961 = vmatprep.subr.bf16.mxu0 0
        %2962 = vmatpush1.bf16.msra.mxu0 %v2310
        %2963 = vmatprep.subr.bf16.mxu0 0
        %2964 = vmatpush1.bf16.msra.mxu0 %v2311
        %2965 = vmatprep.subr.bf16.mxu0 0
        %2966 = vmatpush1.bf16.msra.mxu0 %v2312
        %2967 = vmatprep.subr.bf16.mxu0 0
        %2968 = vmatpush1.bf16.msra.mxu0 %v2313
        %2969 = vmatprep.subr.bf16.mxu0 0
        %2970 = vmatpush1.bf16.msra.mxu0 %v2314
        %2971 = vmatprep.subr.bf16.mxu0 0
        %2972 = vmatpush1.bf16.msra.mxu0 %v2315
        %2973 = vmatprep.subr.bf16.mxu0 0
        %2974 = vmatpush1.bf16.msra.mxu0 %v2316
        %2975 = vmatprep.subr.bf16.mxu0 0
        %2976 = vmatpush1.bf16.msra.mxu0 %v2317
        %2977 = vmatprep.subr.bf16.mxu0 0
        %2978 = vmatpush1.bf16.msra.mxu0 %v2318
        %2979 = vmatprep.subr.bf16.mxu0 0
        %2980 = vmatpush1.bf16.msra.mxu0 %v2319
        %2981 = vmatprep.subr.bf16.mxu0 0
        %2982 = vmatpush1.bf16.msra.mxu0 %v2320
        %2983 = vmatprep.subr.bf16.mxu0 0
        %2984 = vmatpush1.bf16.msra.mxu0 %v2321
        %2985 = vmatprep.subr.bf16.mxu0 0
        %2986 = vmatpush1.bf16.msra.mxu0 %v2322
        %2987 = vmatprep.mubr.bf16.mxu0 %v899
        %2988 = vmatmul.mubr.bf16.gmra.mrb[0].mxu0 %v897
        %v2989 = vpop.f32.mrb[0].mxu0
        %v2990 = vadd.f32 %v2950, %v2989
        %v2991 = vpop.f32.mrb[0].mxu0
        %v2992 = vpop.f32.mrb[0].mxu0
        %v2993 = vpop.f32.mrb[0].mxu0
        %2994 = vdwg.mxu0
        %2995 = vmatprep.subr.bf16.mxu0 0
        %2996 = vmatpush1.bf16.msra.mxu0 %v2323
        %2997 = vmatprep.subr.bf16.mxu0 0
        %2998 = vmatpush1.bf16.msra.mxu0 %v2324
        %2999 = vmatprep.subr.bf16.mxu0 0
        %3000 = vmatpush1.bf16.msra.mxu0 %v2325
        %3001 = vmatprep.subr.bf16.mxu0 0
        %3002 = vmatpush1.bf16.msra.mxu0 %v2326
        %3003 = vmatprep.subr.bf16.mxu0 0
        %3004 = vmatpush1.bf16.msra.mxu0 %v2327
        %3005 = vmatprep.subr.bf16.mxu0 0
        %3006 = vmatpush1.bf16.msra.mxu0 %v2328
        %3007 = vmatprep.subr.bf16.mxu0 0
        %3008 = vmatpush1.bf16.msra.mxu0 %v2329
        %3009 = vmatprep.subr.bf16.mxu0 0
        %3010 = vmatpush1.bf16.msra.mxu0 %v2330
        %3011 = vmatprep.subr.bf16.mxu0 0
        %3012 = vmatpush1.bf16.msra.mxu0 %v2331
        %3013 = vmatprep.subr.bf16.mxu0 0
        %3014 = vmatpush1.bf16.msra.mxu0 %v2332
        %3015 = vmatprep.subr.bf16.mxu0 0
        %3016 = vmatpush1.bf16.msra.mxu0 %v2333
        %3017 = vmatprep.subr.bf16.mxu0 0
        %3018 = vmatpush1.bf16.msra.mxu0 %v2334
        %3019 = vmatprep.subr.bf16.mxu0 0
        %3020 = vmatpush1.bf16.msra.mxu0 %v2335
        %3021 = vmatprep.subr.bf16.mxu0 0
        %3022 = vmatpush1.bf16.msra.mxu0 %v2336
        %3023 = vmatprep.subr.bf16.mxu0 0
        %3024 = vmatpush1.bf16.msra.mxu0 %v2337
        %3025 = vmatprep.subr.bf16.mxu0 0
        %3026 = vmatpush1.bf16.msra.mxu0 %v2338
        %3027 = vmatprep.mubr.bf16.mxu0 %v937
        %3028 = vmatmul.mubr.bf16.gmra.mrb[0].mxu0 %v923
        %v3029 = vpop.f32.mrb[0].mxu0
        %v3030 = vadd.f32 %v2990, %v3029
        %v3031 = vpop.f32.mrb[0].mxu0
        %v3032 = vpop.f32.mrb[0].mxu0
        %v3033 = vpop.f32.mrb[0].mxu0
        %3034 = vdwg.mxu0
        %3035 = vmatprep.subr.bf16.mxu0 0
        %3036 = vmatpush1.bf16.msra.mxu0 %v2339
        %3037 = vmatprep.subr.bf16.mxu0 0
        %3038 = vmatpush1.bf16.msra.mxu0 %v2340
        %3039 = vmatprep.subr.bf16.mxu0 0
        %3040 = vmatpush1.bf16.msra.mxu0 %v2341
        %3041 = vmatprep.subr.bf16.mxu0 0
        %3042 = vmatpush1.bf16.msra.mxu0 %v2342
        %3043 = vmatprep.subr.bf16.mxu0 0
        %3044 = vmatpush1.bf16.msra.mxu0 %v2343
        %3045 = vmatprep.subr.bf16.mxu0 0
        %3046 = vmatpush1.bf16.msra.mxu0 %v2344
        %3047 = vmatprep.subr.bf16.mxu0 0
        %3048 = vmatpush1.bf16.msra.mxu0 %v2345
        %3049 = vmatprep.subr.bf16.mxu0 0
        %3050 = vmatpush1.bf16.msra.mxu0 %v2346
        %3051 = vmatprep.subr.bf16.mxu0 0
        %3052 = vmatpush1.bf16.msra.mxu0 %v2347
        %3053 = vmatprep.subr.bf16.mxu0 0
        %3054 = vmatpush1.bf16.msra.mxu0 %v2348
        %3055 = vmatprep.subr.bf16.mxu0 0
        %3056 = vmatpush1.bf16.msra.mxu0 %v2349
        %3057 = vmatprep.subr.bf16.mxu0 0
        %3058 = vmatpush1.bf16.msra.mxu0 %v2350
        %3059 = vmatprep.subr.bf16.mxu0 0
        %3060 = vmatpush1.bf16.msra.mxu0 %v2351
        %3061 = vmatprep.subr.bf16.mxu0 0
        %3062 = vmatpush1.bf16.msra.mxu0 %v2352
        %3063 = vmatprep.subr.bf16.mxu0 0
        %3064 = vmatpush1.bf16.msra.mxu0 %v2353
        %3065 = vmatprep.subr.bf16.mxu0 0
        %3066 = vmatpush1.bf16.msra.mxu0 %v2354
        %3067 = vmatprep.mubr.bf16.mxu0 %v947
        %3068 = vmatmul.mubr.bf16.gmra.mrb[0].mxu0 %v945
        %v3069 = vpop.f32.mrb[0].mxu0
        %v3070 = vadd.f32 %v3030, %v3069
        %v3071 = vpop.f32.mrb[0].mxu0
        %v3072 = vpop.f32.mrb[0].mxu0
        %v3073 = vpop.f32.mrb[0].mxu0
        %3074 = vdwg.mxu0
        %3075 = vmatprep.subr.bf16.mxu0 0
        %3076 = vmatpush1.bf16.msra.mxu0 %v2355
        %3077 = vmatprep.subr.bf16.mxu0 0
        %3078 = vmatpush1.bf16.msra.mxu0 %v2356
        %3079 = vmatprep.subr.bf16.mxu0 0
        %3080 = vmatpush1.bf16.msra.mxu0 %v2357
        %3081 = vmatprep.subr.bf16.mxu0 0
        %3082 = vmatpush1.bf16.msra.mxu0 %v2358
        %3083 = vmatprep.subr.bf16.mxu0 0
        %3084 = vmatpush1.bf16.msra.mxu0 %v2359
        %3085 = vmatprep.subr.bf16.mxu0 0
        %3086 = vmatpush1.bf16.msra.mxu0 %v2360
        %3087 = vmatprep.subr.bf16.mxu0 0
        %3088 = vmatpush1.bf16.msra.mxu0 %v2361
        %3089 = vmatprep.subr.bf16.mxu0 0
        %3090 = vmatpush1.bf16.msra.mxu0 %v2362
        %3091 = vmatprep.subr.bf16.mxu0 0
        %3092 = vmatpush1.bf16.msra.mxu0 %v2363
        %3093 = vmatprep.subr.bf16.mxu0 0
        %3094 = vmatpush1.bf16.msra.mxu0 %v2364
        %3095 = vmatprep.subr.bf16.mxu0 0
        %3096 = vmatpush1.bf16.msra.mxu0 %v2365
        %3097 = vmatprep.subr.bf16.mxu0 0
        %3098 = vmatpush1.bf16.msra.mxu0 %v2366
        %3099 = vmatprep.subr.bf16.mxu0 0
        %3100 = vmatpush1.bf16.msra.mxu0 %v2367
        %3101 = vmatprep.subr.bf16.mxu0 0
        %3102 = vmatpush1.bf16.msra.mxu0 %v2368
        %3103 = vmatprep.subr.bf16.mxu0 0
        %3104 = vmatpush1.bf16.msra.mxu0 %v2369
        %3105 = vmatprep.subr.bf16.mxu0 0
        %3106 = vmatpush1.bf16.msra.mxu0 %v2370
        %3107 = vmatprep.mubr.bf16.mxu0 %v944
        %3108 = vmatmul.mubr.bf16.gmra.mrb[0].mxu0 %v930
        %v3109 = vpop.f32.mrb[0].mxu0
        %v3110 = vadd.f32 %v3070, %v3109
        %v3111 = vpop.f32.mrb[0].mxu0
        %v3112 = vpop.f32.mrb[0].mxu0
        %v3113 = vpop.f32.mrb[0].mxu0
        %3114 = vdwg.mxu0
        %3115 = vmatprep.subr.bf16.mxu0 0
        %3116 = vmatpush1.bf16.msra.mxu0 %v2371
        %3117 = vmatprep.subr.bf16.mxu0 0
        %3118 = vmatpush1.bf16.msra.mxu0 %v2372
        %3119 = vmatprep.subr.bf16.mxu0 0
        %3120 = vmatpush1.bf16.msra.mxu0 %v2373
        %3121 = vmatprep.subr.bf16.mxu0 0
        %3122 = vmatpush1.bf16.msra.mxu0 %v2374
        %3123 = vmatprep.subr.bf16.mxu0 0
        %3124 = vmatpush1.bf16.msra.mxu0 %v2375
        %3125 = vmatprep.subr.bf16.mxu0 0
        %3126 = vmatpush1.bf16.msra.mxu0 %v2376
        %3127 = vmatprep.subr.bf16.mxu0 0
        %3128 = vmatpush1.bf16.msra.mxu0 %v2377
        %3129 = vmatprep.subr.bf16.mxu0 0
        %3130 = vmatpush1.bf16.msra.mxu0 %v2378
        %3131 = vmatprep.subr.bf16.mxu0 0
        %3132 = vmatpush1.bf16.msra.mxu0 %v2379
        %3133 = vmatprep.subr.bf16.mxu0 0
        %3134 = vmatpush1.bf16.msra.mxu0 %v2380
        %3135 = vmatprep.subr.bf16.mxu0 0
        %3136 = vmatpush1.bf16.msra.mxu0 %v2381
        %3137 = vmatprep.subr.bf16.mxu0 0
        %3138 = vmatpush1.bf16.msra.mxu0 %v2382
        %3139 = vmatprep.subr.bf16.mxu0 0
        %3140 = vmatpush1.bf16.msra.mxu0 %v2383
        %3141 = vmatprep.subr.bf16.mxu0 0
        %3142 = vmatpush1.bf16.msra.mxu0 %v2384
        %3143 = vmatprep.subr.bf16.mxu0 0
        %3144 = vmatpush1.bf16.msra.mxu0 %v2385
        %3145 = vmatprep.subr.bf16.mxu0 0
        %3146 = vmatpush1.bf16.msra.mxu0 %v2386
        %3147 = vmatprep.mubr.bf16.mxu0 %v948
        %3148 = vmatmul.mubr.bf16.gmra.mrb[0].mxu0 %v946
        %v3149 = vpop.f32.mrb[0].mxu0
        %v3150 = vadd.f32 %v3110, %v3149
        %v3151 = vpop.f32.mrb[0].mxu0
        %v3152 = vpop.f32.mrb[0].mxu0
        %v3153 = vpop.f32.mrb[0].mxu0
        %3154 = vdwg.mxu0
        %3155 = vmatprep.subr.bf16.mxu0 0
        %3156 = vmatpush1.bf16.msra.mxu0 %v2387
        %3157 = vmatprep.subr.bf16.mxu0 0
        %3158 = vmatpush1.bf16.msra.mxu0 %v2388
        %3159 = vmatprep.subr.bf16.mxu0 0
        %3160 = vmatpush1.bf16.msra.mxu0 %v2389
        %3161 = vmatprep.subr.bf16.mxu0 0
        %3162 = vmatpush1.bf16.msra.mxu0 %v2390
        %3163 = vmatprep.subr.bf16.mxu0 0
        %3164 = vmatpush1.bf16.msra.mxu0 %v2391
        %3165 = vmatprep.subr.bf16.mxu0 0
        %3166 = vmatpush1.bf16.msra.mxu0 %v2392
        %3167 = vmatprep.subr.bf16.mxu0 0
        %3168 = vmatpush1.bf16.msra.mxu0 %v2393
        %3169 = vmatprep.subr.bf16.mxu0 0
        %3170 = vmatpush1.bf16.msra.mxu0 %v2394
        %3171 = vmatprep.subr.bf16.mxu0 0
        %3172 = vmatpush1.bf16.msra.mxu0 %v2395
        %3173 = vmatprep.subr.bf16.mxu0 0
        %3174 = vmatpush1.bf16.msra.mxu0 %v2396
        %3175 = vmatprep.subr.bf16.mxu0 0
        %3176 = vmatpush1.bf16.msra.mxu0 %v2397
        %3177 = vmatprep.subr.bf16.mxu0 0
        %3178 = vmatpush1.bf16.msra.mxu0 %v2398
        %3179 = vmatprep.subr.bf16.mxu0 0
        %3180 = vmatpush1.bf16.msra.mxu0 %v2399
        %3181 = vmatprep.subr.bf16.mxu0 0
        %3182 = vmatpush1.bf16.msra.mxu0 %v2400
        %3183 = vmatprep.subr.bf16.mxu0 0
        %3184 = vmatpush1.bf16.msra.mxu0 %v2401
        %3185 = vmatprep.subr.bf16.mxu0 0
        %3186 = vmatpush1.bf16.msra.mxu0 %v2402
        %3187 = vmatprep.mubr.bf16.mxu0 %v986
        %3188 = vmatmul.mubr.bf16.gmra.mrb[0].mxu0 %v972
        %v3189 = vpop.f32.mrb[0].mxu0
        %v3190 = vadd.f32 %v3150, %v3189
        %v3191 = vpop.f32.mrb[0].mxu0
        %v3192 = vpop.f32.mrb[0].mxu0
        %v3193 = vpop.f32.mrb[0].mxu0
        %3194 = vdwg.mxu0
        %3195 = vmatprep.subr.bf16.mxu0 0
        %3196 = vmatpush1.bf16.msra.mxu0 %v2403
        %3197 = vmatprep.subr.bf16.mxu0 0
        %3198 = vmatpush1.bf16.msra.mxu0 %v2404
        %3199 = vmatprep.subr.bf16.mxu0 0
        %3200 = vmatpush1.bf16.msra.mxu0 %v2405
        %3201 = vmatprep.subr.bf16.mxu0 0
        %3202 = vmatpush1.bf16.msra.mxu0 %v2406
        %3203 = vmatprep.subr.bf16.mxu0 0
        %3204 = vmatpush1.bf16.msra.mxu0 %v2407
        %3205 = vmatprep.subr.bf16.mxu0 0
        %3206 = vmatpush1.bf16.msra.mxu0 %v2408
        %3207 = vmatprep.subr.bf16.mxu0 0
        %3208 = vmatpush1.bf16.msra.mxu0 %v2409
        %3209 = vmatprep.subr.bf16.mxu0 0
        %3210 = vmatpush1.bf16.msra.mxu0 %v2410
        %3211 = vmatprep.subr.bf16.mxu0 0
        %3212 = vmatpush1.bf16.msra.mxu0 %v2411
        %3213 = vmatprep.subr.bf16.mxu0 0
        %3214 = vmatpush1.bf16.msra.mxu0 %v2412
        %3215 = vmatprep.subr.bf16.mxu0 0
        %3216 = vmatpush1.bf16.msra.mxu0 %v2413
        %3217 = vmatprep.subr.bf16.mxu0 0
        %3218 = vmatpush1.bf16.msra.mxu0 %v2414
        %3219 = vmatprep.subr.bf16.mxu0 0
        %3220 = vmatpush1.bf16.msra.mxu0 %v2415
        %3221 = vmatprep.subr.bf16.mxu0 0
        %3222 = vmatpush1.bf16.msra.mxu0 %v2416
        %3223 = vmatprep.subr.bf16.mxu0 0
        %3224 = vmatpush1.bf16.msra.mxu0 %v2417
        %3225 = vmatprep.subr.bf16.mxu0 0
        %3226 = vmatpush1.bf16.msra.mxu0 %v2418
        %3227 = vmatprep.mubr.bf16.mxu0 %v996
        %3228 = vmatmul.mubr.bf16.gmra.mrb[0].mxu0 %v994
        %v3229 = vpop.f32.mrb[0].mxu0
        %v3230 = vadd.f32 %v3190, %v3229
        %v3231 = vpop.f32.mrb[0].mxu0
        %v3232 = vpop.f32.mrb[0].mxu0
        %v3233 = vpop.f32.mrb[0].mxu0
        %3234 = vdwg.mxu0
        %3235 = vmatprep.subr.bf16.mxu0 0
        %3236 = vmatpush1.bf16.msra.mxu0 %v2419
        %3237 = vmatprep.subr.bf16.mxu0 0
        %3238 = vmatpush1.bf16.msra.mxu0 %v2420
        %3239 = vmatprep.subr.bf16.mxu0 0
        %3240 = vmatpush1.bf16.msra.mxu0 %v2421
        %3241 = vmatprep.subr.bf16.mxu0 0
        %3242 = vmatpush1.bf16.msra.mxu0 %v2422
        %3243 = vmatprep.subr.bf16.mxu0 0
        %3244 = vmatpush1.bf16.msra.mxu0 %v2423
        %3245 = vmatprep.subr.bf16.mxu0 0
        %3246 = vmatpush1.bf16.msra.mxu0 %v2424
        %3247 = vmatprep.subr.bf16.mxu0 0
        %3248 = vmatpush1.bf16.msra.mxu0 %v2425
        %3249 = vmatprep.subr.bf16.mxu0 0
        %3250 = vmatpush1.bf16.msra.mxu0 %v2426
        %3251 = vmatprep.subr.bf16.mxu0 0
        %3252 = vmatpush1.bf16.msra.mxu0 %v2427
        %3253 = vmatprep.subr.bf16.mxu0 0
        %3254 = vmatpush1.bf16.msra.mxu0 %v2428
        %3255 = vmatprep.subr.bf16.mxu0 0
        %3256 = vmatpush1.bf16.msra.mxu0 %v2429
        %3257 = vmatprep.subr.bf16.mxu0 0
        %3258 = vmatpush1.bf16.msra.mxu0 %v2430
        %3259 = vmatprep.subr.bf16.mxu0 0
        %3260 = vmatpush1.bf16.msra.mxu0 %v2431
        %3261 = vmatprep.subr.bf16.mxu0 0
        %3262 = vmatpush1.bf16.msra.mxu0 %v2432
        %3263 = vmatprep.subr.bf16.mxu0 0
        %3264 = vmatpush1.bf16.msra.mxu0 %v2433
        %3265 = vmatprep.subr.bf16.mxu0 0
        %3266 = vmatpush1.bf16.msra.mxu0 %v2434
        %3267 = vmatprep.mubr.bf16.mxu0 %v993
        %3268 = vmatmul.mubr.bf16.gmra.mrb[0].mxu0 %v979
        %v3269 = vpop.f32.mrb[0].mxu0
        %v3270 = vadd.f32 %v3230, %v3269
        %v3271 = vpop.f32.mrb[0].mxu0
        %v3272 = vpop.f32.mrb[0].mxu0
        %v3273 = vpop.f32.mrb[0].mxu0
        %3274 = vdwg.mxu0
        %3275 = vmatprep.subr.bf16.mxu0 0
        %3276 = vmatpush1.bf16.msra.mxu0 %v2435
        %3277 = vmatprep.subr.bf16.mxu0 0
        %3278 = vmatpush1.bf16.msra.mxu0 %v2436
        %3279 = vmatprep.subr.bf16.mxu0 0
        %3280 = vmatpush1.bf16.msra.mxu0 %v2437
        %3281 = vmatprep.subr.bf16.mxu0 0
        %3282 = vmatpush1.bf16.msra.mxu0 %v2438
        %3283 = vmatprep.subr.bf16.mxu0 0
        %3284 = vmatpush1.bf16.msra.mxu0 %v2439
        %3285 = vmatprep.subr.bf16.mxu0 0
        %3286 = vmatpush1.bf16.msra.mxu0 %v2440
        %3287 = vmatprep.subr.bf16.mxu0 0
        %3288 = vmatpush1.bf16.msra.mxu0 %v2441
        %3289 = vmatprep.subr.bf16.mxu0 0
        %3290 = vmatpush1.bf16.msra.mxu0 %v2442
        %3291 = vmatprep.subr.bf16.mxu0 0
        %3292 = vmatpush1.bf16.msra.mxu0 %v2443
        %3293 = vmatprep.subr.bf16.mxu0 0
        %3294 = vmatpush1.bf16.msra.mxu0 %v2444
        %3295 = vmatprep.subr.bf16.mxu0 0
        %3296 = vmatpush1.bf16.msra.mxu0 %v2445
        %3297 = vmatprep.subr.bf16.mxu0 0
        %3298 = vmatpush1.bf16.msra.mxu0 %v2446
        %3299 = vmatprep.subr.bf16.mxu0 0
        %3300 = vmatpush1.bf16.msra.mxu0 %v2447
        %3301 = vmatprep.subr.bf16.mxu0 0
        %3302 = vmatpush1.bf16.msra.mxu0 %v2448
        %3303 = vmatprep.subr.bf16.mxu0 0
        %3304 = vmatpush1.bf16.msra.mxu0 %v2449
        %3305 = vmatprep.subr.bf16.mxu0 0
        %3306 = vmatpush1.bf16.msra.mxu0 %v2450
        %3307 = vmatprep.mubr.bf16.mxu0 %v997
        %3308 = vmatmul.mubr.bf16.gmra.mrb[0].mxu0 %v995
        %v3309 = vpop.f32.mrb[0].mxu0
        %v3310 = vadd.f32 %v3270, %v3309
        %v3311 = vpop.f32.mrb[0].mxu0
        %v3312 = vpop.f32.mrb[0].mxu0
        %v3313 = vpop.f32.mrb[0].mxu0
        %3314 = vdwg.mxu0
        %3315 = vmatprep.subr.bf16.mxu0 0
        %3316 = vmatpush1.bf16.msra.mxu0 %v2451
        %3317 = vmatprep.subr.bf16.mxu0 0
        %3318 = vmatpush1.bf16.msra.mxu0 %v2452
        %3319 = vmatprep.subr.bf16.mxu0 0
        %3320 = vmatpush1.bf16.msra.mxu0 %v2453
        %3321 = vmatprep.subr.bf16.mxu0 0
        %3322 = vmatpush1.bf16.msra.mxu0 %v2454
        %3323 = vmatprep.subr.bf16.mxu0 0
        %3324 = vmatpush1.bf16.msra.mxu0 %v2455
        %3325 = vmatprep.subr.bf16.mxu0 0
        %3326 = vmatpush1.bf16.msra.mxu0 %v2456
        %3327 = vmatprep.subr.bf16.mxu0 0
        %3328 = vmatpush1.bf16.msra.mxu0 %v2457
        %3329 = vmatprep.subr.bf16.mxu0 0
        %3330 = vmatpush1.bf16.msra.mxu0 %v2458
        %3331 = vmatprep.subr.bf16.mxu0 0
        %3332 = vmatpush1.bf16.msra.mxu0 %v2459
        %3333 = vmatprep.subr.bf16.mxu0 0
        %3334 = vmatpush1.bf16.msra.mxu0 %v2460
        %3335 = vmatprep.subr.bf16.mxu0 0
        %3336 = vmatpush1.bf16.msra.mxu0 %v2461
        %3337 = vmatprep.subr.bf16.mxu0 0
        %3338 = vmatpush1.bf16.msra.mxu0 %v2462
        %3339 = vmatprep.subr.bf16.mxu0 0
        %3340 = vmatpush1.bf16.msra.mxu0 %v2463
        %3341 = vmatprep.subr.bf16.mxu0 0
        %3342 = vmatpush1.bf16.msra.mxu0 %v2464
        %3343 = vmatprep.subr.bf16.mxu0 0
        %3344 = vmatpush1.bf16.msra.mxu0 %v2465
        %3345 = vmatprep.subr.bf16.mxu0 0
        %3346 = vmatpush1.bf16.msra.mxu0 %v2466
        %3347 = vmatprep.mubr.bf16.mxu0 %v1035
        %3348 = vmatmul.mubr.bf16.gmra.mrb[0].mxu0 %v1021
        %v3349 = vpop.f32.mrb[0].mxu0
        %v3350 = vadd.f32 %v3310, %v3349
        %v3351 = vpop.f32.mrb[0].mxu0
        %v3352 = vpop.f32.mrb[0].mxu0
        %v3353 = vpop.f32.mrb[0].mxu0
        %3354 = vdwg.mxu0
        %3355 = vmatprep.subr.bf16.mxu0 0
        %3356 = vmatpush1.bf16.msra.mxu0 %v2467
        %3357 = vmatprep.subr.bf16.mxu0 0
        %3358 = vmatpush1.bf16.msra.mxu0 %v2468
        %3359 = vmatprep.subr.bf16.mxu0 0
        %3360 = vmatpush1.bf16.msra.mxu0 %v2469
        %3361 = vmatprep.subr.bf16.mxu0 0
        %3362 = vmatpush1.bf16.msra.mxu0 %v2470
        %3363 = vmatprep.subr.bf16.mxu0 0
        %3364 = vmatpush1.bf16.msra.mxu0 %v2471
        %3365 = vmatprep.subr.bf16.mxu0 0
        %3366 = vmatpush1.bf16.msra.mxu0 %v2472
        %3367 = vmatprep.subr.bf16.mxu0 0
        %3368 = vmatpush1.bf16.msra.mxu0 %v2473
        %3369 = vmatprep.subr.bf16.mxu0 0
        %3370 = vmatpush1.bf16.msra.mxu0 %v2474
        %3371 = vmatprep.subr.bf16.mxu0 0
        %3372 = vmatpush1.bf16.msra.mxu0 %v2475
        %3373 = vmatprep.subr.bf16.mxu0 0
        %3374 = vmatpush1.bf16.msra.mxu0 %v2476
        %3375 = vmatprep.subr.bf16.mxu0 0
        %3376 = vmatpush1.bf16.msra.mxu0 %v2477
        %3377 = vmatprep.subr.bf16.mxu0 0
        %3378 = vmatpush1.bf16.msra.mxu0 %v2478
        %3379 = vmatprep.subr.bf16.mxu0 0
        %3380 = vmatpush1.bf16.msra.mxu0 %v2479
        %3381 = vmatprep.subr.bf16.mxu0 0
        %3382 = vmatpush1.bf16.msra.mxu0 %v2480
        %3383 = vmatprep.subr.bf16.mxu0 0
        %3384 = vmatpush1.bf16.msra.mxu0 %v2481
        %3385 = vmatprep.subr.bf16.mxu0 0
        %3386 = vmatpush1.bf16.msra.mxu0 %v2482
        %3387 = vmatprep.mubr.bf16.mxu0 %v1045
        %3388 = vmatmul.mubr.bf16.gmra.mrb[0].mxu0 %v1043
        %v3389 = vpop.f32.mrb[0].mxu0
        %v3390 = vadd.f32 %v3350, %v3389
        %v3391 = vpop.f32.mrb[0].mxu0
        %v3392 = vpop.f32.mrb[0].mxu0
        %v3393 = vpop.f32.mrb[0].mxu0
        %3394 = vdwg.mxu0
        %3395 = vmatprep.subr.bf16.mxu0 0
        %3396 = vmatpush1.bf16.msra.mxu0 %v2483
        %3397 = vmatprep.subr.bf16.mxu0 0
        %3398 = vmatpush1.bf16.msra.mxu0 %v2484
        %3399 = vmatprep.subr.bf16.mxu0 0
        %3400 = vmatpush1.bf16.msra.mxu0 %v2485
        %3401 = vmatprep.subr.bf16.mxu0 0
        %3402 = vmatpush1.bf16.msra.mxu0 %v2486
        %3403 = vmatprep.subr.bf16.mxu0 0
        %3404 = vmatpush1.bf16.msra.mxu0 %v2487
        %3405 = vmatprep.subr.bf16.mxu0 0
        %3406 = vmatpush1.bf16.msra.mxu0 %v2488
        %3407 = vmatprep.subr.bf16.mxu0 0
        %3408 = vmatpush1.bf16.msra.mxu0 %v2489
        %3409 = vmatprep.subr.bf16.mxu0 0
        %3410 = vmatpush1.bf16.msra.mxu0 %v2490
        %3411 = vmatprep.subr.bf16.mxu0 0
        %3412 = vmatpush1.bf16.msra.mxu0 %v2491
        %3413 = vmatprep.subr.bf16.mxu0 0
        %3414 = vmatpush1.bf16.msra.mxu0 %v2492
        %3415 = vmatprep.subr.bf16.mxu0 0
        %3416 = vmatpush1.bf16.msra.mxu0 %v2493
        %3417 = vmatprep.subr.bf16.mxu0 0
        %3418 = vmatpush1.bf16.msra.mxu0 %v2494
        %3419 = vmatprep.subr.bf16.mxu0 0
        %3420 = vmatpush1.bf16.msra.mxu0 %v2495
        %3421 = vmatprep.subr.bf16.mxu0 0
        %3422 = vmatpush1.bf16.msra.mxu0 %v2496
        %3423 = vmatprep.subr.bf16.mxu0 0
        %3424 = vmatpush1.bf16.msra.mxu0 %v2497
        %3425 = vmatprep.subr.bf16.mxu0 0
        %3426 = vmatpush1.bf16.msra.mxu0 %v2498
        %3427 = vmatprep.mubr.bf16.mxu0 %v1042
        %3428 = vmatmul.mubr.bf16.gmra.mrb[0].mxu0 %v1028
        %v3429 = vpop.f32.mrb[0].mxu0
        %v3430 = vadd.f32 %v3390, %v3429
        %v3431 = vpop.f32.mrb[0].mxu0
        %v3432 = vpop.f32.mrb[0].mxu0
        %v3433 = vpop.f32.mrb[0].mxu0
        %3434 = vdwg.mxu0
        %3435 = vmatprep.subr.bf16.mxu0 0
        %3436 = vmatpush1.bf16.msra.mxu0 %v2499
        %3437 = vmatprep.subr.bf16.mxu0 0
        %3438 = vmatpush1.bf16.msra.mxu0 %v2500
        %3439 = vmatprep.subr.bf16.mxu0 0
        %3440 = vmatpush1.bf16.msra.mxu0 %v2501
        %3441 = vmatprep.subr.bf16.mxu0 0
        %3442 = vmatpush1.bf16.msra.mxu0 %v2502
        %3443 = vmatprep.subr.bf16.mxu0 0
        %3444 = vmatpush1.bf16.msra.mxu0 %v2503
        %3445 = vmatprep.subr.bf16.mxu0 0
        %3446 = vmatpush1.bf16.msra.mxu0 %v2504
        %3447 = vmatprep.subr.bf16.mxu0 0
        %3448 = vmatpush1.bf16.msra.mxu0 %v2505
        %3449 = vmatprep.subr.bf16.mxu0 0
        %3450 = vmatpush1.bf16.msra.mxu0 %v2506
        %3451 = vmatprep.subr.bf16.mxu0 0
        %3452 = vmatpush1.bf16.msra.mxu0 %v2507
        %3453 = vmatprep.subr.bf16.mxu0 0
        %3454 = vmatpush1.bf16.msra.mxu0 %v2508
        %3455 = vmatprep.subr.bf16.mxu0 0
        %3456 = vmatpush1.bf16.msra.mxu0 %v2509
        %3457 = vmatprep.subr.bf16.mxu0 0
        %3458 = vmatpush1.bf16.msra.mxu0 %v2510
        %3459 = vmatprep.subr.bf16.mxu0 0
        %3460 = vmatpush1.bf16.msra.mxu0 %v2511
        %3461 = vmatprep.subr.bf16.mxu0 0
        %3462 = vmatpush1.bf16.msra.mxu0 %v2512
        %3463 = vmatprep.subr.bf16.mxu0 0
        %3464 = vmatpush1.bf16.msra.mxu0 %v2513
        %3465 = vmatprep.subr.bf16.mxu0 0
        %3466 = vmatpush1.bf16.msra.mxu0 %v2514
        %3467 = vmatprep.mubr.bf16.mxu0 %v1046
        %3468 = vmatmul.mubr.bf16.gmra.mrb[0].mxu0 %v1044
        %v3469 = vpop.f32.mrb[0].mxu0
        %v3470 = vadd.f32 %v3430, %v3469
        %v3471 = vpop.f32.mrb[0].mxu0
        %v3472 = vpop.f32.mrb[0].mxu0
        %v3473 = vpop.f32.mrb[0].mxu0
        %3474 = vdwg.mxu0
        %3475 = vmatprep.subr.bf16.mxu0 0
        %3476 = vmatpush1.bf16.msra.mxu0 %v2515
        %3477 = vmatprep.subr.bf16.mxu0 0
        %3478 = vmatpush1.bf16.msra.mxu0 %v2516
        %3479 = vmatprep.subr.bf16.mxu0 0
        %3480 = vmatpush1.bf16.msra.mxu0 %v2517
        %3481 = vmatprep.subr.bf16.mxu0 0
        %3482 = vmatpush1.bf16.msra.mxu0 %v2518
        %3483 = vmatprep.subr.bf16.mxu0 0
        %3484 = vmatpush1.bf16.msra.mxu0 %v2519
        %3485 = vmatprep.subr.bf16.mxu0 0
        %3486 = vmatpush1.bf16.msra.mxu0 %v2520
        %3487 = vmatprep.subr.bf16.mxu0 0
        %3488 = vmatpush1.bf16.msra.mxu0 %v2521
        %3489 = vmatprep.subr.bf16.mxu0 0
        %3490 = vmatpush1.bf16.msra.mxu0 %v2522
        %3491 = vmatprep.subr.bf16.mxu0 0
        %3492 = vmatpush1.bf16.msra.mxu0 %v2523
        %3493 = vmatprep.subr.bf16.mxu0 0
        %3494 = vmatpush1.bf16.msra.mxu0 %v2524
        %3495 = vmatprep.subr.bf16.mxu0 0
        %3496 = vmatpush1.bf16.msra.mxu0 %v2525
        %3497 = vmatprep.subr.bf16.mxu0 0
        %3498 = vmatpush1.bf16.msra.mxu0 %v2526
        %3499 = vmatprep.subr.bf16.mxu0 0
        %3500 = vmatpush1.bf16.msra.mxu0 %v2527
        %3501 = vmatprep.subr.bf16.mxu0 0
        %3502 = vmatpush1.bf16.msra.mxu0 %v2528
        %3503 = vmatprep.subr.bf16.mxu0 0
        %3504 = vmatpush1.bf16.msra.mxu0 %v2529
        %3505 = vmatprep.subr.bf16.mxu0 0
        %3506 = vmatpush1.bf16.msra.mxu0 %v2530
        %3507 = vmatprep.mubr.bf16.mxu0 %v1068
        %3508 = vmatmul.mubr.bf16.gmra.mrb[0].mxu0 %v1061
        %v3509 = vpop.f32.mrb[0].mxu0
        %v3510 = vadd.f32 %v3470, %v3509
        %v3511 = vpop.f32.mrb[0].mxu0
        %v3512 = vpop.f32.mrb[0].mxu0
        %v3513 = vpop.f32.mrb[0].mxu0
        %3514 = vdwg.mxu0
        %3515 = vmatprep.subr.bf16.mxu0 0
        %3516 = vmatpush1.bf16.msra.mxu0 %v2531
        %3517 = vmatprep.subr.bf16.mxu0 0
        %3518 = vmatpush1.bf16.msra.mxu0 %v2532
        %3519 = vmatprep.subr.bf16.mxu0 0
        %3520 = vmatpush1.bf16.msra.mxu0 %v2533
        %3521 = vmatprep.subr.bf16.mxu0 0
        %3522 = vmatpush1.bf16.msra.mxu0 %v2534
        %3523 = vmatprep.subr.bf16.mxu0 0
        %3524 = vmatpush1.bf16.msra.mxu0 %v2535
        %3525 = vmatprep.subr.bf16.mxu0 0
        %3526 = vmatpush1.bf16.msra.mxu0 %v2536
        %3527 = vmatprep.subr.bf16.mxu0 0
        %3528 = vmatpush1.bf16.msra.mxu0 %v2537
        %3529 = vmatprep.subr.bf16.mxu0 0
        %3530 = vmatpush1.bf16.msra.mxu0 %v2538
        %3531 = vmatprep.subr.bf16.mxu0 0
        %3532 = vmatpush1.bf16.msra.mxu0 %v2539
        %3533 = vmatprep.subr.bf16.mxu0 0
        %3534 = vmatpush1.bf16.msra.mxu0 %v2540
        %3535 = vmatprep.subr.bf16.mxu0 0
        %3536 = vmatpush1.bf16.msra.mxu0 %v2541
        %3537 = vmatprep.subr.bf16.mxu0 0
        %3538 = vmatpush1.bf16.msra.mxu0 %v2542
        %3539 = vmatprep.subr.bf16.mxu0 0
        %3540 = vmatpush1.bf16.msra.mxu0 %v2543
        %3541 = vmatprep.subr.bf16.mxu0 0
        %3542 = vmatpush1.bf16.msra.mxu0 %v2544
        %3543 = vmatprep.subr.bf16.mxu0 0
        %3544 = vmatpush1.bf16.msra.mxu0 %v2545
        %3545 = vmatprep.subr.bf16.mxu0 0
        %3546 = vmatpush1.bf16.msra.mxu0 %v2546
        %3547 = vmatprep.mubr.bf16.mxu0 %v1070
        %3548 = vmatmul.mubr.bf16.gmra.mrb[0].mxu0 %v1069
        %v3549 = vpop.f32.mrb[0].mxu0
        %v3550 = vadd.f32 %v3510, %v3549
        %v3551 = vpop.f32.mrb[0].mxu0
        %v3552 = vpop.f32.mrb[0].mxu0
        %v3553 = vpop.f32.mrb[0].mxu0
        %3554 = vdwg.mxu0
        %v3555 = vadd.f32 %v264, %v3550
        %3556 = vst [vmem:[#allocation2] sm:$0x3] %v3555
        %p3557 = scmp.eq.s32.totalorder %s20, 1
        // Predicated region
        $region45: #{net_forward.3} parent=39 // pred_check
          %p3558 = pneg %p3557
        $region46: #{net_forward.3} parent=39 // pred_check_branch
          %3560 = sbr.rel (%p3558) target = $region48
        $region47: #{net_forward.3} parent=39 // pred_region
          %v3561 = vld [vmem:[#allocation2] sm:$0x3]
          %v3562 = vld [vmem:[%s2] sm:$0x1]
          %v3564 = vlaneseq
          %v3565 = vshrl.u32 %v3564, 7
          %v3566 = vsub.s32 0, %v3565
          %v3567 = vrot.slane %v3562, %v3566
          %v3569 = vadd.f32 %v3561, %v3567
          %v3570 = vmax.f32 %v3569, 0.0
          %3571 = vst [vmem:[#allocation3] sm:$0x3] %v3570
          %v3572 = vld [vmem:[%s3] sm:$0xff]
          %v3573 = vld [vmem:[%s3 + $0x8] sm:$0xff]
          %v3574 = vld [vmem:[%s3 + $0x10] sm:$0xff]
          %v3575 = vld [vmem:[%s3 + $0x18] sm:$0xff]
          %v3576 = vld [vmem:[%s3 + $0x20] sm:$0xff]
          %v3577 = vld [vmem:[%s3 + $0x28] sm:$0xff]
          %v3578 = vld [vmem:[%s3 + $0x30] sm:$0xff]
          %v3579 = vld [vmem:[%s3 + $0x38] sm:$0xff]
          %v3580 = vld [vmem:[%s3 + $0x40] sm:$0xff]
          %v3581 = vld [vmem:[%s3 + $0x48] sm:$0xff]
          %v3582 = vld [vmem:[%s3 + $0x50] sm:$0xff]
          %v3583 = vld [vmem:[%s3 + $0x58] sm:$0xff]
          %v3584 = vld [vmem:[%s3 + $0x60] sm:$0xff]
          %v3585 = vld [vmem:[%s3 + $0x68] sm:$0xff]
          %v3586 = vld [vmem:[%s3 + $0x70] sm:$0xff]
          %v3587 = vld [vmem:[%s3 + $0x78] sm:$0xff]
          %v3588 = vld [vmem:[%s4] sm:$0x1]
          %v3590 = vlaneseq
          %v3591 = vshrl.u32 %v3590, 7
          %v3592 = vsub.s32 0, %v3591
          %v3593 = vrot.slane %v3588, %v3592
          %3595 = vmatprep.subr.mxu0 0.0
          %3596 = vmatpush1.msra.mxu0 %v3572
          %3597 = vmatprep.subr.mxu0 0.0
          %3598 = vmatpush1.msra.mxu0 %v3573
          %3599 = vmatprep.subr.mxu0 0.0
          %3600 = vmatpush1.msra.mxu0 %v3574
          %3601 = vmatprep.subr.mxu0 0.0
          %3602 = vmatpush1.msra.mxu0 %v3575
          %3603 = vmatprep.subr.mxu0 0.0
          %3604 = vmatpush1.msra.mxu0 %v3576
          %3605 = vmatprep.subr.mxu0 0.0
          %3606 = vmatpush1.msra.mxu0 %v3577
          %3607 = vmatprep.subr.mxu0 0.0
          %3608 = vmatpush1.msra.mxu0 %v3578
          %3609 = vmatprep.subr.mxu0 0.0
          %3610 = vmatpush1.msra.mxu0 %v3579
          %3611 = vmatprep.subr.mxu0 0.0
          %3612 = vmatpush1.msra.mxu0 %v3580
          %3613 = vmatprep.subr.mxu0 0.0
          %3614 = vmatpush1.msra.mxu0 %v3581
          %3615 = vmatprep.subr.mxu0 0.0
          %3616 = vmatpush1.msra.mxu0 %v3582
          %3617 = vmatprep.subr.mxu0 0.0
          %3618 = vmatpush1.msra.mxu0 %v3583
          %3619 = vmatprep.subr.mxu0 0.0
          %3620 = vmatpush1.msra.mxu0 %v3584
          %3621 = vmatprep.subr.mxu0 0.0
          %3622 = vmatpush1.msra.mxu0 %v3585
          %3623 = vmatprep.subr.mxu0 0.0
          %3624 = vmatpush1.msra.mxu0 %v3586
          %3625 = vmatprep.subr.mxu0 0.0
          %3626 = vmatpush1.msra.mxu0 %v3587
          %3627 = vmatprep.subr.mxu0 0.0
          %3628 = vmatpush1.msra.mxu0 0.0
          %3629 = vmatprep.subr.mxu0 0.0
          %3630 = vmatpush1.msra.mxu0 0.0
          %3631 = vmatprep.subr.mxu0 0.0
          %3632 = vmatpush1.msra.mxu0 0.0
          %3633 = vmatprep.subr.mxu0 0.0
          %3634 = vmatpush1.msra.mxu0 0.0
          %3635 = vmatprep.subr.mxu0 0.0
          %3636 = vmatpush1.msra.mxu0 0.0
          %3637 = vmatprep.subr.mxu0 0.0
          %3638 = vmatpush1.msra.mxu0 0.0
          %3639 = vmatprep.subr.mxu0 0.0
          %3640 = vmatpush1.msra.mxu0 0.0
          %3641 = vmatprep.subr.mxu0 0.0
          %3642 = vmatpush1.msra.mxu0 0.0
          %3643 = vmatprep.subr.mxu0 0.0
          %3644 = vmatpush1.msra.mxu0 0.0
          %3645 = vmatprep.subr.mxu0 0.0
          %3646 = vmatpush1.msra.mxu0 0.0
          %3647 = vmatprep.subr.mxu0 0.0
          %3648 = vmatpush1.msra.mxu0 0.0
          %3649 = vmatprep.subr.mxu0 0.0
          %3650 = vmatpush1.msra.mxu0 0.0
          %3651 = vmatprep.subr.mxu0 0.0
          %3652 = vmatpush1.msra.mxu0 0.0
          %3653 = vmatprep.subr.mxu0 0.0
          %3654 = vmatpush1.msra.mxu0 0.0
          %3655 = vmatprep.subr.mxu0 0.0
          %3656 = vmatpush1.msra.mxu0 0.0
          %3657 = vmatprep.subr.mxu0 0.0
          %3658 = vmatpush1.msra.mxu0 0.0
          %3659 = vmatprep.mubr.f32.mxu0 0.0
          %3660 = vmatmul.mubr.f32.gmra.mrb[0].mxu0 %v3570
          %v3661 = vpop.f32.mrb[0].mxu0
          %v3662 = vadd.f32 %v3593, %v3661
          %v3663 = vpop.f32.mrb[0].mxu0
          %3664 = vdwg.mxu0
          %vm3665 = vcmask 74752
          %v3666 = vsel %vm3665, %v3662, -inf
          %3667 = vmax.xlane.f32.xlu0 %v3666
          %v3668 = vpop.xlane.xlu0 %3667
          %v3669 = vsub.f32 %v3662, %v3668
          %v3670 = vmul.f32 %v3669, 1.442695
          %v3671 = vpow.pop %v3670
          %v3672 = vsel %vm3665, %v3671, 0.0
          %3673 = vadd.xlane.f32.xlu0 %v3672
          %v3674 = vpop.xlane.xlu0 %3673
          %v3675 = vlog2.pop %v3674
          %v3676 = vmul.f32 %v3675, 0.6931472
          %v3677 = vsub.f32 %v3669, %v3676
          %3678 = vst.msk [vmem:[#allocation5] sm:$0x3] %vm3665, %v3677
        $region48: #{net_forward.3} parent=39 // pred_fallthru
          _
        // Predicated region
        $region49: #{net_forward.3} parent=39 // pred_check
          %p3679 = pneg %p148
        $region50: #{net_forward.3} parent=39 // pred_check_branch
          %3681 = sbr.rel (%p3679) target = $region52
        $region51: #{net_forward.3} parent=39 // pred_region
          %s3683 = ssub.s32 32, 32
          %3684 = vsyncadd [#allocation4], %s3683
          %s3686 = sshll.u32 [#allocation3], 4
          %s3687 = int_to_ptr.vmem [resolvable:$true] %s3686
          %3689 = dma.vmem_to_hbm [thread:$0]  %s3687, 32, %s5, [#allocation4]
        $region52: #{net_forward.3} parent=39 // pred_fallthru
          _
        // Predicated region
        $region53: #{net_forward.3} parent=39 // pred_check
          %p3690 = pneg %p169
        $region54: #{net_forward.3} parent=39 // pred_check_branch
          %3692 = sbr.rel (%p3690) target = $region56
        $region55: #{net_forward.3} parent=39 // pred_region
          %s3694 = ssub.s32 32, 32
          %3695 = vsyncadd [#allocation6], %s3694
          %s3697 = sshll.u32 [#allocation5], 4
          %s3698 = int_to_ptr.vmem [resolvable:$true] %s3697
          %3700 = dma.vmem_to_hbm [thread:$0]  %s3698, 32, %s6, [#allocation6]
        $region56: #{net_forward.3} parent=39 // pred_fallthru
          _
        // Predicated region
        $region57: #{net_forward.3} parent=39 // pred_check
          %p3701 = pneg %p148
        $region58: #{net_forward.3} parent=39 // pred_check_branch
          %3703 = sbr.rel (%p3701) target = $region60
        $region59: #{net_forward.3} parent=39 // pred_region
          %3704 = dma.done [#allocation4], 32
        $region60: #{net_forward.3} parent=39 // pred_fallthru
          _
        // Predicated region
        $region61: #{net_forward.3} parent=39 // pred_check
          %p3705 = pneg %p169
        $region62: #{net_forward.3} parent=39 // pred_check_branch
          %3707 = sbr.rel (%p3705) target = $region64
        $region63: #{net_forward.3} parent=39 // pred_region
          %3708 = dma.done [#allocation6], 32
        $region64: #{net_forward.3} parent=39 // pred_fallthru
          _
      $region40: #{net_forward.3} parent=5 // pred_fallthru
        _
      %p3709 = scmp.le.s32.totalorder 2, %s15
      // Predicated region
      $region65: #{net_forward.3} parent=5 // pred_check
        %p3710 = pneg %p3709
      $region66: #{net_forward.3} parent=5 // pred_check_branch
        %3712 = sbr.rel (%p3710) target = $region68
      $region67: #{net_forward.3} parent=5 // pred_region
        %s3713 = ssub.s32 %s15, 2
      $region68: #{net_forward.3} parent=5 // pred_fallthru
        _
    $region6: #{net_forward.3} parent=1 // loop_footer
      %s19 = sadd.s32 1, %s15
    $region7: #{net_forward.3} parent=1 // loop_footer_branch
      %14 = sbr.rel target = $region3
    $region8: #{net_forward.3} parent=1 // loop_exit
      _
    %3714 = vsyncpa [#allocation4], 1
    %s3715 = scalar_lea.sflag [#allocation4], 1
    %3716 = vsyncpa %s3715, 1
    %3717 = vsyncpa [#allocation6], 1

</llo_original>
